<compile_context>
chip_gen: v6e
topology: v6e:2x2x1
jax: 0.10.0
libtpu: 0.0.40
codegen_flags: <defaults>
</compile_context>

<pallas_src>
import math
import jax
import jax.numpy as jnp
from jax import lax
from jax.experimental import pallas as pl
from jax.experimental.pallas import tpu as pltpu

# Small synthetic BERT-like config (real BERT: S=512, H=768, 12 layers).
B = 2          # batch (number of sentences)
S = 16         # padded sequence length
H = 128        # hidden size
NH = 2         # attention heads
HD = H // NH   # head dim
F = 256        # FFN intermediate size
L = 2          # encoder layers
VOCAB = 100
LN_EPS = 1e-12


# ----------------------------- fused kernel ---------------------------------


def _layernorm(x, g, beta):
    mu = jnp.mean(x, axis=-1, keepdims=True)
    var = jnp.mean(jnp.square(x - mu), axis=-1, keepdims=True)
    return (x - mu) * lax.rsqrt(var + LN_EPS) * g + beta


def fused_bert_kernel(x_ref, bias_ref, pool_ref, embln_ref,
                      wqkv_ref, bqkv_ref, wo_ref, bo_ref, ln1_ref,
                      w1_ref, b1_ref, w2_ref, b2_ref, ln2_ref,
                      o_ref):
    # x_ref:    (B*S, H)    f32 embeddings (word + pos + type), flattened batch
    # bias_ref: (B*S, B*S)  f32 host-precomputed additive attention mask
    #                       (0 for same-sentence real keys, -1e9 otherwise)
    # pool_ref: (B, B*S)    f32 block-diag pooling matrix with 1/len folded in
    # weights:  stacked across layers; matmul weights bf16, rest f32
    x = x_ref[...]                                    # (B*S, H) f32

    # embedding layernorm
    embln = embln_ref[...]                            # (2, H)
    x = _layernorm(x, embln[0:1, :], embln[1:2, :])

    attn_bias = bias_ref[...]                         # (B*S, B*S) f32, hoisted

    for l in range(L):                                # static unroll over layers
        # ---- fused QKV projection on the full (B*S, H) slab ----
        # 1/sqrt(HD) is already folded into the Q columns of wqkv (host side).
        qkv = jnp.dot(x.astype(jnp.bfloat16), wqkv_ref[l],
                      preferred_element_type=jnp.float32) + bqkv_ref[l]  # (B*S, 3H)
        qkv16 = qkv.astype(jnp.bfloat16)

        # ---- batch-stacked multi-head attention (block-diagonal mask) ----
        ctx_heads = []
        for h in range(NH):                           # static
            qh = qkv16[:, h * HD:(h + 1) * HD]                  # (B*S, HD) bf16
            kh = qkv16[:, H + h * HD:H + (h + 1) * HD]
            vh = qkv16[:, 2 * H + h * HD:2 * H + (h + 1) * HD]
            # q @ k^T across the whole batch without materializing a transpose
            s = lax.dot_general(qh, kh, (((1,), (1,)), ((), ())),
                                preferred_element_type=jnp.float32)      # (B*S, B*S)
            s = s + attn_bias                          # block-diag + key padding
            s = s - jnp.max(s, axis=-1, keepdims=True)
            e = jnp.exp(s)
            p = e * pl.reciprocal(jnp.sum(e, axis=-1, keepdims=True),
                                  approx=True)
            ctx_heads.append(jnp.dot(p.astype(jnp.bfloat16), vh,
                                     preferred_element_type=jnp.float32))  # (B*S, HD)
        ctx = jnp.concatenate(ctx_heads, axis=-1)      # (B*S, H) in registers

        # ---- attention output projection + residual + LN1 ----
        attn = jnp.dot(ctx.astype(jnp.bfloat16), wo_ref[l],
                       preferred_element_type=jnp.float32) + bo_ref[l]
        ln1 = ln1_ref[l]                              # (2, H)
        x1 = _layernorm(x + attn, ln1[0:1, :], ln1[1:2, :])

        # ---- FFN + residual + LN2 ----
        # TODO(synk): HF BERT uses exact erf GELU; tanh approximation used here
        # (erf lowering in Mosaic unverified), difference is <1e-3.
        hmid = jax.nn.gelu(
            jnp.dot(x1.astype(jnp.bfloat16), w1_ref[l],
                    preferred_element_type=jnp.float32) + b1_ref[l],
            approximate=True)
        ffn = jnp.dot(hmid.astype(jnp.bfloat16), w2_ref[l],
                      preferred_element_type=jnp.float32) + b2_ref[l]
        ln2 = ln2_ref[l]
        x = _layernorm(x1 + ffn, ln2[0:1, :], ln2[1:2, :])

    # ---- masked mean pooling on the MXU (1/len folded into pool host-side) ----
    # (B, B*S) @ (B*S, H) -> lane-dense (B, H) store.  Kept f32 for exactness.
    o_ref[...] = jnp.dot(pool_ref[...], x, preferred_element_type=jnp.float32)


# ------------------------- params / forward (glue) ---------------------------


def init_params(key):
    def nrm(k, shape, scale=0.02):
        return scale * jax.random.normal(k, shape, jnp.float32)

    keys = jax.random.split(key, 3 + L)
    inv_sqrt_hd = 1.0 / math.sqrt(HD)

    wqkv, wo, w1, w2 = [], [], [], []
    for l in range(L):
        lk = jax.random.split(keys[3 + l], 6)
        # fold the 1/sqrt(HD) attention scale into the Q projection weights
        # (Q bias is zero, so no bias rescale needed).
        wq = nrm(lk[0], (H, H)) * inv_sqrt_hd
        wqkv.append(jnp.concatenate(
            [wq, nrm(lk[1], (H, H)), nrm(lk[2], (H, H))], axis=-1))
        wo.append(nrm(lk[3], (H, H)))
        w1.append(nrm(lk[4], (H, F)))
        w2.append(nrm(lk[5], (F, H)))

    ln_pair = jnp.stack([jnp.ones((H,), jnp.float32),
                         jnp.zeros((H,), jnp.float32)])          # (2, H): [gamma; beta]

    return {
        'word_emb': nrm(keys[0], (VOCAB, H)),
        'pos_emb':  nrm(keys[1], (S, H)),
        'type_emb': nrm(keys[2], (1, H)),                        # token_type 0 everywhere
        'emb_ln':   ln_pair,                                     # (2, H)
        # matmul weights in bf16 (MXU-native); biases / LN params stay f32.
        'wqkv': jnp.stack(wqkv).astype(jnp.bfloat16),            # (L, H, 3H)
        'bqkv': jnp.zeros((L, 1, 3 * H), jnp.float32),
        'wo':   jnp.stack(wo).astype(jnp.bfloat16),              # (L, H, H)
        'bo':   jnp.zeros((L, 1, H), jnp.float32),
        'ln1':  jnp.tile(ln_pair[None], (L, 1, 1)),              # (L, 2, H)
        'w1':   jnp.stack(w1).astype(jnp.bfloat16),              # (L, H, F)
        'b1':   jnp.zeros((L, 1, F), jnp.float32),
        'w2':   jnp.stack(w2).astype(jnp.bfloat16),              # (L, F, H)
        'b2':   jnp.zeros((L, 1, H), jnp.float32),
        'ln2':  jnp.tile(ln_pair[None], (L, 1, 1)),              # (L, 2, H)
    }


def word_features_forward(token_ids, sent_lens, params):
    # TODO(synk): BertTokenizer is host-side string processing with no Pallas
    # equivalent; inputs are pre-tokenized integer ids + true sentence lengths.
    # Embedding lookup (gather) is glue in plain JAX.
    emb = (params['word_emb'][token_ids]
           + params['pos_emb'][None, :, :]
           + params['type_emb'][None, :, :])                     # (B, S, H)
    x2d = emb.reshape(B * S, H)                                  # (B*S, H)

    pos = jnp.arange(S, dtype=jnp.int32)
    mask = (pos[None, :] < sent_lens[:, None]).astype(jnp.float32)     # (B, S)

    # Host-precomputed additive attention bias over the flattened batch:
    # bias[i, j] = 0 if token i and token j belong to the same sentence and
    # token j is a real (non-padding) token, else -1e9.
    batch_id = jnp.repeat(jnp.arange(B, dtype=jnp.int32), S)           # (B*S,)
    key_ok = mask.reshape(B * S) > 0.5                                 # (B*S,)
    same_b = batch_id[:, None] == batch_id[None, :]                    # (B*S, B*S)
    attn_bias = jnp.where(same_b & key_ok[None, :], 0.0, -1e9).astype(jnp.float32)

    # Block-diagonal pooling matrix with the mean normalization folded in:
    # pool[b, b*S + s] = mask[b, s] / max(sent_len_b, 1)
    inv_len = 1.0 / jnp.maximum(jnp.sum(mask, axis=-1, keepdims=True), 1.0)  # (B, 1)
    eye = jnp.eye(B, dtype=jnp.float32)
    pool = (eye[:, :, None] * (mask * inv_len)[None, :, :]).reshape(B, B * S)

    vmem_spec = pl.BlockSpec(memory_space=pltpu.MemorySpace.VMEM)
    out = pl.pallas_call(
        fused_bert_kernel,
        out_shape=jax.ShapeDtypeStruct((B, H), jnp.float32),
        in_specs=[vmem_spec] * 14,
        out_specs=vmem_spec,
        compiler_params=pltpu.CompilerParams(
            vmem_limit_bytes=32 * 1024 * 1024),
    )(x2d, attn_bias, pool, params['emb_ln'],
      params['wqkv'], params['bqkv'], params['wo'], params['bo'], params['ln1'],
      params['w1'], params['b1'], params['w2'], params['b2'], params['ln2'])
    return out                                                   # (B, H)


if __name__ == "__main__":
    key = jax.random.PRNGKey(0)
    pkey, ikey = jax.random.split(key)
    params = init_params(pkey)

    token_ids = jax.random.randint(ikey, (B, S), 1, VOCAB, dtype=jnp.int32)
    sent_lens = jnp.array([10, 7], dtype=jnp.int32)   # real (unpadded) lengths

    fwd = jax.jit(word_features_forward)
    out = fwd(token_ids, sent_lens, params)
    jax.block_until_ready(out)
    assert out.shape == (B, H) and out.dtype == jnp.float32
    assert bool(jnp.all(jnp.isfinite(out)))
    print("KERNEL_OK")
</pallas_src>

<mosaic_0001>
module attributes {stable_mosaic.version = 11 : i64} {
  func.func @fused_bert_kernel(%arg0: memref<32x128xf32, #tpu.memory_space<vmem>>, %arg1: memref<32x32xf32, #tpu.memory_space<vmem>>, %arg2: memref<2x32xf32, #tpu.memory_space<vmem>>, %arg3: memref<2x128xf32, #tpu.memory_space<vmem>>, %arg4: memref<2x128x384xbf16, #tpu.memory_space<vmem>>, %arg5: memref<2x1x384xf32, #tpu.memory_space<vmem>>, %arg6: memref<2x128x128xbf16, #tpu.memory_space<vmem>>, %arg7: memref<2x1x128xf32, #tpu.memory_space<vmem>>, %arg8: memref<2x2x128xf32, #tpu.memory_space<vmem>>, %arg9: memref<2x128x256xbf16, #tpu.memory_space<vmem>>, %arg10: memref<2x1x256xf32, #tpu.memory_space<vmem>>, %arg11: memref<2x256x128xbf16, #tpu.memory_space<vmem>>, %arg12: memref<2x1x128xf32, #tpu.memory_space<vmem>>, %arg13: memref<2x2x128xf32, #tpu.memory_space<vmem>>, %arg14: memref<2x128xf32, #tpu.memory_space<vmem>>) attributes {dimension_semantics = [], scalar_prefetch = 0 : i64, scratch_operands = 0 : i64, tpu.core_type = #tpu.core_type<tc>} {
    %c0 = arith.constant 0 : index
    %c0_0 = arith.constant 0 : index
    %0 = vector.load %arg0[%c0, %c0_0] : memref<32x128xf32, #tpu.memory_space<vmem>>, vector<32x128xf32>
    %c0_1 = arith.constant 0 : index
    %c0_2 = arith.constant 0 : index
    %1 = vector.load %arg3[%c0_1, %c0_2] : memref<2x128xf32, #tpu.memory_space<vmem>>, vector<2x128xf32>
    %2 = vector.extract_strided_slice %1 {offsets = [0, 0], sizes = [1, 128], strides = [1, 1]} : vector<2x128xf32> to vector<1x128xf32>
    %3 = vector.extract_strided_slice %1 {offsets = [1, 0], sizes = [1, 128], strides = [1, 1]} : vector<2x128xf32> to vector<1x128xf32>
    %cst = arith.constant dense<0.000000e+00> : vector<32xf32>
    %4 = vector.multi_reduction <add>, %0, %cst [1] : vector<32x128xf32> to vector<32xf32>
    %5 = vector.shape_cast %4 : vector<32xf32> to vector<32x1xf32>
    %cst_3 = arith.constant 1.280000e+02 : f32
    %6 = vector.broadcast %cst_3 : f32 to vector<32x1xf32>
    %7 = arith.divf %5, %6 : vector<32x1xf32>
    %8 = vector.broadcast %7 : vector<32x1xf32> to vector<32x128xf32>
    %9 = arith.subf %0, %8 : vector<32x128xf32>
    %10 = arith.mulf %9, %9 : vector<32x128xf32>
    %cst_4 = arith.constant dense<0.000000e+00> : vector<32xf32>
    %11 = vector.multi_reduction <add>, %10, %cst_4 [1] : vector<32x128xf32> to vector<32xf32>
    %12 = vector.shape_cast %11 : vector<32xf32> to vector<32x1xf32>
    %cst_5 = arith.constant 1.280000e+02 : f32
    %13 = vector.broadcast %cst_5 : f32 to vector<32x1xf32>
    %14 = arith.divf %12, %13 : vector<32x1xf32>
    %15 = vector.broadcast %7 : vector<32x1xf32> to vector<32x128xf32>
    %16 = arith.subf %0, %15 : vector<32x128xf32>
    %cst_6 = arith.constant 9.99999996E-13 : f32
    %17 = vector.broadcast %cst_6 : f32 to vector<32x1xf32>
    %18 = arith.addf %14, %17 : vector<32x1xf32>
    %19 = math.rsqrt %18 : vector<32x1xf32>
    %20 = vector.broadcast %19 : vector<32x1xf32> to vector<32x128xf32>
    %21 = arith.mulf %16, %20 : vector<32x128xf32>
    %22 = vector.broadcast %2 : vector<1x128xf32> to vector<32x128xf32>
    %23 = arith.mulf %21, %22 : vector<32x128xf32>
    %24 = vector.broadcast %3 : vector<1x128xf32> to vector<32x128xf32>
    %25 = arith.addf %23, %24 : vector<32x128xf32>
    %c0_7 = arith.constant 0 : index
    %c0_8 = arith.constant 0 : index
    %26 = vector.load %arg1[%c0_7, %c0_8] : memref<32x32xf32, #tpu.memory_space<vmem>>, vector<32x32xf32>
    %27 = arith.truncf %25 : vector<32x128xf32> to vector<32x128xbf16>
    %c0_9 = arith.constant 0 : index
    %c0_10 = arith.constant 0 : index
    %c0_11 = arith.constant 0 : index
    %28 = vector.load %arg4[%c0_9, %c0_10, %c0_11] : memref<2x128x384xbf16, #tpu.memory_space<vmem>>, vector<1x128x384xbf16>
    %29 = vector.shape_cast %28 : vector<1x128x384xbf16> to vector<128x384xbf16>
    %cst_12 = arith.constant dense<0.000000e+00> : vector<32x384xf32>
    %30 = tpu.matmul %27, %29, %cst_12 {dimension_numbers = #tpu.dot_dimension_numbers<[1], [0], [0], [1], [0, 0, 1, 1], [], []>} : vector<32x128xbf16>, vector<128x384xbf16>, vector<32x384xf32> -> vector<32x384xf32>
    %c0_13 = arith.constant 0 : index
    %c0_14 = arith.constant 0 : index
    %c0_15 = arith.constant 0 : index
    %31 = vector.load %arg5[%c0_13, %c0_14, %c0_15] : memref<2x1x384xf32, #tpu.memory_space<vmem>>, vector<1x1x384xf32>
    %32 = vector.shape_cast %31 : vector<1x1x384xf32> to vector<1x384xf32>
    %33 = vector.broadcast %32 : vector<1x384xf32> to vector<32x384xf32>
    %34 = arith.addf %30, %33 : vector<32x384xf32>
    %35 = arith.truncf %34 : vector<32x384xf32> to vector<32x384xbf16>
    %36 = vector.extract_strided_slice %35 {offsets = [0, 0], sizes = [32, 64], strides = [1, 1]} : vector<32x384xbf16> to vector<32x64xbf16>
    %37 = vector.extract_strided_slice %35 {offsets = [0, 128], sizes = [32, 64], strides = [1, 1]} : vector<32x384xbf16> to vector<32x64xbf16>
    %38 = vector.extract_strided_slice %35 {offsets = [0, 256], sizes = [32, 64], strides = [1, 1]} : vector<32x384xbf16> to vector<32x64xbf16>
    %cst_16 = arith.constant dense<0.000000e+00> : vector<32x32xf32>
    %39 = tpu.matmul %36, %37, %cst_16 {dimension_numbers = #tpu.dot_dimension_numbers<[1], [1], [0], [0], [0, 0, 1, 0], [], []>} : vector<32x64xbf16>, vector<32x64xbf16>, vector<32x32xf32> -> vector<32x32xf32>
    %40 = arith.addf %39, %26 : vector<32x32xf32>
    %cst_17 = arith.constant dense<0xFF800000> : vector<32xf32>
    %41 = vector.multi_reduction <maximumf>, %40, %cst_17 [1] : vector<32x32xf32> to vector<32xf32>
    %42 = vector.shape_cast %41 : vector<32xf32> to vector<32x1xf32>
    %43 = vector.broadcast %42 : vector<32x1xf32> to vector<32x32xf32>
    %44 = arith.subf %40, %43 : vector<32x32xf32>
    %45 = math.exp %44 : vector<32x32xf32>
    %cst_18 = arith.constant dense<0.000000e+00> : vector<32xf32>
    %46 = vector.multi_reduction <add>, %45, %cst_18 [1] : vector<32x32xf32> to vector<32xf32>
    %47 = vector.shape_cast %46 : vector<32xf32> to vector<32x1xf32>
    %48 = tpu.reciprocal %47 {approx = true} : vector<32x1xf32> -> vector<32x1xf32>
    %49 = vector.broadcast %48 : vector<32x1xf32> to vector<32x32xf32>
    %50 = arith.mulf %45, %49 : vector<32x32xf32>
    %51 = arith.truncf %50 : vector<32x32xf32> to vector<32x32xbf16>
    %cst_19 = arith.constant dense<0.000000e+00> : vector<32x64xf32>
    %52 = tpu.matmul %51, %38, %cst_19 {dimension_numbers = #tpu.dot_dimension_numbers<[1], [0], [0], [1], [0, 0, 1, 1], [], []>} : vector<32x32xbf16>, vector<32x64xbf16>, vector<32x64xf32> -> vector<32x64xf32>
    %53 = vector.extract_strided_slice %35 {offsets = [0, 64], sizes = [32, 64], strides = [1, 1]} : vector<32x384xbf16> to vector<32x64xbf16>
    %54 = vector.extract_strided_slice %35 {offsets = [0, 192], sizes = [32, 64], strides = [1, 1]} : vector<32x384xbf16> to vector<32x64xbf16>
    %55 = vector.extract_strided_slice %35 {offsets = [0, 320], sizes = [32, 64], strides = [1, 1]} : vector<32x384xbf16> to vector<32x64xbf16>
    %cst_20 = arith.constant dense<0.000000e+00> : vector<32x32xf32>
    %56 = tpu.matmul %53, %54, %cst_20 {dimension_numbers = #tpu.dot_dimension_numbers<[1], [1], [0], [0], [0, 0, 1, 0], [], []>} : vector<32x64xbf16>, vector<32x64xbf16>, vector<32x32xf32> -> vector<32x32xf32>
    %57 = arith.addf %56, %26 : vector<32x32xf32>
    %cst_21 = arith.constant dense<0xFF800000> : vector<32xf32>
    %58 = vector.multi_reduction <maximumf>, %57, %cst_21 [1] : vector<32x32xf32> to vector<32xf32>
    %59 = vector.shape_cast %58 : vector<32xf32> to vector<32x1xf32>
    %60 = vector.broadcast %59 : vector<32x1xf32> to vector<32x32xf32>
    %61 = arith.subf %57, %60 : vector<32x32xf32>
    %62 = math.exp %61 : vector<32x32xf32>
    %cst_22 = arith.constant dense<0.000000e+00> : vector<32xf32>
    %63 = vector.multi_reduction <add>, %62, %cst_22 [1] : vector<32x32xf32> to vector<32xf32>
    %64 = vector.shape_cast %63 : vector<32xf32> to vector<32x1xf32>
    %65 = tpu.reciprocal %64 {approx = true} : vector<32x1xf32> -> vector<32x1xf32>
    %66 = vector.broadcast %65 : vector<32x1xf32> to vector<32x32xf32>
    %67 = arith.mulf %62, %66 : vector<32x32xf32>
    %68 = arith.truncf %67 : vector<32x32xf32> to vector<32x32xbf16>
    %cst_23 = arith.constant dense<0.000000e+00> : vector<32x64xf32>
    %69 = tpu.matmul %68, %55, %cst_23 {dimension_numbers = #tpu.dot_dimension_numbers<[1], [0], [0], [1], [0, 0, 1, 1], [], []>} : vector<32x32xbf16>, vector<32x64xbf16>, vector<32x64xf32> -> vector<32x64xf32>
    %70 = tpu.concatenate %52, %69 in 1 : vector<32x64xf32>, vector<32x64xf32> -> vector<32x128xf32>
    %71 = arith.truncf %70 : vector<32x128xf32> to vector<32x128xbf16>
    %c0_24 = arith.constant 0 : index
    %c0_25 = arith.constant 0 : index
    %c0_26 = arith.constant 0 : index
    %72 = vector.load %arg6[%c0_24, %c0_25, %c0_26] : memref<2x128x128xbf16, #tpu.memory_space<vmem>>, vector<1x128x128xbf16>
    %73 = vector.shape_cast %72 : vector<1x128x128xbf16> to vector<128x128xbf16>
    %cst_27 = arith.constant dense<0.000000e+00> : vector<32x128xf32>
    %74 = tpu.matmul %71, %73, %cst_27 {dimension_numbers = #tpu.dot_dimension_numbers<[1], [0], [0], [1], [0, 0, 1, 1], [], []>} : vector<32x128xbf16>, vector<128x128xbf16>, vector<32x128xf32> -> vector<32x128xf32>
    %c0_28 = arith.constant 0 : index
    %c0_29 = arith.constant 0 : index
    %c0_30 = arith.constant 0 : index
    %75 = vector.load %arg7[%c0_28, %c0_29, %c0_30] : memref<2x1x128xf32, #tpu.memory_space<vmem>>, vector<1x1x128xf32>
    %76 = vector.shape_cast %75 : vector<1x1x128xf32> to vector<1x128xf32>
    %77 = vector.broadcast %76 : vector<1x128xf32> to vector<32x128xf32>
    %78 = arith.addf %74, %77 : vector<32x128xf32>
    %c0_31 = arith.constant 0 : index
    %c0_32 = arith.constant 0 : index
    %c0_33 = arith.constant 0 : index
    %79 = vector.load %arg8[%c0_31, %c0_32, %c0_33] : memref<2x2x128xf32, #tpu.memory_space<vmem>>, vector<1x2x128xf32>
    %80 = vector.shape_cast %79 : vector<1x2x128xf32> to vector<2x128xf32>
    %81 = arith.addf %25, %78 : vector<32x128xf32>
    %82 = vector.extract_strided_slice %80 {offsets = [0, 0], sizes = [1, 128], strides = [1, 1]} : vector<2x128xf32> to vector<1x128xf32>
    %83 = vector.extract_strided_slice %80 {offsets = [1, 0], sizes = [1, 128], strides = [1, 1]} : vector<2x128xf32> to vector<1x128xf32>
    %cst_34 = arith.constant dense<0.000000e+00> : vector<32xf32>
    %84 = vector.multi_reduction <add>, %81, %cst_34 [1] : vector<32x128xf32> to vector<32xf32>
    %85 = vector.shape_cast %84 : vector<32xf32> to vector<32x1xf32>
    %cst_35 = arith.constant 1.280000e+02 : f32
    %86 = vector.broadcast %cst_35 : f32 to vector<32x1xf32>
    %87 = arith.divf %85, %86 : vector<32x1xf32>
    %88 = vector.broadcast %87 : vector<32x1xf32> to vector<32x128xf32>
    %89 = arith.subf %81, %88 : vector<32x128xf32>
    %90 = arith.mulf %89, %89 : vector<32x128xf32>
    %cst_36 = arith.constant dense<0.000000e+00> : vector<32xf32>
    %91 = vector.multi_reduction <add>, %90, %cst_36 [1] : vector<32x128xf32> to vector<32xf32>
    %92 = vector.shape_cast %91 : vector<32xf32> to vector<32x1xf32>
    %cst_37 = arith.constant 1.280000e+02 : f32
    %93 = vector.broadcast %cst_37 : f32 to vector<32x1xf32>
    %94 = arith.divf %92, %93 : vector<32x1xf32>
    %95 = vector.broadcast %87 : vector<32x1xf32> to vector<32x128xf32>
    %96 = arith.subf %81, %95 : vector<32x128xf32>
    %cst_38 = arith.constant 9.99999996E-13 : f32
    %97 = vector.broadcast %cst_38 : f32 to vector<32x1xf32>
    %98 = arith.addf %94, %97 : vector<32x1xf32>
    %99 = math.rsqrt %98 : vector<32x1xf32>
    %100 = vector.broadcast %99 : vector<32x1xf32> to vector<32x128xf32>
    %101 = arith.mulf %96, %100 : vector<32x128xf32>
    %102 = vector.broadcast %82 : vector<1x128xf32> to vector<32x128xf32>
    %103 = arith.mulf %101, %102 : vector<32x128xf32>
    %104 = vector.broadcast %83 : vector<1x128xf32> to vector<32x128xf32>
    %105 = arith.addf %103, %104 : vector<32x128xf32>
    %106 = arith.truncf %105 : vector<32x128xf32> to vector<32x128xbf16>
    %c0_39 = arith.constant 0 : index
    %c0_40 = arith.constant 0 : index
    %c0_41 = arith.constant 0 : index
    %107 = vector.load %arg9[%c0_39, %c0_40, %c0_41] : memref<2x128x256xbf16, #tpu.memory_space<vmem>>, vector<1x128x256xbf16>
    %108 = vector.shape_cast %107 : vector<1x128x256xbf16> to vector<128x256xbf16>
    %cst_42 = arith.constant dense<0.000000e+00> : vector<32x256xf32>
    %109 = tpu.matmul %106, %108, %cst_42 {dimension_numbers = #tpu.dot_dimension_numbers<[1], [0], [0], [1], [0, 0, 1, 1], [], []>} : vector<32x128xbf16>, vector<128x256xbf16>, vector<32x256xf32> -> vector<32x256xf32>
    %c0_43 = arith.constant 0 : index
    %c0_44 = arith.constant 0 : index
    %c0_45 = arith.constant 0 : index
    %110 = vector.load %arg10[%c0_43, %c0_44, %c0_45] : memref<2x1x256xf32, #tpu.memory_space<vmem>>, vector<1x1x256xf32>
    %111 = vector.shape_cast %110 : vector<1x1x256xf32> to vector<1x256xf32>
    %112 = vector.broadcast %111 : vector<1x256xf32> to vector<32x256xf32>
    %113 = arith.addf %109, %112 : vector<32x256xf32>
    %114 = arith.mulf %113, %113 : vector<32x256xf32>
    %115 = arith.mulf %113, %114 : vector<32x256xf32>
    %cst_46 = arith.constant 4.471500e-02 : f32
    %116 = vector.broadcast %cst_46 : f32 to vector<32x256xf32>
    %117 = arith.mulf %116, %115 : vector<32x256xf32>
    %118 = arith.addf %113, %117 : vector<32x256xf32>
    %cst_47 = arith.constant 0.797884583 : f32
    %119 = vector.broadcast %cst_47 : f32 to vector<32x256xf32>
    %120 = arith.mulf %119, %118 : vector<32x256xf32>
    %121 = math.tanh %120 : vector<32x256xf32>
    %cst_48 = arith.constant 1.000000e+00 : f32
    %122 = vector.broadcast %cst_48 : f32 to vector<32x256xf32>
    %123 = arith.addf %122, %121 : vector<32x256xf32>
    %cst_49 = arith.constant 5.000000e-01 : f32
    %124 = vector.broadcast %cst_49 : f32 to vector<32x256xf32>
    %125 = arith.mulf %124, %123 : vector<32x256xf32>
    %126 = arith.mulf %113, %125 : vector<32x256xf32>
    %127 = arith.truncf %126 : vector<32x256xf32> to vector<32x256xbf16>
    %c0_50 = arith.constant 0 : index
    %c0_51 = arith.constant 0 : index
    %c0_52 = arith.constant 0 : index
    %128 = vector.load %arg11[%c0_50, %c0_51, %c0_52] : memref<2x256x128xbf16, #tpu.memory_space<vmem>>, vector<1x256x128xbf16>
    %129 = vector.shape_cast %128 : vector<1x256x128xbf16> to vector<256x128xbf16>
    %cst_53 = arith.constant dense<0.000000e+00> : vector<32x128xf32>
    %130 = tpu.matmul %127, %129, %cst_53 {dimension_numbers = #tpu.dot_dimension_numbers<[1], [0], [0], [1], [0, 0, 1, 1], [], []>} : vector<32x256xbf16>, vector<256x128xbf16>, vector<32x128xf32> -> vector<32x128xf32>
    %c0_54 = arith.constant 0 : index
    %c0_55 = arith.constant 0 : index
    %c0_56 = arith.constant 0 : index
    %131 = vector.load %arg12[%c0_54, %c0_55, %c0_56] : memref<2x1x128xf32, #tpu.memory_space<vmem>>, vector<1x1x128xf32>
    %132 = vector.shape_cast %131 : vector<1x1x128xf32> to vector<1x128xf32>
    %133 = vector.broadcast %132 : vector<1x128xf32> to vector<32x128xf32>
    %134 = arith.addf %130, %133 : vector<32x128xf32>
    %c0_57 = arith.constant 0 : index
    %c0_58 = arith.constant 0 : index
    %c0_59 = arith.constant 0 : index
    %135 = vector.load %arg13[%c0_57, %c0_58, %c0_59] : memref<2x2x128xf32, #tpu.memory_space<vmem>>, vector<1x2x128xf32>
    %136 = vector.shape_cast %135 : vector<1x2x128xf32> to vector<2x128xf32>
    %137 = arith.addf %105, %134 : vector<32x128xf32>
    %138 = vector.extract_strided_slice %136 {offsets = [0, 0], sizes = [1, 128], strides = [1, 1]} : vector<2x128xf32> to vector<1x128xf32>
    %139 = vector.extract_strided_slice %136 {offsets = [1, 0], sizes = [1, 128], strides = [1, 1]} : vector<2x128xf32> to vector<1x128xf32>
    %cst_60 = arith.constant dense<0.000000e+00> : vector<32xf32>
    %140 = vector.multi_reduction <add>, %137, %cst_60 [1] : vector<32x128xf32> to vector<32xf32>
    %141 = vector.shape_cast %140 : vector<32xf32> to vector<32x1xf32>
    %cst_61 = arith.constant 1.280000e+02 : f32
    %142 = vector.broadcast %cst_61 : f32 to vector<32x1xf32>
    %143 = arith.divf %141, %142 : vector<32x1xf32>
    %144 = vector.broadcast %143 : vector<32x1xf32> to vector<32x128xf32>
    %145 = arith.subf %137, %144 : vector<32x128xf32>
    %146 = arith.mulf %145, %145 : vector<32x128xf32>
    %cst_62 = arith.constant dense<0.000000e+00> : vector<32xf32>
    %147 = vector.multi_reduction <add>, %146, %cst_62 [1] : vector<32x128xf32> to vector<32xf32>
    %148 = vector.shape_cast %147 : vector<32xf32> to vector<32x1xf32>
    %cst_63 = arith.constant 1.280000e+02 : f32
    %149 = vector.broadcast %cst_63 : f32 to vector<32x1xf32>
    %150 = arith.divf %148, %149 : vector<32x1xf32>
    %151 = vector.broadcast %143 : vector<32x1xf32> to vector<32x128xf32>
    %152 = arith.subf %137, %151 : vector<32x128xf32>
    %cst_64 = arith.constant 9.99999996E-13 : f32
    %153 = vector.broadcast %cst_64 : f32 to vector<32x1xf32>
    %154 = arith.addf %150, %153 : vector<32x1xf32>
    %155 = math.rsqrt %154 : vector<32x1xf32>
    %156 = vector.broadcast %155 : vector<32x1xf32> to vector<32x128xf32>
    %157 = arith.mulf %152, %156 : vector<32x128xf32>
    %158 = vector.broadcast %138 : vector<1x128xf32> to vector<32x128xf32>
    %159 = arith.mulf %157, %158 : vector<32x128xf32>
    %160 = vector.broadcast %139 : vector<1x128xf32> to vector<32x128xf32>
    %161 = arith.addf %159, %160 : vector<32x128xf32>
    %162 = arith.truncf %161 : vector<32x128xf32> to vector<32x128xbf16>
    %c1 = arith.constant 1 : index
    %c0_65 = arith.constant 0 : index
    %c0_66 = arith.constant 0 : index
    %163 = vector.load %arg4[%c1, %c0_65, %c0_66] : memref<2x128x384xbf16, #tpu.memory_space<vmem>>, vector<1x128x384xbf16>
    %164 = vector.shape_cast %163 : vector<1x128x384xbf16> to vector<128x384xbf16>
    %cst_67 = arith.constant dense<0.000000e+00> : vector<32x384xf32>
    %165 = tpu.matmul %162, %164, %cst_67 {dimension_numbers = #tpu.dot_dimension_numbers<[1], [0], [0], [1], [0, 0, 1, 1], [], []>} : vector<32x128xbf16>, vector<128x384xbf16>, vector<32x384xf32> -> vector<32x384xf32>
    %c1_68 = arith.constant 1 : index
    %c0_69 = arith.constant 0 : index
    %c0_70 = arith.constant 0 : index
    %166 = vector.load %arg5[%c1_68, %c0_69, %c0_70] : memref<2x1x384xf32, #tpu.memory_space<vmem>>, vector<1x1x384xf32>
    %167 = vector.shape_cast %166 : vector<1x1x384xf32> to vector<1x384xf32>
    %168 = vector.broadcast %167 : vector<1x384xf32> to vector<32x384xf32>
    %169 = arith.addf %165, %168 : vector<32x384xf32>
    %170 = arith.truncf %169 : vector<32x384xf32> to vector<32x384xbf16>
    %171 = vector.extract_strided_slice %170 {offsets = [0, 0], sizes = [32, 64], strides = [1, 1]} : vector<32x384xbf16> to vector<32x64xbf16>
    %172 = vector.extract_strided_slice %170 {offsets = [0, 128], sizes = [32, 64], strides = [1, 1]} : vector<32x384xbf16> to vector<32x64xbf16>
    %173 = vector.extract_strided_slice %170 {offsets = [0, 256], sizes = [32, 64], strides = [1, 1]} : vector<32x384xbf16> to vector<32x64xbf16>
    %cst_71 = arith.constant dense<0.000000e+00> : vector<32x32xf32>
    %174 = tpu.matmul %171, %172, %cst_71 {dimension_numbers = #tpu.dot_dimension_numbers<[1], [1], [0], [0], [0, 0, 1, 0], [], []>} : vector<32x64xbf16>, vector<32x64xbf16>, vector<32x32xf32> -> vector<32x32xf32>
    %175 = arith.addf %174, %26 : vector<32x32xf32>
    %cst_72 = arith.constant dense<0xFF800000> : vector<32xf32>
    %176 = vector.multi_reduction <maximumf>, %175, %cst_72 [1] : vector<32x32xf32> to vector<32xf32>
    %177 = vector.shape_cast %176 : vector<32xf32> to vector<32x1xf32>
    %178 = vector.broadcast %177 : vector<32x1xf32> to vector<32x32xf32>
    %179 = arith.subf %175, %178 : vector<32x32xf32>
    %180 = math.exp %179 : vector<32x32xf32>
    %cst_73 = arith.constant dense<0.000000e+00> : vector<32xf32>
    %181 = vector.multi_reduction <add>, %180, %cst_73 [1] : vector<32x32xf32> to vector<32xf32>
    %182 = vector.shape_cast %181 : vector<32xf32> to vector<32x1xf32>
    %183 = tpu.reciprocal %182 {approx = true} : vector<32x1xf32> -> vector<32x1xf32>
    %184 = vector.broadcast %183 : vector<32x1xf32> to vector<32x32xf32>
    %185 = arith.mulf %180, %184 : vector<32x32xf32>
    %186 = arith.truncf %185 : vector<32x32xf32> to vector<32x32xbf16>
    %cst_74 = arith.constant dense<0.000000e+00> : vector<32x64xf32>
    %187 = tpu.matmul %186, %173, %cst_74 {dimension_numbers = #tpu.dot_dimension_numbers<[1], [0], [0], [1], [0, 0, 1, 1], [], []>} : vector<32x32xbf16>, vector<32x64xbf16>, vector<32x64xf32> -> vector<32x64xf32>
    %188 = vector.extract_strided_slice %170 {offsets = [0, 64], sizes = [32, 64], strides = [1, 1]} : vector<32x384xbf16> to vector<32x64xbf16>
    %189 = vector.extract_strided_slice %170 {offsets = [0, 192], sizes = [32, 64], strides = [1, 1]} : vector<32x384xbf16> to vector<32x64xbf16>
    %190 = vector.extract_strided_slice %170 {offsets = [0, 320], sizes = [32, 64], strides = [1, 1]} : vector<32x384xbf16> to vector<32x64xbf16>
    %cst_75 = arith.constant dense<0.000000e+00> : vector<32x32xf32>
    %191 = tpu.matmul %188, %189, %cst_75 {dimension_numbers = #tpu.dot_dimension_numbers<[1], [1], [0], [0], [0, 0, 1, 0], [], []>} : vector<32x64xbf16>, vector<32x64xbf16>, vector<32x32xf32> -> vector<32x32xf32>
    %192 = arith.addf %191, %26 : vector<32x32xf32>
    %cst_76 = arith.constant dense<0xFF800000> : vector<32xf32>
    %193 = vector.multi_reduction <maximumf>, %192, %cst_76 [1] : vector<32x32xf32> to vector<32xf32>
    %194 = vector.shape_cast %193 : vector<32xf32> to vector<32x1xf32>
    %195 = vector.broadcast %194 : vector<32x1xf32> to vector<32x32xf32>
    %196 = arith.subf %192, %195 : vector<32x32xf32>
    %197 = math.exp %196 : vector<32x32xf32>
    %cst_77 = arith.constant dense<0.000000e+00> : vector<32xf32>
    %198 = vector.multi_reduction <add>, %197, %cst_77 [1] : vector<32x32xf32> to vector<32xf32>
    %199 = vector.shape_cast %198 : vector<32xf32> to vector<32x1xf32>
    %200 = tpu.reciprocal %199 {approx = true} : vector<32x1xf32> -> vector<32x1xf32>
    %201 = vector.broadcast %200 : vector<32x1xf32> to vector<32x32xf32>
    %202 = arith.mulf %197, %201 : vector<32x32xf32>
    %203 = arith.truncf %202 : vector<32x32xf32> to vector<32x32xbf16>
    %cst_78 = arith.constant dense<0.000000e+00> : vector<32x64xf32>
    %204 = tpu.matmul %203, %190, %cst_78 {dimension_numbers = #tpu.dot_dimension_numbers<[1], [0], [0], [1], [0, 0, 1, 1], [], []>} : vector<32x32xbf16>, vector<32x64xbf16>, vector<32x64xf32> -> vector<32x64xf32>
    %205 = tpu.concatenate %187, %204 in 1 : vector<32x64xf32>, vector<32x64xf32> -> vector<32x128xf32>
    %206 = arith.truncf %205 : vector<32x128xf32> to vector<32x128xbf16>
    %c1_79 = arith.constant 1 : index
    %c0_80 = arith.constant 0 : index
    %c0_81 = arith.constant 0 : index
    %207 = vector.load %arg6[%c1_79, %c0_80, %c0_81] : memref<2x128x128xbf16, #tpu.memory_space<vmem>>, vector<1x128x128xbf16>
    %208 = vector.shape_cast %207 : vector<1x128x128xbf16> to vector<128x128xbf16>
    %cst_82 = arith.constant dense<0.000000e+00> : vector<32x128xf32>
    %209 = tpu.matmul %206, %208, %cst_82 {dimension_numbers = #tpu.dot_dimension_numbers<[1], [0], [0], [1], [0, 0, 1, 1], [], []>} : vector<32x128xbf16>, vector<128x128xbf16>, vector<32x128xf32> -> vector<32x128xf32>
    %c1_83 = arith.constant 1 : index
    %c0_84 = arith.constant 0 : index
    %c0_85 = arith.constant 0 : index
    %210 = vector.load %arg7[%c1_83, %c0_84, %c0_85] : memref<2x1x128xf32, #tpu.memory_space<vmem>>, vector<1x1x128xf32>
    %211 = vector.shape_cast %210 : vector<1x1x128xf32> to vector<1x128xf32>
    %212 = vector.broadcast %211 : vector<1x128xf32> to vector<32x128xf32>
    %213 = arith.addf %209, %212 : vector<32x128xf32>
    %c1_86 = arith.constant 1 : index
    %c0_87 = arith.constant 0 : index
    %c0_88 = arith.constant 0 : index
    %214 = vector.load %arg8[%c1_86, %c0_87, %c0_88] : memref<2x2x128xf32, #tpu.memory_space<vmem>>, vector<1x2x128xf32>
    %215 = vector.shape_cast %214 : vector<1x2x128xf32> to vector<2x128xf32>
    %216 = arith.addf %161, %213 : vector<32x128xf32>
    %217 = vector.extract_strided_slice %215 {offsets = [0, 0], sizes = [1, 128], strides = [1, 1]} : vector<2x128xf32> to vector<1x128xf32>
    %218 = vector.extract_strided_slice %215 {offsets = [1, 0], sizes = [1, 128], strides = [1, 1]} : vector<2x128xf32> to vector<1x128xf32>
    %cst_89 = arith.constant dense<0.000000e+00> : vector<32xf32>
    %219 = vector.multi_reduction <add>, %216, %cst_89 [1] : vector<32x128xf32> to vector<32xf32>
    %220 = vector.shape_cast %219 : vector<32xf32> to vector<32x1xf32>
    %cst_90 = arith.constant 1.280000e+02 : f32
    %221 = vector.broadcast %cst_90 : f32 to vector<32x1xf32>
    %222 = arith.divf %220, %221 : vector<32x1xf32>
    %223 = vector.broadcast %222 : vector<32x1xf32> to vector<32x128xf32>
    %224 = arith.subf %216, %223 : vector<32x128xf32>
    %225 = arith.mulf %224, %224 : vector<32x128xf32>
    %cst_91 = arith.constant dense<0.000000e+00> : vector<32xf32>
    %226 = vector.multi_reduction <add>, %225, %cst_91 [1] : vector<32x128xf32> to vector<32xf32>
    %227 = vector.shape_cast %226 : vector<32xf32> to vector<32x1xf32>
    %cst_92 = arith.constant 1.280000e+02 : f32
    %228 = vector.broadcast %cst_92 : f32 to vector<32x1xf32>
    %229 = arith.divf %227, %228 : vector<32x1xf32>
    %230 = vector.broadcast %222 : vector<32x1xf32> to vector<32x128xf32>
    %231 = arith.subf %216, %230 : vector<32x128xf32>
    %cst_93 = arith.constant 9.99999996E-13 : f32
    %232 = vector.broadcast %cst_93 : f32 to vector<32x1xf32>
    %233 = arith.addf %229, %232 : vector<32x1xf32>
    %234 = math.rsqrt %233 : vector<32x1xf32>
    %235 = vector.broadcast %234 : vector<32x1xf32> to vector<32x128xf32>
    %236 = arith.mulf %231, %235 : vector<32x128xf32>
    %237 = vector.broadcast %217 : vector<1x128xf32> to vector<32x128xf32>
    %238 = arith.mulf %236, %237 : vector<32x128xf32>
    %239 = vector.broadcast %218 : vector<1x128xf32> to vector<32x128xf32>
    %240 = arith.addf %238, %239 : vector<32x128xf32>
    %241 = arith.truncf %240 : vector<32x128xf32> to vector<32x128xbf16>
    %c1_94 = arith.constant 1 : index
    %c0_95 = arith.constant 0 : index
    %c0_96 = arith.constant 0 : index
    %242 = vector.load %arg9[%c1_94, %c0_95, %c0_96] : memref<2x128x256xbf16, #tpu.memory_space<vmem>>, vector<1x128x256xbf16>
    %243 = vector.shape_cast %242 : vector<1x128x256xbf16> to vector<128x256xbf16>
    %cst_97 = arith.constant dense<0.000000e+00> : vector<32x256xf32>
    %244 = tpu.matmul %241, %243, %cst_97 {dimension_numbers = #tpu.dot_dimension_numbers<[1], [0], [0], [1], [0, 0, 1, 1], [], []>} : vector<32x128xbf16>, vector<128x256xbf16>, vector<32x256xf32> -> vector<32x256xf32>
    %c1_98 = arith.constant 1 : index
    %c0_99 = arith.constant 0 : index
    %c0_100 = arith.constant 0 : index
    %245 = vector.load %arg10[%c1_98, %c0_99, %c0_100] : memref<2x1x256xf32, #tpu.memory_space<vmem>>, vector<1x1x256xf32>
    %246 = vector.shape_cast %245 : vector<1x1x256xf32> to vector<1x256xf32>
    %247 = vector.broadcast %246 : vector<1x256xf32> to vector<32x256xf32>
    %248 = arith.addf %244, %247 : vector<32x256xf32>
    %249 = arith.mulf %248, %248 : vector<32x256xf32>
    %250 = arith.mulf %248, %249 : vector<32x256xf32>
    %cst_101 = arith.constant 4.471500e-02 : f32
    %251 = vector.broadcast %cst_101 : f32 to vector<32x256xf32>
    %252 = arith.mulf %251, %250 : vector<32x256xf32>
    %253 = arith.addf %248, %252 : vector<32x256xf32>
    %cst_102 = arith.constant 0.797884583 : f32
    %254 = vector.broadcast %cst_102 : f32 to vector<32x256xf32>
    %255 = arith.mulf %254, %253 : vector<32x256xf32>
    %256 = math.tanh %255 : vector<32x256xf32>
    %cst_103 = arith.constant 1.000000e+00 : f32
    %257 = vector.broadcast %cst_103 : f32 to vector<32x256xf32>
    %258 = arith.addf %257, %256 : vector<32x256xf32>
    %cst_104 = arith.constant 5.000000e-01 : f32
    %259 = vector.broadcast %cst_104 : f32 to vector<32x256xf32>
    %260 = arith.mulf %259, %258 : vector<32x256xf32>
    %261 = arith.mulf %248, %260 : vector<32x256xf32>
    %262 = arith.truncf %261 : vector<32x256xf32> to vector<32x256xbf16>
    %c1_105 = arith.constant 1 : index
    %c0_106 = arith.constant 0 : index
    %c0_107 = arith.constant 0 : index
    %263 = vector.load %arg11[%c1_105, %c0_106, %c0_107] : memref<2x256x128xbf16, #tpu.memory_space<vmem>>, vector<1x256x128xbf16>
    %264 = vector.shape_cast %263 : vector<1x256x128xbf16> to vector<256x128xbf16>
    %cst_108 = arith.constant dense<0.000000e+00> : vector<32x128xf32>
    %265 = tpu.matmul %262, %264, %cst_108 {dimension_numbers = #tpu.dot_dimension_numbers<[1], [0], [0], [1], [0, 0, 1, 1], [], []>} : vector<32x256xbf16>, vector<256x128xbf16>, vector<32x128xf32> -> vector<32x128xf32>
    %c1_109 = arith.constant 1 : index
    %c0_110 = arith.constant 0 : index
    %c0_111 = arith.constant 0 : index
    %266 = vector.load %arg12[%c1_109, %c0_110, %c0_111] : memref<2x1x128xf32, #tpu.memory_space<vmem>>, vector<1x1x128xf32>
    %267 = vector.shape_cast %266 : vector<1x1x128xf32> to vector<1x128xf32>
    %268 = vector.broadcast %267 : vector<1x128xf32> to vector<32x128xf32>
    %269 = arith.addf %265, %268 : vector<32x128xf32>
    %c1_112 = arith.constant 1 : index
    %c0_113 = arith.constant 0 : index
    %c0_114 = arith.constant 0 : index
    %270 = vector.load %arg13[%c1_112, %c0_113, %c0_114] : memref<2x2x128xf32, #tpu.memory_space<vmem>>, vector<1x2x128xf32>
    %271 = vector.shape_cast %270 : vector<1x2x128xf32> to vector<2x128xf32>
    %272 = arith.addf %240, %269 : vector<32x128xf32>
    %273 = vector.extract_strided_slice %271 {offsets = [0, 0], sizes = [1, 128], strides = [1, 1]} : vector<2x128xf32> to vector<1x128xf32>
    %274 = vector.extract_strided_slice %271 {offsets = [1, 0], sizes = [1, 128], strides = [1, 1]} : vector<2x128xf32> to vector<1x128xf32>
    %cst_115 = arith.constant dense<0.000000e+00> : vector<32xf32>
    %275 = vector.multi_reduction <add>, %272, %cst_115 [1] : vector<32x128xf32> to vector<32xf32>
    %276 = vector.shape_cast %275 : vector<32xf32> to vector<32x1xf32>
    %cst_116 = arith.constant 1.280000e+02 : f32
    %277 = vector.broadcast %cst_116 : f32 to vector<32x1xf32>
    %278 = arith.divf %276, %277 : vector<32x1xf32>
    %279 = vector.broadcast %278 : vector<32x1xf32> to vector<32x128xf32>
    %280 = arith.subf %272, %279 : vector<32x128xf32>
    %281 = arith.mulf %280, %280 : vector<32x128xf32>
    %cst_117 = arith.constant dense<0.000000e+00> : vector<32xf32>
    %282 = vector.multi_reduction <add>, %281, %cst_117 [1] : vector<32x128xf32> to vector<32xf32>
    %283 = vector.shape_cast %282 : vector<32xf32> to vector<32x1xf32>
    %cst_118 = arith.constant 1.280000e+02 : f32
    %284 = vector.broadcast %cst_118 : f32 to vector<32x1xf32>
    %285 = arith.divf %283, %284 : vector<32x1xf32>
    %286 = vector.broadcast %278 : vector<32x1xf32> to vector<32x128xf32>
    %287 = arith.subf %272, %286 : vector<32x128xf32>
    %cst_119 = arith.constant 9.99999996E-13 : f32
    %288 = vector.broadcast %cst_119 : f32 to vector<32x1xf32>
    %289 = arith.addf %285, %288 : vector<32x1xf32>
    %290 = math.rsqrt %289 : vector<32x1xf32>
    %291 = vector.broadcast %290 : vector<32x1xf32> to vector<32x128xf32>
    %292 = arith.mulf %287, %291 : vector<32x128xf32>
    %293 = vector.broadcast %273 : vector<1x128xf32> to vector<32x128xf32>
    %294 = arith.mulf %292, %293 : vector<32x128xf32>
    %295 = vector.broadcast %274 : vector<1x128xf32> to vector<32x128xf32>
    %296 = arith.addf %294, %295 : vector<32x128xf32>
    %c0_120 = arith.constant 0 : index
    %c0_121 = arith.constant 0 : index
    %297 = vector.load %arg2[%c0_120, %c0_121] : memref<2x32xf32, #tpu.memory_space<vmem>>, vector<2x32xf32>
    %cst_122 = arith.constant dense<0.000000e+00> : vector<2x128xf32>
    %298 = tpu.matmul %297, %296, %cst_122 {dimension_numbers = #tpu.dot_dimension_numbers<[1], [0], [0], [1], [0, 0, 1, 1], [], []>} : vector<2x32xf32>, vector<32x128xf32>, vector<2x128xf32> -> vector<2x128xf32>
    %c0_123 = arith.constant 0 : index
    %c0_124 = arith.constant 0 : index
    %299 = vector.load %arg14[%c0_123, %c0_124] : memref<2x128xf32, #tpu.memory_space<vmem>>, vector<2x128xf32>
    tpu.vector_store %arg14[%c0_123, %c0_124], %298 {strides = array<i32>} : memref<2x128xf32, #tpu.memory_space<vmem>>, vector<2x128xf32>,
    return
  }
}

</mosaic_0001>

<llo_original>
// kernel: word_features_forward.1
$region0: #{word_features_forward.1}
  #allocation0 [shape = 'u32[]', space=smem, size = 0x4, offset = 0x4, fixed_abs, tag = 'smem constant byte address 0x4 - core index']
  #allocation1 [shape = 'u32[144,128]{1,0:T(1,128)}', space=vmem, size = 0x12000, scoped, tag = 'internal scratch']
  %s0 = inlined_call_operand.vmem [shape: f32[32,128], index: 0, kind: input, shape index: {}]
  %s1 = inlined_call_operand.vmem [shape: f32[32,32], index: 1, kind: input, shape index: {}]
  %s2 = inlined_call_operand.vmem [shape: f32[2,32], index: 2, kind: input, shape index: {}]
  %s3 = inlined_call_operand.vmem [shape: f32[2,128], index: 3, kind: input, shape index: {}]
  %s4 = inlined_call_operand.vmem [shape: bf16[2,128,384], index: 4, kind: input, shape index: {}]
  %s5 = inlined_call_operand.vmem [shape: f32[2,1,384], index: 5, kind: input, shape index: {}]
  %s6 = inlined_call_operand.vmem [shape: bf16[2,128,128], index: 6, kind: input, shape index: {}]
  %s7 = inlined_call_operand.vmem [shape: f32[2,1,128], index: 7, kind: input, shape index: {}]
  %s8 = inlined_call_operand.vmem [shape: f32[2,2,128], index: 8, kind: input, shape index: {}]
  %s9 = inlined_call_operand.hbm [shape: bf16[2,128,256], index: 9, kind: input, shape index: {}]
  %s10 = inlined_call_operand.vmem [shape: f32[2,1,256], index: 10, kind: input, shape index: {}]
  %s11 = inlined_call_operand.hbm [shape: bf16[2,256,128], index: 11, kind: input, shape index: {}]
  %s12 = inlined_call_operand.vmem [shape: f32[2,1,128], index: 12, kind: input, shape index: {}]
  %s13 = inlined_call_operand.vmem [shape: f32[2,2,128], index: 13, kind: input, shape index: {}]
  %s14 = inlined_call_operand.hbm [shape: f32[2,128], index: 14, kind: output, shape index: {}]
  %s15 = sld [smem:[#allocation0]]
  $region74: #{word_features_forward.1} parent=0
    _
  %s17 = ssub.s32 1, %s15
  %s18 = scalar_select 0, %s17, %s15
  $region1: #{word_features_forward.1} parent=0
    #allocation2 [shape = 'u8[131072]{0}', space=vmem, size = 0x20000, scoped, tag = 'input window, operand 9, single buffered']
    #allocation3 [shape = 's32[1]{0}', space=sflag, size = 0x4, scoped, tag = 'scoped memory for word_features_forward.1']
    #allocation4 [shape = 's32[1]{0}', space=sflag, size = 0x4, scoped, tag = 'scoped memory for word_features_forward.1']
    #allocation5 [shape = 'u8[131072]{0}', space=vmem, size = 0x20000, scoped, tag = 'input window, operand 11, single buffered']
    #allocation6 [shape = 's32[1]{0}', space=sflag, size = 0x4, scoped, tag = 'scoped memory for word_features_forward.1']
    #allocation7 [shape = 'u8[1024]{0}', space=vmem, size = 0x400, scoped, tag = 'output window, operand 0, single buffered']
    %19 = vsyncpa [#allocation3], 0
    %20 = vsyncpa [#allocation6], 0
    %21 = vsyncpa [#allocation4], 0
    // Predicated region
    $region2: #{word_features_forward.1} parent=1 // pred_check
      _
    $region3: #{word_features_forward.1} parent=1 // pred_check_branch
      %23 = sbr.rel (0) target = $region5
    $region4: #{word_features_forward.1} parent=1 // pred_region
      _
    $region5: #{word_features_forward.1} parent=1 // pred_fallthru
      _
    // Predicated region
    $region6: #{word_features_forward.1} parent=1 // pred_check
      _
    $region7: #{word_features_forward.1} parent=1 // pred_check_branch
      %25 = sbr.rel (0) target = $region9
    $region8: #{word_features_forward.1} parent=1 // pred_region
      _
    $region9: #{word_features_forward.1} parent=1 // pred_fallthru
      _
    // Predicated region
    $region10: #{word_features_forward.1} parent=1 // pred_check
      _
    $region11: #{word_features_forward.1} parent=1 // pred_check_branch
      %27 = sbr.rel (0) target = $region13
    $region12: #{word_features_forward.1} parent=1 // pred_region
      _
    $region13: #{word_features_forward.1} parent=1 // pred_fallthru
      _
    // Predicated region
    $region14: #{word_features_forward.1} parent=1 // pred_check
      _
    $region15: #{word_features_forward.1} parent=1 // pred_check_branch
      %29 = sbr.rel (0) target = $region17
    $region16: #{word_features_forward.1} parent=1 // pred_region
      _
    $region17: #{word_features_forward.1} parent=1 // pred_fallthru
      _
    // Predicated region
    $region18: #{word_features_forward.1} parent=1 // pred_check
      _
    $region19: #{word_features_forward.1} parent=1 // pred_check_branch
      %31 = sbr.rel (0) target = $region21
    $region20: #{word_features_forward.1} parent=1 // pred_region
      _
    $region21: #{word_features_forward.1} parent=1 // pred_fallthru
      _
    // Predicated region
    $region22: #{word_features_forward.1} parent=1 // pred_check
      _
    $region23: #{word_features_forward.1} parent=1 // pred_check_branch
      %33 = sbr.rel (0) target = $region25
    $region24: #{word_features_forward.1} parent=1 // pred_region
      _
    $region25: #{word_features_forward.1} parent=1 // pred_fallthru
      _
    // Predicated region
    $region26: #{word_features_forward.1} parent=1 // pred_check
      _
    $region27: #{word_features_forward.1} parent=1 // pred_check_branch
      %35 = sbr.rel (0) target = $region29
    $region28: #{word_features_forward.1} parent=1 // pred_region
      _
    $region29: #{word_features_forward.1} parent=1 // pred_fallthru
      _
    // Predicated region
    $region30: #{word_features_forward.1} parent=1 // pred_check
      _
    $region31: #{word_features_forward.1} parent=1 // pred_check_branch
      %37 = sbr.rel (0) target = $region33
    $region32: #{word_features_forward.1} parent=1 // pred_region
      _
    $region33: #{word_features_forward.1} parent=1 // pred_fallthru
      _
    // Predicated region
    $region34: #{word_features_forward.1} parent=1 // pred_check
      _
    $region35: #{word_features_forward.1} parent=1 // pred_check_branch
      %39 = sbr.rel (0) target = $region37
    $region36: #{word_features_forward.1} parent=1 // pred_region
      _
    $region37: #{word_features_forward.1} parent=1 // pred_fallthru
      _
    // Predicated region
    $region38: #{word_features_forward.1} parent=1 // pred_check
      _
    $region39: #{word_features_forward.1} parent=1 // pred_check_branch
      %41 = sbr.rel (0) target = $region41
    $region40: #{word_features_forward.1} parent=1 // pred_region
      %s43 = ssub.s32 4096, 4096
      %44 = vsyncadd [#allocation3], %s43
      %s45 = sshll.u32 [#allocation2], 4
      %s46 = int_to_ptr.vmem [resolvable:$true] %s45
      %51 = dma.hbm_to_vmem [thread:$0]  %s9, 4096, %s46, [#allocation3], 128, 128, 8
    $region41: #{word_features_forward.1} parent=1 // pred_fallthru
      _
    // Predicated region
    $region42: #{word_features_forward.1} parent=1 // pred_check
      _
    $region43: #{word_features_forward.1} parent=1 // pred_check_branch
      %53 = sbr.rel (0) target = $region45
    $region44: #{word_features_forward.1} parent=1 // pred_region
      _
    $region45: #{word_features_forward.1} parent=1 // pred_fallthru
      _
    // Predicated region
    $region46: #{word_features_forward.1} parent=1 // pred_check
      _
    $region47: #{word_features_forward.1} parent=1 // pred_check_branch
      %55 = sbr.rel (0) target = $region49
    $region48: #{word_features_forward.1} parent=1 // pred_region
      %s57 = ssub.s32 4096, 4096
      %58 = vsyncadd [#allocation6], %s57
      %s59 = sshll.u32 [#allocation5], 4
      %s60 = int_to_ptr.vmem [resolvable:$true] %s59
      %65 = dma.hbm_to_vmem [thread:$0]  %s11, 4096, %s60, [#allocation6], 64, 64, 4
    $region49: #{word_features_forward.1} parent=1 // pred_fallthru
      _
    // Predicated region
    $region50: #{word_features_forward.1} parent=1 // pred_check
      _
    $region51: #{word_features_forward.1} parent=1 // pred_check_branch
      %67 = sbr.rel (0) target = $region53
    $region52: #{word_features_forward.1} parent=1 // pred_region
      _
    $region53: #{word_features_forward.1} parent=1 // pred_fallthru
      _
    // Predicated region
    $region54: #{word_features_forward.1} parent=1 // pred_check
      _
    $region55: #{word_features_forward.1} parent=1 // pred_check_branch
      %69 = sbr.rel (0) target = $region57
    $region56: #{word_features_forward.1} parent=1 // pred_region
      _
    $region57: #{word_features_forward.1} parent=1 // pred_fallthru
      _
    // Predicated region
    $region58: #{word_features_forward.1} parent=1 // pred_check
      _
    $region59: #{word_features_forward.1} parent=1 // pred_check_branch
      %71 = sbr.rel (0) target = $region61
    $region60: #{word_features_forward.1} parent=1 // pred_region
      %72 = dma.done [#allocation3], 4096
    $region61: #{word_features_forward.1} parent=1 // pred_fallthru
      _
    // Predicated region
    $region62: #{word_features_forward.1} parent=1 // pred_check
      _
    $region63: #{word_features_forward.1} parent=1 // pred_check_branch
      %74 = sbr.rel (0) target = $region65
    $region64: #{word_features_forward.1} parent=1 // pred_region
      %75 = dma.done [#allocation6], 4096
    $region65: #{word_features_forward.1} parent=1 // pred_fallthru
      _
    %v77 = vld [vmem:[%s0] sm:$0xff]
    %v78 = vld [vmem:[%s0 + $0x8] sm:$0xff]
    %v79 = vld [vmem:[%s0 + $0x10] sm:$0xff]
    %v80 = vld [vmem:[%s0 + $0x18] sm:$0xff]
    %v81 = vld [vmem:[%s3] sm:$0x3]
    %82 = vadd.xlane.f32.xlu0 %v77
    %v83 = vpop.xlane.xlu0 %82
    %84 = vadd.xlane.f32.xlu0 %v78
    %v85 = vpop.xlane.xlu0 %84
    %86 = vadd.xlane.f32.xlu0 %v79
    %v87 = vpop.xlane.xlu0 %86
    %88 = vadd.xlane.f32.xlu0 %v80
    %v89 = vpop.xlane.xlu0 %88
    %v90 = vrcp.pop 128.0
    %v91 = vmul.f32 %v83, %v90
    %v92 = vmul.f32 %v85, %v90
    %v93 = vmul.f32 %v87, %v90
    %v94 = vmul.f32 %v89, %v90
    %v95 = vsub.f32 %v77, %v91
    %v96 = vsub.f32 %v78, %v92
    %v97 = vsub.f32 %v79, %v93
    %v98 = vsub.f32 %v80, %v94
    %v99 = vmul.f32 %v95, %v95
    %v100 = vmul.f32 %v96, %v96
    %v101 = vmul.f32 %v97, %v97
    %v102 = vmul.f32 %v98, %v98
    %103 = vadd.xlane.f32.xlu0 %v99
    %v104 = vpop.xlane.xlu0 %103
    %105 = vadd.xlane.f32.xlu0 %v100
    %v106 = vpop.xlane.xlu0 %105
    %107 = vadd.xlane.f32.xlu0 %v101
    %v108 = vpop.xlane.xlu0 %107
    %109 = vadd.xlane.f32.xlu0 %v102
    %v110 = vpop.xlane.xlu0 %109
    %v111 = vmul.f32 %v104, %v90
    %v112 = vmul.f32 %v106, %v90
    %v113 = vmul.f32 %v108, %v90
    %v114 = vmul.f32 %v110, %v90
    %v115 = vadd.f32 %v111, 1e-12
    %v116 = vadd.f32 %v112, 1e-12
    %v117 = vadd.f32 %v113, 1e-12
    %v118 = vadd.f32 %v114, 1e-12
    %v119 = vrsqrt.pop %v115
    %v120 = vrsqrt.pop %v116
    %v121 = vrsqrt.pop %v117
    %v122 = vrsqrt.pop %v118
    %v123 = vmul.f32 %v95, %v119
    %v124 = vmul.f32 %v96, %v120
    %v125 = vmul.f32 %v97, %v121
    %v126 = vmul.f32 %v98, %v122
    %v127 = vlaneseq
    %v128 = vshrl.u32 %v127, 7
    %v129 = vsub.s32 0, %v128
    %v130 = vrot.slane %v81, %v129
    %v131 = vmul.f32 %v123, %v130
    %v132 = vmul.f32 %v124, %v130
    %v133 = vmul.f32 %v125, %v130
    %v134 = vmul.f32 %v126, %v130
    %v135 = vlaneseq
    %v136 = vshrl.u32 %v135, 7
    %v137 = vsub.s32 1, %v136
    %v138 = vrot.slane %v81, %v137
    %v139 = vadd.f32 %v131, %v138
    %v140 = vadd.f32 %v132, %v138
    %v141 = vadd.f32 %v133, %v138
    %v142 = vadd.f32 %v134, %v138
    %v143 = vld [vmem:[%s1] sm:$0xff]
    %v144 = vld [vmem:[%s1 + $0x8] sm:$0xff]
    %v145 = vld [vmem:[%s1 + $0x10] sm:$0xff]
    %v146 = vld [vmem:[%s1 + $0x18] sm:$0xff]
    %v147 = vpack.c.bf16 %v140, %v139
    %v148 = vpack.c.bf16 %v142, %v141
    %v149 = vld [vmem:[%s4] sm:$0xff]
    %v150 = vld [vmem:[%s4 + $0x8] sm:$0xf]
    %v151 = vld [vmem:[%s4 + $0xc] sm:$0xff]
    %v152 = vld [vmem:[%s4 + $0x14] sm:$0xf]
    %v153 = vld [vmem:[%s4 + $0x18] sm:$0xff]
    %v154 = vld [vmem:[%s4 + $0x20] sm:$0xf]
    %v155 = vld [vmem:[%s4 + $0x24] sm:$0xff]
    %v156 = vld [vmem:[%s4 + $0x2c] sm:$0xf]
    %v157 = vld [vmem:[%s4 + $0x30] sm:$0xff]
    %v158 = vld [vmem:[%s4 + $0x38] sm:$0xf]
    %v159 = vld [vmem:[%s4 + $0x3c] sm:$0xff]
    %v160 = vld [vmem:[%s4 + $0x44] sm:$0xf]
    %v161 = vld [vmem:[%s4 + $0x48] sm:$0xff]
    %v162 = vld [vmem:[%s4 + $0x50] sm:$0xf]
    %v163 = vld [vmem:[%s4 + $0x54] sm:$0xff]
    %v164 = vld [vmem:[%s4 + $0x5c] sm:$0xf]
    %v165 = vld [vmem:[%s4 + $0x60] sm:$0xff]
    %v166 = vld [vmem:[%s4 + $0x68] sm:$0xf]
    %v167 = vld [vmem:[%s4 + $0x6c] sm:$0xff]
    %v168 = vld [vmem:[%s4 + $0x74] sm:$0xf]
    %v169 = vld [vmem:[%s4 + $0x78] sm:$0xff]
    %v170 = vld [vmem:[%s4 + $0x80] sm:$0xf]
    %v171 = vld [vmem:[%s4 + $0x84] sm:$0xff]
    %v172 = vld [vmem:[%s4 + $0x8c] sm:$0xf]
    %v173 = vld [vmem:[%s4 + $0x90] sm:$0xff]
    %v174 = vld [vmem:[%s4 + $0x98] sm:$0xf]
    %v175 = vld [vmem:[%s4 + $0x9c] sm:$0xff]
    %v176 = vld [vmem:[%s4 + $0xa4] sm:$0xf]
    %v177 = vld [vmem:[%s4 + $0xa8] sm:$0xff]
    %v178 = vld [vmem:[%s4 + $0xb0] sm:$0xf]
    %v179 = vld [vmem:[%s4 + $0xb4] sm:$0xff]
    %v180 = vld [vmem:[%s4 + $0xbc] sm:$0xf]
    %v181 = vld [vmem:[%s5] sm:$0x7]
    %v183 = vlaneseq
    %v184 = vshrl.u32 %v183, 7
    %v185 = vsub.s32 0, %v184
    %v186 = vrot.slane %v181, %v185
    %v187 = vlaneseq
    %v188 = vshrl.u32 %v187, 7
    %v189 = vsub.s32 1, %v188
    %v190 = vrot.slane %v181, %v189
    %v191 = vlaneseq
    %v192 = vshrl.u32 %v191, 7
    %v193 = vsub.s32 2, %v192
    %v194 = vrot.slane %v181, %v193
    %v230 = vunpack.c.l.b16 %v149
    %v231 = vunpack.c.h.b16 %v149
    %v232 = vunpack.c.l.b16 %v150
    %v233 = vunpack.c.l.b16 %v151
    %v234 = vunpack.c.h.b16 %v151
    %v235 = vunpack.c.l.b16 %v152
    %v236 = vunpack.c.l.b16 %v153
    %v237 = vunpack.c.h.b16 %v153
    %v238 = vunpack.c.l.b16 %v154
    %v239 = vunpack.c.l.b16 %v155
    %v240 = vunpack.c.h.b16 %v155
    %v241 = vunpack.c.l.b16 %v156
    %v242 = vunpack.c.l.b16 %v157
    %v243 = vunpack.c.h.b16 %v157
    %v244 = vunpack.c.l.b16 %v158
    %v245 = vunpack.c.l.b16 %v159
    %v246 = vunpack.c.h.b16 %v159
    %v247 = vunpack.c.l.b16 %v160
    %v248 = vunpack.c.l.b16 %v161
    %v249 = vunpack.c.h.b16 %v161
    %v250 = vunpack.c.l.b16 %v162
    %v251 = vunpack.c.l.b16 %v163
    %v252 = vunpack.c.h.b16 %v163
    %v253 = vunpack.c.l.b16 %v164
    %v254 = vunpack.c.l.b16 %v165
    %v255 = vunpack.c.h.b16 %v165
    %v256 = vunpack.c.l.b16 %v166
    %v257 = vunpack.c.l.b16 %v167
    %v258 = vunpack.c.h.b16 %v167
    %v259 = vunpack.c.l.b16 %v168
    %v260 = vunpack.c.l.b16 %v169
    %v261 = vunpack.c.h.b16 %v169
    %v262 = vunpack.c.l.b16 %v170
    %v263 = vunpack.c.l.b16 %v171
    %v264 = vunpack.c.h.b16 %v171
    %v265 = vunpack.c.l.b16 %v172
    %v266 = vunpack.c.l.b16 %v173
    %v267 = vunpack.c.h.b16 %v173
    %v268 = vunpack.c.l.b16 %v174
    %v269 = vunpack.c.l.b16 %v175
    %v270 = vunpack.c.h.b16 %v175
    %v271 = vunpack.c.l.b16 %v176
    %v272 = vunpack.c.l.b16 %v177
    %v273 = vunpack.c.h.b16 %v177
    %v274 = vunpack.c.l.b16 %v178
    %v275 = vunpack.c.l.b16 %v179
    %v276 = vunpack.c.h.b16 %v179
    %v277 = vunpack.c.l.b16 %v180
    %v278 = vpack.c.b16 %v233, %v230
    %v279 = vpack.c.b16 %v234, %v231
    %v280 = vpack.c.b16 %v235, %v232
    %v281 = vpack.c.b16 %v239, %v236
    %v282 = vpack.c.b16 %v240, %v237
    %v283 = vpack.c.b16 %v241, %v238
    %v284 = vpack.c.b16 %v245, %v242
    %v285 = vpack.c.b16 %v246, %v243
    %v286 = vpack.c.b16 %v247, %v244
    %v287 = vpack.c.b16 %v251, %v248
    %v288 = vpack.c.b16 %v252, %v249
    %v289 = vpack.c.b16 %v253, %v250
    %v290 = vpack.c.b16 %v257, %v254
    %v291 = vpack.c.b16 %v258, %v255
    %v292 = vpack.c.b16 %v259, %v256
    %v293 = vpack.c.b16 %v263, %v260
    %v294 = vpack.c.b16 %v264, %v261
    %v295 = vpack.c.b16 %v265, %v262
    %v296 = vpack.c.b16 %v269, %v266
    %v297 = vpack.c.b16 %v270, %v267
    %v298 = vpack.c.b16 %v271, %v268
    %v299 = vpack.c.b16 %v275, %v272
    %v300 = vpack.c.b16 %v276, %v273
    %v301 = vpack.c.b16 %v277, %v274
    %326 = vmatprep.subr.bf16.mxu0 %v300
    %327 = vmatpush1.bf16.msra.mxu0 %v299
    %328 = vmatprep.subr.bf16.mxu0 %v297
    %329 = vmatpush1.bf16.msra.mxu0 %v296
    %330 = vmatprep.subr.bf16.mxu0 %v294
    %331 = vmatpush1.bf16.msra.mxu0 %v293
    %332 = vmatprep.subr.bf16.mxu0 %v291
    %333 = vmatpush1.bf16.msra.mxu0 %v290
    %334 = vmatprep.subr.bf16.mxu0 %v288
    %335 = vmatpush1.bf16.msra.mxu0 %v287
    %336 = vmatprep.subr.bf16.mxu0 %v285
    %337 = vmatpush1.bf16.msra.mxu0 %v284
    %338 = vmatprep.subr.bf16.mxu0 %v282
    %339 = vmatpush1.bf16.msra.mxu0 %v281
    %340 = vmatprep.subr.bf16.mxu0 %v279
    %341 = vmatpush1.bf16.msra.mxu0 %v278
    %342 = vmatprep.subr.bf16.mxu0 0
    %343 = vmatpush2.bf16.msra.mxu0 0
    %344 = vmatprep.subr.bf16.mxu0 0
    %345 = vmatpush2.bf16.msra.mxu0 0
    %346 = vmatprep.subr.bf16.mxu0 0
    %347 = vmatpush2.bf16.msra.mxu0 0
    %348 = vmatprep.subr.bf16.mxu0 0
    %349 = vmatpush2.bf16.msra.mxu0 0
    %350 = vmatprep.subr.bf16.mxu0 0
    %351 = vmatpush2.bf16.msra.mxu0 0
    %352 = vmatprep.subr.bf16.mxu0 0
    %353 = vmatpush2.bf16.msra.mxu0 0
    %354 = vmatprep.subr.bf16.mxu0 0
    %355 = vmatpush2.bf16.msra.mxu0 0
    %356 = vmatprep.subr.bf16.mxu0 0
    %357 = vmatpush2.bf16.msra.mxu0 0
    %358 = vmatprep.mubr.bf16.mxu0 0
    %359 = vmatmul.mubr.bf16.gmra.mxu0 %v147
    %v360 = vpop.f32.mrf.mxu0
    %v361 = vadd.f32 %v186, %v360
    %v362 = vpop.f32.mrf.mxu0
    %v363 = vadd.f32 %v190, %v362
    %v364 = vpop.f32.mrf.mxu0
    %v365 = vadd.f32 %v186, %v364
    %v366 = vpop.f32.mrf.mxu0
    %v367 = vadd.f32 %v190, %v366
    %368 = vmatprep.mubr.bf16.mxu0 0
    %369 = vmatmul.mubr.bf16.gmra.mxu0 %v148
    %v370 = vpop.f32.mrf.mxu0
    %v371 = vadd.f32 %v186, %v370
    %v372 = vpop.f32.mrf.mxu0
    %v373 = vadd.f32 %v190, %v372
    %v374 = vpop.f32.mrf.mxu0
    %v375 = vadd.f32 %v186, %v374
    %v376 = vpop.f32.mrf.mxu0
    %v377 = vadd.f32 %v190, %v376
    %378 = vdwg.mxu0
    %379 = vmatprep.subr.bf16.mxu0 0
    %380 = vmatpush1.bf16.msra.mxu0 %v301
    %381 = vmatprep.subr.bf16.mxu0 0
    %382 = vmatpush1.bf16.msra.mxu0 %v298
    %383 = vmatprep.subr.bf16.mxu0 0
    %384 = vmatpush1.bf16.msra.mxu0 %v295
    %385 = vmatprep.subr.bf16.mxu0 0
    %386 = vmatpush1.bf16.msra.mxu0 %v292
    %387 = vmatprep.subr.bf16.mxu0 0
    %388 = vmatpush1.bf16.msra.mxu0 %v289
    %389 = vmatprep.subr.bf16.mxu0 0
    %390 = vmatpush1.bf16.msra.mxu0 %v286
    %391 = vmatprep.subr.bf16.mxu0 0
    %392 = vmatpush1.bf16.msra.mxu0 %v283
    %393 = vmatprep.subr.bf16.mxu0 0
    %394 = vmatpush1.bf16.msra.mxu0 %v280
    %395 = vmatprep.subr.bf16.mxu0 0
    %396 = vmatpush2.bf16.msra.mxu0 0
    %397 = vmatprep.subr.bf16.mxu0 0
    %398 = vmatpush2.bf16.msra.mxu0 0
    %399 = vmatprep.subr.bf16.mxu0 0
    %400 = vmatpush2.bf16.msra.mxu0 0
    %401 = vmatprep.subr.bf16.mxu0 0
    %402 = vmatpush2.bf16.msra.mxu0 0
    %403 = vmatprep.subr.bf16.mxu0 0
    %404 = vmatpush2.bf16.msra.mxu0 0
    %405 = vmatprep.subr.bf16.mxu0 0
    %406 = vmatpush2.bf16.msra.mxu0 0
    %407 = vmatprep.subr.bf16.mxu0 0
    %408 = vmatpush2.bf16.msra.mxu0 0
    %409 = vmatprep.subr.bf16.mxu0 0
    %410 = vmatpush2.bf16.msra.mxu0 0
    %411 = vmatprep.mubr.bf16.mxu0 0
    %412 = vmatmul.mubr.bf16.gmra.mxu0 %v147
    %v413 = vpop.f32.mrf.mxu0
    %v414 = vadd.f32 %v194, %v413
    %v415 = vpop.f32.mrf.mxu0
    %v416 = vpop.f32.mrf.mxu0
    %v417 = vadd.f32 %v194, %v416
    %v418 = vpop.f32.mrf.mxu0
    %419 = vmatprep.mubr.bf16.mxu0 0
    %420 = vmatmul.mubr.bf16.gmra.mxu0 %v148
    %v421 = vpop.f32.mrf.mxu0
    %v422 = vadd.f32 %v194, %v421
    %v423 = vpop.f32.mrf.mxu0
    %v424 = vpop.f32.mrf.mxu0
    %v425 = vadd.f32 %v194, %v424
    %v426 = vpop.f32.mrf.mxu0
    %427 = vdwg.mxu0
    %v428 = vpack.c.bf16 %v365, %v361
    %v429 = vpack.c.bf16 %v367, %v363
    %v430 = vpack.c.bf16 %v417, %v414
    %v431 = vpack.c.bf16 %v375, %v371
    %v432 = vpack.c.bf16 %v377, %v373
    %v433 = vpack.c.bf16 %v425, %v422
    %vm434 = vcmask 523264
    %v436 = vsel %vm434, %v428, 0
    %v439 = vsel %vm434, %v431, 0
    %v442 = vsel %vm434, %v429, 0
    %v445 = vsel %vm434, %v432, 0
    %447 = vmatprep.subr.bf16.mxu0 0
    %448 = vmatpush1.bf16.xpose.msra.mxu0 0
    %449 = vmatprep.subr.bf16.mxu0 0
    %450 = vmatpush1.bf16.xpose.msra.mxu0 0
    %451 = vmatprep.subr.bf16.mxu0 0
    %452 = vmatpush1.bf16.xpose.msra.mxu0 0
    %453 = vmatprep.subr.bf16.mxu0 0
    %454 = vmatpush1.bf16.xpose.msra.mxu0 0
    %455 = vmatprep.subr.bf16.mxu0 0
    %456 = vmatpush1.bf16.xpose.msra.mxu0 0
    %457 = vmatprep.subr.bf16.mxu0 0
    %458 = vmatpush1.bf16.xpose.msra.mxu0 0
    %459 = vmatprep.subr.bf16.mxu0 0
    %460 = vmatpush1.bf16.xpose.msra.mxu0 %v445
    %461 = vmatprep.subr.bf16.mxu0 0
    %462 = vmatpush1.bf16.xpose.msra.mxu0 %v442
    %463 = vmatprep.subr.bf16.mxu0 0
    %464 = vmatpush2.bf16.xpose.msra.mxu0 0
    %465 = vmatprep.subr.bf16.mxu0 0
    %466 = vmatpush2.bf16.xpose.msra.mxu0 0
    %467 = vmatprep.subr.bf16.mxu0 0
    %468 = vmatpush2.bf16.xpose.msra.mxu0 0
    %469 = vmatprep.subr.bf16.mxu0 0
    %470 = vmatpush2.bf16.xpose.msra.mxu0 0
    %471 = vmatprep.subr.bf16.mxu0 0
    %472 = vmatpush2.bf16.xpose.msra.mxu0 0
    %473 = vmatprep.subr.bf16.mxu0 0
    %474 = vmatpush2.bf16.xpose.msra.mxu0 0
    %475 = vmatprep.subr.bf16.mxu0 0
    %476 = vmatpush2.bf16.xpose.msra.mxu0 0
    %477 = vmatprep.subr.bf16.mxu0 0
    %478 = vmatpush2.bf16.xpose.msra.mxu0 0
    %479 = vmatprep.mubr.bf16.mxu0 0
    %480 = vmatmul.mubr.bf16.gmra.mxu0 %v436
    %v481 = vpop.f32.mrf.mxu0
    %v482 = vadd.f32 %v143, %v481
    %v483 = vpop.f32.mrf.mxu0
    %v484 = vpop.f32.mrf.mxu0
    %v485 = vadd.f32 %v144, %v484
    %v486 = vpop.f32.mrf.mxu0
    %487 = vmatprep.mubr.bf16.mxu0 0
    %488 = vmatmul.mubr.bf16.gmra.mxu0 %v439
    %v489 = vpop.f32.mrf.mxu0
    %v490 = vadd.f32 %v145, %v489
    %v491 = vpop.f32.mrf.mxu0
    %v492 = vpop.f32.mrf.mxu0
    %v493 = vadd.f32 %v146, %v492
    %v494 = vpop.f32.mrf.mxu0
    %495 = vdwg.mxu0
    %vm496 = vcmask 261120
    %v497 = vsel %vm496, %v482, -inf
    %498 = vmax.xlane.f32.xlu0 %v497
    %v499 = vpop.xlane.xlu0 %498
    %v500 = vsel %vm496, %v485, -inf
    %501 = vmax.xlane.f32.xlu0 %v500
    %v502 = vpop.xlane.xlu0 %501
    %v503 = vsel %vm496, %v490, -inf
    %504 = vmax.xlane.f32.xlu0 %v503
    %v505 = vpop.xlane.xlu0 %504
    %v506 = vsel %vm496, %v493, -inf
    %507 = vmax.xlane.f32.xlu0 %v506
    %v508 = vpop.xlane.xlu0 %507
    %v509 = vsub.f32 %v482, %v499
    %v510 = vsub.f32 %v485, %v502
    %v511 = vsub.f32 %v490, %v505
    %v512 = vsub.f32 %v493, %v508
    %v513 = vmul.f32 %v509, 1.442695
    %v514 = vpow.pop %v513
    %v515 = vmul.f32 %v510, 1.442695
    %v516 = vpow.pop %v515
    %v517 = vmul.f32 %v511, 1.442695
    %v518 = vpow.pop %v517
    %v519 = vmul.f32 %v512, 1.442695
    %v520 = vpow.pop %v519
    %v521 = vsel %vm496, %v514, 0.0
    %522 = vadd.xlane.f32.xlu0 %v521
    %v523 = vpop.xlane.xlu0 %522
    %v524 = vsel %vm496, %v516, 0.0
    %525 = vadd.xlane.f32.xlu0 %v524
    %v526 = vpop.xlane.xlu0 %525
    %v527 = vsel %vm496, %v518, 0.0
    %528 = vadd.xlane.f32.xlu0 %v527
    %v529 = vpop.xlane.xlu0 %528
    %v530 = vsel %vm496, %v520, 0.0
    %531 = vadd.xlane.f32.xlu0 %v530
    %v532 = vpop.xlane.xlu0 %531
    %v533 = vrcp.pop %v523
    %v534 = vrcp.pop %v526
    %v535 = vrcp.pop %v529
    %v536 = vrcp.pop %v532
    %v537 = vmul.f32 %v514, %v533
    %v538 = vmul.f32 %v516, %v534
    %v539 = vmul.f32 %v518, %v535
    %v540 = vmul.f32 %v520, %v536
    %v541 = vpack.c.bf16 %v538, %v537
    %v542 = vpack.c.bf16 %v540, %v539
    %v544 = vsel %vm496, %v541, 0
    %v547 = vsel %vm496, %v542, 0
    %549 = vmatprep.subr.bf16.mxu0 0
    %550 = vmatpush1.bf16.msra.mxu0 0
    %551 = vmatprep.subr.bf16.mxu0 0
    %552 = vmatpush1.bf16.msra.mxu0 0
    %553 = vmatprep.subr.bf16.mxu0 0
    %554 = vmatpush1.bf16.msra.mxu0 0
    %555 = vmatprep.subr.bf16.mxu0 0
    %556 = vmatpush1.bf16.msra.mxu0 0
    %557 = vmatprep.subr.bf16.mxu0 0
    %558 = vmatpush1.bf16.msra.mxu0 0
    %559 = vmatprep.subr.bf16.mxu0 0
    %560 = vmatpush1.bf16.msra.mxu0 0
    %561 = vmatprep.subr.bf16.mxu0 0
    %562 = vmatpush1.bf16.msra.mxu0 %v433
    %563 = vmatprep.subr.bf16.mxu0 0
    %564 = vmatpush1.bf16.msra.mxu0 %v430
    %565 = vmatprep.subr.bf16.mxu0 0
    %566 = vmatpush2.bf16.msra.mxu0 0
    %567 = vmatprep.subr.bf16.mxu0 0
    %568 = vmatpush2.bf16.msra.mxu0 0
    %569 = vmatprep.subr.bf16.mxu0 0
    %570 = vmatpush2.bf16.msra.mxu0 0
    %571 = vmatprep.subr.bf16.mxu0 0
    %572 = vmatpush2.bf16.msra.mxu0 0
    %573 = vmatprep.subr.bf16.mxu0 0
    %574 = vmatpush2.bf16.msra.mxu0 0
    %575 = vmatprep.subr.bf16.mxu0 0
    %576 = vmatpush2.bf16.msra.mxu0 0
    %577 = vmatprep.subr.bf16.mxu0 0
    %578 = vmatpush2.bf16.msra.mxu0 0
    %579 = vmatprep.subr.bf16.mxu0 0
    %580 = vmatpush2.bf16.msra.mxu0 0
    %581 = vmatprep.mubr.bf16.mxu0 0
    %582 = vmatmul.mubr.bf16.gmra.mxu0 %v544
    %v583 = vpop.f32.mrf.mxu0
    %v584 = vadd.f32 0.0, %v583
    %v585 = vpop.f32.mrf.mxu0
    %v586 = vpop.f32.mrf.mxu0
    %v587 = vadd.f32 0.0, %v586
    %v588 = vpop.f32.mrf.mxu0
    %589 = vmatprep.mubr.bf16.mxu0 0
    %590 = vmatmul.mubr.bf16.gmra.mxu0 %v547
    %v591 = vpop.f32.mrf.mxu0
    %v592 = vadd.f32 0.0, %v591
    %v593 = vpop.f32.mrf.mxu0
    %v594 = vpop.f32.mrf.mxu0
    %v595 = vadd.f32 0.0, %v594
    %v596 = vpop.f32.mrf.mxu0
    %597 = vdwg.mxu0
    %600 = vrot.lane.b32.xlu0 %v428, 64
    %v601 = vpop.permute.xlu0 %600
    %602 = vrot.lane.b32.xlu0 %v431, 64
    %v603 = vpop.permute.xlu0 %602
    %606 = vrot.lane.b32.xlu0 %v429, 64
    %v607 = vpop.permute.xlu0 %606
    %608 = vrot.lane.b32.xlu0 %v432, 64
    %v609 = vpop.permute.xlu0 %608
    %v611 = vsel %vm434, %v601, 0
    %v614 = vsel %vm434, %v603, 0
    %v617 = vsel %vm434, %v607, 0
    %v620 = vsel %vm434, %v609, 0
    %622 = vmatprep.subr.bf16.mxu0 0
    %623 = vmatpush1.bf16.xpose.msra.mxu0 0
    %624 = vmatprep.subr.bf16.mxu0 0
    %625 = vmatpush1.bf16.xpose.msra.mxu0 0
    %626 = vmatprep.subr.bf16.mxu0 0
    %627 = vmatpush1.bf16.xpose.msra.mxu0 0
    %628 = vmatprep.subr.bf16.mxu0 0
    %629 = vmatpush1.bf16.xpose.msra.mxu0 0
    %630 = vmatprep.subr.bf16.mxu0 0
    %631 = vmatpush1.bf16.xpose.msra.mxu0 0
    %632 = vmatprep.subr.bf16.mxu0 0
    %633 = vmatpush1.bf16.xpose.msra.mxu0 0
    %634 = vmatprep.subr.bf16.mxu0 0
    %635 = vmatpush1.bf16.xpose.msra.mxu0 %v620
    %636 = vmatprep.subr.bf16.mxu0 0
    %637 = vmatpush1.bf16.xpose.msra.mxu0 %v617
    %638 = vmatprep.subr.bf16.mxu0 0
    %639 = vmatpush2.bf16.xpose.msra.mxu0 0
    %640 = vmatprep.subr.bf16.mxu0 0
    %641 = vmatpush2.bf16.xpose.msra.mxu0 0
    %642 = vmatprep.subr.bf16.mxu0 0
    %643 = vmatpush2.bf16.xpose.msra.mxu0 0
    %644 = vmatprep.subr.bf16.mxu0 0
    %645 = vmatpush2.bf16.xpose.msra.mxu0 0
    %646 = vmatprep.subr.bf16.mxu0 0
    %647 = vmatpush2.bf16.xpose.msra.mxu0 0
    %648 = vmatprep.subr.bf16.mxu0 0
    %649 = vmatpush2.bf16.xpose.msra.mxu0 0
    %650 = vmatprep.subr.bf16.mxu0 0
    %651 = vmatpush2.bf16.xpose.msra.mxu0 0
    %652 = vmatprep.subr.bf16.mxu0 0
    %653 = vmatpush2.bf16.xpose.msra.mxu0 0
    %654 = vmatprep.mubr.bf16.mxu0 0
    %655 = vmatmul.mubr.bf16.gmra.mxu0 %v611
    %v656 = vpop.f32.mrf.mxu0
    %v657 = vadd.f32 %v143, %v656
    %v658 = vpop.f32.mrf.mxu0
    %v659 = vpop.f32.mrf.mxu0
    %v660 = vadd.f32 %v144, %v659
    %v661 = vpop.f32.mrf.mxu0
    %662 = vmatprep.mubr.bf16.mxu0 0
    %663 = vmatmul.mubr.bf16.gmra.mxu0 %v614
    %v664 = vpop.f32.mrf.mxu0
    %v665 = vadd.f32 %v145, %v664
    %v666 = vpop.f32.mrf.mxu0
    %v667 = vpop.f32.mrf.mxu0
    %v668 = vadd.f32 %v146, %v667
    %v669 = vpop.f32.mrf.mxu0
    %670 = vdwg.mxu0
    %v671 = vsel %vm496, %v657, -inf
    %672 = vmax.xlane.f32.xlu0 %v671
    %v673 = vpop.xlane.xlu0 %672
    %v674 = vsel %vm496, %v660, -inf
    %675 = vmax.xlane.f32.xlu0 %v674
    %v676 = vpop.xlane.xlu0 %675
    %v677 = vsel %vm496, %v665, -inf
    %678 = vmax.xlane.f32.xlu0 %v677
    %v679 = vpop.xlane.xlu0 %678
    %v680 = vsel %vm496, %v668, -inf
    %681 = vmax.xlane.f32.xlu0 %v680
    %v682 = vpop.xlane.xlu0 %681
    %v683 = vsub.f32 %v657, %v673
    %v684 = vsub.f32 %v660, %v676
    %v685 = vsub.f32 %v665, %v679
    %v686 = vsub.f32 %v668, %v682
    %v687 = vmul.f32 %v683, 1.442695
    %v688 = vpow.pop %v687
    %v689 = vmul.f32 %v684, 1.442695
    %v690 = vpow.pop %v689
    %v691 = vmul.f32 %v685, 1.442695
    %v692 = vpow.pop %v691
    %v693 = vmul.f32 %v686, 1.442695
    %v694 = vpow.pop %v693
    %v695 = vsel %vm496, %v688, 0.0
    %696 = vadd.xlane.f32.xlu0 %v695
    %v697 = vpop.xlane.xlu0 %696
    %v698 = vsel %vm496, %v690, 0.0
    %699 = vadd.xlane.f32.xlu0 %v698
    %v700 = vpop.xlane.xlu0 %699
    %v701 = vsel %vm496, %v692, 0.0
    %702 = vadd.xlane.f32.xlu0 %v701
    %v703 = vpop.xlane.xlu0 %702
    %v704 = vsel %vm496, %v694, 0.0
    %705 = vadd.xlane.f32.xlu0 %v704
    %v706 = vpop.xlane.xlu0 %705
    %v707 = vrcp.pop %v697
    %v708 = vrcp.pop %v700
    %v709 = vrcp.pop %v703
    %v710 = vrcp.pop %v706
    %v711 = vmul.f32 %v688, %v707
    %v712 = vmul.f32 %v690, %v708
    %v713 = vmul.f32 %v692, %v709
    %v714 = vmul.f32 %v694, %v710
    %v715 = vpack.c.bf16 %v712, %v711
    %v716 = vpack.c.bf16 %v714, %v713
    %719 = vrot.lane.b32.xlu0 %v430, 64
    %v720 = vpop.permute.xlu0 %719
    %721 = vrot.lane.b32.xlu0 %v433, 64
    %v722 = vpop.permute.xlu0 %721
    %v726 = vsel %vm496, %v715, 0
    %v729 = vsel %vm496, %v716, 0
    %731 = vmatprep.subr.bf16.mxu0 0
    %732 = vmatpush1.bf16.msra.mxu0 0
    %733 = vmatprep.subr.bf16.mxu0 0
    %734 = vmatpush1.bf16.msra.mxu0 0
    %735 = vmatprep.subr.bf16.mxu0 0
    %736 = vmatpush1.bf16.msra.mxu0 0
    %737 = vmatprep.subr.bf16.mxu0 0
    %738 = vmatpush1.bf16.msra.mxu0 0
    %739 = vmatprep.subr.bf16.mxu0 0
    %740 = vmatpush1.bf16.msra.mxu0 0
    %741 = vmatprep.subr.bf16.mxu0 0
    %742 = vmatpush1.bf16.msra.mxu0 0
    %743 = vmatprep.subr.bf16.mxu0 0
    %744 = vmatpush1.bf16.msra.mxu0 %v722
    %745 = vmatprep.subr.bf16.mxu0 0
    %746 = vmatpush1.bf16.msra.mxu0 %v720
    %747 = vmatprep.subr.bf16.mxu0 0
    %748 = vmatpush2.bf16.msra.mxu0 0
    %749 = vmatprep.subr.bf16.mxu0 0
    %750 = vmatpush2.bf16.msra.mxu0 0
    %751 = vmatprep.subr.bf16.mxu0 0
    %752 = vmatpush2.bf16.msra.mxu0 0
    %753 = vmatprep.subr.bf16.mxu0 0
    %754 = vmatpush2.bf16.msra.mxu0 0
    %755 = vmatprep.subr.bf16.mxu0 0
    %756 = vmatpush2.bf16.msra.mxu0 0
    %757 = vmatprep.subr.bf16.mxu0 0
    %758 = vmatpush2.bf16.msra.mxu0 0
    %759 = vmatprep.subr.bf16.mxu0 0
    %760 = vmatpush2.bf16.msra.mxu0 0
    %761 = vmatprep.subr.bf16.mxu0 0
    %762 = vmatpush2.bf16.msra.mxu0 0
    %763 = vmatprep.mubr.bf16.mxu0 0
    %764 = vmatmul.mubr.bf16.gmra.mxu0 %v726
    %v765 = vpop.f32.mrf.mxu0
    %v766 = vadd.f32 0.0, %v765
    %v767 = vpop.f32.mrf.mxu0
    %v768 = vpop.f32.mrf.mxu0
    %v769 = vadd.f32 0.0, %v768
    %v770 = vpop.f32.mrf.mxu0
    %771 = vmatprep.mubr.bf16.mxu0 0
    %772 = vmatmul.mubr.bf16.gmra.mxu0 %v729
    %v773 = vpop.f32.mrf.mxu0
    %v774 = vadd.f32 0.0, %v773
    %v775 = vpop.f32.mrf.mxu0
    %v776 = vpop.f32.mrf.mxu0
    %v777 = vadd.f32 0.0, %v776
    %v778 = vpop.f32.mrf.mxu0
    %779 = vdwg.mxu0
    %784 = vrot.lane.b32.xlu0 %v766, 64
    %v785 = vpop.permute.xlu0 %784
    %786 = vrot.lane.b32.xlu0 %v769, 64
    %v787 = vpop.permute.xlu0 %786
    %788 = vrot.lane.b32.xlu0 %v774, 64
    %v789 = vpop.permute.xlu0 %788
    %790 = vrot.lane.b32.xlu0 %v777, 64
    %v791 = vpop.permute.xlu0 %790
    %v796 = vsel %vm434, %v584, %v785
    %v797 = vsel %vm434, %v587, %v787
    %v798 = vsel %vm434, %v592, %v789
    %v799 = vsel %vm434, %v595, %v791
    %v800 = vpack.c.bf16 %v797, %v796
    %v801 = vpack.c.bf16 %v799, %v798
    %v802 = vld [vmem:[%s6] sm:$0xf]
    %v803 = vld [vmem:[%s6 + $0x4] sm:$0xf]
    %v804 = vld [vmem:[%s6 + $0x8] sm:$0xf]
    %v805 = vld [vmem:[%s6 + $0xc] sm:$0xf]
    %v806 = vld [vmem:[%s6 + $0x10] sm:$0xf]
    %v807 = vld [vmem:[%s6 + $0x14] sm:$0xf]
    %v808 = vld [vmem:[%s6 + $0x18] sm:$0xf]
    %v809 = vld [vmem:[%s6 + $0x1c] sm:$0xf]
    %v810 = vld [vmem:[%s6 + $0x20] sm:$0xf]
    %v811 = vld [vmem:[%s6 + $0x24] sm:$0xf]
    %v812 = vld [vmem:[%s6 + $0x28] sm:$0xf]
    %v813 = vld [vmem:[%s6 + $0x2c] sm:$0xf]
    %v814 = vld [vmem:[%s6 + $0x30] sm:$0xf]
    %v815 = vld [vmem:[%s6 + $0x34] sm:$0xf]
    %v816 = vld [vmem:[%s6 + $0x38] sm:$0xf]
    %v817 = vld [vmem:[%s6 + $0x3c] sm:$0xf]
    %v818 = vld [vmem:[%s7] sm:$0x1]
    %v820 = vlaneseq
    %v821 = vshrl.u32 %v820, 7
    %v822 = vsub.s32 0, %v821
    %v823 = vrot.slane %v818, %v822
    %v841 = vunpack.c.l.b16 %v802
    %v842 = vunpack.c.l.b16 %v803
    %v843 = vunpack.c.l.b16 %v804
    %v844 = vunpack.c.l.b16 %v805
    %v845 = vunpack.c.l.b16 %v806
    %v846 = vunpack.c.l.b16 %v807
    %v847 = vunpack.c.l.b16 %v808
    %v848 = vunpack.c.l.b16 %v809
    %v849 = vunpack.c.l.b16 %v810
    %v850 = vunpack.c.l.b16 %v811
    %v851 = vunpack.c.l.b16 %v812
    %v852 = vunpack.c.l.b16 %v813
    %v853 = vunpack.c.l.b16 %v814
    %v854 = vunpack.c.l.b16 %v815
    %v855 = vunpack.c.l.b16 %v816
    %v856 = vunpack.c.l.b16 %v817
    %v857 = vpack.c.b16 %v842, %v841
    %v858 = vpack.c.b16 %v844, %v843
    %v859 = vpack.c.b16 %v846, %v845
    %v860 = vpack.c.b16 %v848, %v847
    %v861 = vpack.c.b16 %v850, %v849
    %v862 = vpack.c.b16 %v852, %v851
    %v863 = vpack.c.b16 %v854, %v853
    %v864 = vpack.c.b16 %v856, %v855
    %873 = vmatprep.subr.bf16.mxu0 0
    %874 = vmatpush1.bf16.msra.mxu0 %v864
    %875 = vmatprep.subr.bf16.mxu0 0
    %876 = vmatpush1.bf16.msra.mxu0 %v863
    %877 = vmatprep.subr.bf16.mxu0 0
    %878 = vmatpush1.bf16.msra.mxu0 %v862
    %879 = vmatprep.subr.bf16.mxu0 0
    %880 = vmatpush1.bf16.msra.mxu0 %v861
    %881 = vmatprep.subr.bf16.mxu0 0
    %882 = vmatpush1.bf16.msra.mxu0 %v860
    %883 = vmatprep.subr.bf16.mxu0 0
    %884 = vmatpush1.bf16.msra.mxu0 %v859
    %885 = vmatprep.subr.bf16.mxu0 0
    %886 = vmatpush1.bf16.msra.mxu0 %v858
    %887 = vmatprep.subr.bf16.mxu0 0
    %888 = vmatpush1.bf16.msra.mxu0 %v857
    %889 = vmatprep.subr.bf16.mxu0 0
    %890 = vmatpush2.bf16.msra.mxu0 0
    %891 = vmatprep.subr.bf16.mxu0 0
    %892 = vmatpush2.bf16.msra.mxu0 0
    %893 = vmatprep.subr.bf16.mxu0 0
    %894 = vmatpush2.bf16.msra.mxu0 0
    %895 = vmatprep.subr.bf16.mxu0 0
    %896 = vmatpush2.bf16.msra.mxu0 0
    %897 = vmatprep.subr.bf16.mxu0 0
    %898 = vmatpush2.bf16.msra.mxu0 0
    %899 = vmatprep.subr.bf16.mxu0 0
    %900 = vmatpush2.bf16.msra.mxu0 0
    %901 = vmatprep.subr.bf16.mxu0 0
    %902 = vmatpush2.bf16.msra.mxu0 0
    %903 = vmatprep.subr.bf16.mxu0 0
    %904 = vmatpush2.bf16.msra.mxu0 0
    %905 = vmatprep.mubr.bf16.mxu0 0
    %906 = vmatmul.mubr.bf16.gmra.mxu0 %v800
    %v907 = vpop.f32.mrf.mxu0
    %v908 = vadd.f32 %v823, %v907
    %v909 = vpop.f32.mrf.mxu0
    %v910 = vpop.f32.mrf.mxu0
    %v911 = vadd.f32 %v823, %v910
    %v912 = vpop.f32.mrf.mxu0
    %913 = vmatprep.mubr.bf16.mxu0 0
    %914 = vmatmul.mubr.bf16.gmra.mxu0 %v801
    %v915 = vpop.f32.mrf.mxu0
    %v916 = vadd.f32 %v823, %v915
    %v917 = vpop.f32.mrf.mxu0
    %v918 = vpop.f32.mrf.mxu0
    %v919 = vadd.f32 %v823, %v918
    %v920 = vpop.f32.mrf.mxu0
    %921 = vdwg.mxu0
    %v922 = vld [vmem:[%s8] sm:$0x3]
    %v923 = vadd.f32 %v139, %v908
    %v924 = vadd.f32 %v140, %v911
    %v925 = vadd.f32 %v141, %v916
    %v926 = vadd.f32 %v142, %v919
    %927 = vadd.xlane.f32.xlu0 %v923
    %v928 = vpop.xlane.xlu0 %927
    %929 = vadd.xlane.f32.xlu0 %v924
    %v930 = vpop.xlane.xlu0 %929
    %931 = vadd.xlane.f32.xlu0 %v925
    %v932 = vpop.xlane.xlu0 %931
    %933 = vadd.xlane.f32.xlu0 %v926
    %v934 = vpop.xlane.xlu0 %933
    %v935 = vmul.f32 %v928, %v90
    %v936 = vmul.f32 %v930, %v90
    %v937 = vmul.f32 %v932, %v90
    %v938 = vmul.f32 %v934, %v90
    %v939 = vsub.f32 %v923, %v935
    %v940 = vsub.f32 %v924, %v936
    %v941 = vsub.f32 %v925, %v937
    %v942 = vsub.f32 %v926, %v938
    %v943 = vmul.f32 %v939, %v939
    %v944 = vmul.f32 %v940, %v940
    %v945 = vmul.f32 %v941, %v941
    %v946 = vmul.f32 %v942, %v942
    %947 = vadd.xlane.f32.xlu0 %v943
    %v948 = vpop.xlane.xlu0 %947
    %949 = vadd.xlane.f32.xlu0 %v944
    %v950 = vpop.xlane.xlu0 %949
    %951 = vadd.xlane.f32.xlu0 %v945
    %v952 = vpop.xlane.xlu0 %951
    %953 = vadd.xlane.f32.xlu0 %v946
    %v954 = vpop.xlane.xlu0 %953
    %v955 = vmul.f32 %v948, %v90
    %v956 = vmul.f32 %v950, %v90
    %v957 = vmul.f32 %v952, %v90
    %v958 = vmul.f32 %v954, %v90
    %v959 = vadd.f32 %v955, 1e-12
    %v960 = vadd.f32 %v956, 1e-12
    %v961 = vadd.f32 %v957, 1e-12
    %v962 = vadd.f32 %v958, 1e-12
    %v963 = vrsqrt.pop %v959
    %v964 = vrsqrt.pop %v960
    %v965 = vrsqrt.pop %v961
    %v966 = vrsqrt.pop %v962
    %v967 = vmul.f32 %v939, %v963
    %v968 = vmul.f32 %v940, %v964
    %v969 = vmul.f32 %v941, %v965
    %v970 = vmul.f32 %v942, %v966
    %v971 = vlaneseq
    %v972 = vshrl.u32 %v971, 7
    %v973 = vsub.s32 0, %v972
    %v974 = vrot.slane %v922, %v973
    %v975 = vmul.f32 %v967, %v974
    %v976 = vmul.f32 %v968, %v974
    %v977 = vmul.f32 %v969, %v974
    %v978 = vmul.f32 %v970, %v974
    %v979 = vlaneseq
    %v980 = vshrl.u32 %v979, 7
    %v981 = vsub.s32 1, %v980
    %v982 = vrot.slane %v922, %v981
    %v983 = vadd.f32 %v975, %v982
    %v984 = vadd.f32 %v976, %v982
    %v985 = vadd.f32 %v977, %v982
    %v986 = vadd.f32 %v978, %v982
    %v987 = vpack.c.bf16 %v984, %v983
    %v988 = vpack.c.bf16 %v986, %v985
    %v989 = vld [vmem:[#allocation2] sm:$0xff]
    %v990 = vld [vmem:[#allocation2 + $0x8] sm:$0xff]
    %v991 = vld [vmem:[#allocation2 + $0x10] sm:$0xff]
    %v992 = vld [vmem:[#allocation2 + $0x18] sm:$0xff]
    %v993 = vld [vmem:[#allocation2 + $0x20] sm:$0xff]
    %v994 = vld [vmem:[#allocation2 + $0x28] sm:$0xff]
    %v995 = vld [vmem:[#allocation2 + $0x30] sm:$0xff]
    %v996 = vld [vmem:[#allocation2 + $0x38] sm:$0xff]
    %v997 = vld [vmem:[#allocation2 + $0x40] sm:$0xff]
    %v998 = vld [vmem:[#allocation2 + $0x48] sm:$0xff]
    %v999 = vld [vmem:[#allocation2 + $0x50] sm:$0xff]
    %v1000 = vld [vmem:[#allocation2 + $0x58] sm:$0xff]
    %v1001 = vld [vmem:[#allocation2 + $0x60] sm:$0xff]
    %v1002 = vld [vmem:[#allocation2 + $0x68] sm:$0xff]
    %v1003 = vld [vmem:[#allocation2 + $0x70] sm:$0xff]
    %v1004 = vld [vmem:[#allocation2 + $0x78] sm:$0xff]
    %v1005 = vld [vmem:[%s10] sm:$0x3]
    %v1007 = vlaneseq
    %v1008 = vshrl.u32 %v1007, 7
    %v1009 = vsub.s32 0, %v1008
    %v1010 = vrot.slane %v1005, %v1009
    %v1011 = vlaneseq
    %v1012 = vshrl.u32 %v1011, 7
    %v1013 = vsub.s32 1, %v1012
    %v1014 = vrot.slane %v1005, %v1013
    %v1033 = vunpack.c.l.b16 %v989
    %v1034 = vunpack.c.h.b16 %v989
    %v1035 = vunpack.c.l.b16 %v990
    %v1036 = vunpack.c.h.b16 %v990
    %v1037 = vunpack.c.l.b16 %v991
    %v1038 = vunpack.c.h.b16 %v991
    %v1039 = vunpack.c.l.b16 %v992
    %v1040 = vunpack.c.h.b16 %v992
    %v1041 = vunpack.c.l.b16 %v993
    %v1042 = vunpack.c.h.b16 %v993
    %v1043 = vunpack.c.l.b16 %v994
    %v1044 = vunpack.c.h.b16 %v994
    %v1045 = vunpack.c.l.b16 %v995
    %v1046 = vunpack.c.h.b16 %v995
    %v1047 = vunpack.c.l.b16 %v996
    %v1048 = vunpack.c.h.b16 %v996
    %v1049 = vunpack.c.l.b16 %v997
    %v1050 = vunpack.c.h.b16 %v997
    %v1051 = vunpack.c.l.b16 %v998
    %v1052 = vunpack.c.h.b16 %v998
    %v1053 = vunpack.c.l.b16 %v999
    %v1054 = vunpack.c.h.b16 %v999
    %v1055 = vunpack.c.l.b16 %v1000
    %v1056 = vunpack.c.h.b16 %v1000
    %v1057 = vunpack.c.l.b16 %v1001
    %v1058 = vunpack.c.h.b16 %v1001
    %v1059 = vunpack.c.l.b16 %v1002
    %v1060 = vunpack.c.h.b16 %v1002
    %v1061 = vunpack.c.l.b16 %v1003
    %v1062 = vunpack.c.h.b16 %v1003
    %v1063 = vunpack.c.l.b16 %v1004
    %v1064 = vunpack.c.h.b16 %v1004
    %v1065 = vpack.c.b16 %v1035, %v1033
    %v1066 = vpack.c.b16 %v1036, %v1034
    %v1067 = vpack.c.b16 %v1039, %v1037
    %v1068 = vpack.c.b16 %v1040, %v1038
    %v1069 = vpack.c.b16 %v1043, %v1041
    %v1070 = vpack.c.b16 %v1044, %v1042
    %v1071 = vpack.c.b16 %v1047, %v1045
    %v1072 = vpack.c.b16 %v1048, %v1046
    %v1073 = vpack.c.b16 %v1051, %v1049
    %v1074 = vpack.c.b16 %v1052, %v1050
    %v1075 = vpack.c.b16 %v1055, %v1053
    %v1076 = vpack.c.b16 %v1056, %v1054
    %v1077 = vpack.c.b16 %v1059, %v1057
    %v1078 = vpack.c.b16 %v1060, %v1058
    %v1079 = vpack.c.b16 %v1063, %v1061
    %v1080 = vpack.c.b16 %v1064, %v1062
    %1097 = vmatprep.subr.bf16.mxu0 %v1080
    %1098 = vmatpush1.bf16.msra.mxu0 %v1079
    %1099 = vmatprep.subr.bf16.mxu0 %v1078
    %1100 = vmatpush1.bf16.msra.mxu0 %v1077
    %1101 = vmatprep.subr.bf16.mxu0 %v1076
    %1102 = vmatpush1.bf16.msra.mxu0 %v1075
    %1103 = vmatprep.subr.bf16.mxu0 %v1074
    %1104 = vmatpush1.bf16.msra.mxu0 %v1073
    %1105 = vmatprep.subr.bf16.mxu0 %v1072
    %1106 = vmatpush1.bf16.msra.mxu0 %v1071
    %1107 = vmatprep.subr.bf16.mxu0 %v1070
    %1108 = vmatpush1.bf16.msra.mxu0 %v1069
    %1109 = vmatprep.subr.bf16.mxu0 %v1068
    %1110 = vmatpush1.bf16.msra.mxu0 %v1067
    %1111 = vmatprep.subr.bf16.mxu0 %v1066
    %1112 = vmatpush1.bf16.msra.mxu0 %v1065
    %1113 = vmatprep.subr.bf16.mxu0 0
    %1114 = vmatpush2.bf16.msra.mxu0 0
    %1115 = vmatprep.subr.bf16.mxu0 0
    %1116 = vmatpush2.bf16.msra.mxu0 0
    %1117 = vmatprep.subr.bf16.mxu0 0
    %1118 = vmatpush2.bf16.msra.mxu0 0
    %1119 = vmatprep.subr.bf16.mxu0 0
    %1120 = vmatpush2.bf16.msra.mxu0 0
    %1121 = vmatprep.subr.bf16.mxu0 0
    %1122 = vmatpush2.bf16.msra.mxu0 0
    %1123 = vmatprep.subr.bf16.mxu0 0
    %1124 = vmatpush2.bf16.msra.mxu0 0
    %1125 = vmatprep.subr.bf16.mxu0 0
    %1126 = vmatpush2.bf16.msra.mxu0 0
    %1127 = vmatprep.subr.bf16.mxu0 0
    %1128 = vmatpush2.bf16.msra.mxu0 0
    %1129 = vmatprep.mubr.bf16.mxu0 0
    %1130 = vmatmul.mubr.bf16.gmra.mxu0 %v987
    %v1131 = vpop.f32.mrf.mxu0
    %v1132 = vadd.f32 %v1010, %v1131
    %v1133 = vpop.f32.mrf.mxu0
    %v1134 = vadd.f32 %v1014, %v1133
    %v1135 = vpop.f32.mrf.mxu0
    %v1136 = vadd.f32 %v1010, %v1135
    %v1137 = vpop.f32.mrf.mxu0
    %v1138 = vadd.f32 %v1014, %v1137
    %1139 = vmatprep.mubr.bf16.mxu0 0
    %1140 = vmatmul.mubr.bf16.gmra.mxu0 %v988
    %v1141 = vpop.f32.mrf.mxu0
    %v1142 = vadd.f32 %v1010, %v1141
    %v1143 = vpop.f32.mrf.mxu0
    %v1144 = vadd.f32 %v1014, %v1143
    %v1145 = vpop.f32.mrf.mxu0
    %v1146 = vadd.f32 %v1010, %v1145
    %v1147 = vpop.f32.mrf.mxu0
    %v1148 = vadd.f32 %v1014, %v1147
    %1149 = vdwg.mxu0
    %v1150 = vmul.f32 %v1132, %v1132
    %v1151 = vmul.f32 %v1134, %v1134
    %v1152 = vmul.f32 %v1136, %v1136
    %v1153 = vmul.f32 %v1138, %v1138
    %v1154 = vmul.f32 %v1142, %v1142
    %v1155 = vmul.f32 %v1144, %v1144
    %v1156 = vmul.f32 %v1146, %v1146
    %v1157 = vmul.f32 %v1148, %v1148
    %v1158 = vmul.f32 %v1132, %v1150
    %v1159 = vmul.f32 %v1134, %v1151
    %v1160 = vmul.f32 %v1136, %v1152
    %v1161 = vmul.f32 %v1138, %v1153
    %v1162 = vmul.f32 %v1142, %v1154
    %v1163 = vmul.f32 %v1144, %v1155
    %v1164 = vmul.f32 %v1146, %v1156
    %v1165 = vmul.f32 %v1148, %v1157
    %v1166 = vmul.f32 %v1158, 0.044715
    %v1167 = vmul.f32 %v1159, 0.044715
    %v1168 = vmul.f32 %v1160, 0.044715
    %v1169 = vmul.f32 %v1161, 0.044715
    %v1170 = vmul.f32 %v1162, 0.044715
    %v1171 = vmul.f32 %v1163, 0.044715
    %v1172 = vmul.f32 %v1164, 0.044715
    %v1173 = vmul.f32 %v1165, 0.044715
    %v1174 = vadd.f32 %v1132, %v1166
    %v1175 = vadd.f32 %v1134, %v1167
    %v1176 = vadd.f32 %v1136, %v1168
    %v1177 = vadd.f32 %v1138, %v1169
    %v1178 = vadd.f32 %v1142, %v1170
    %v1179 = vadd.f32 %v1144, %v1171
    %v1180 = vadd.f32 %v1146, %v1172
    %v1181 = vadd.f32 %v1148, %v1173
    %v1182 = vmul.f32 %v1174, 0.7978846
    %v1183 = vmul.f32 %v1175, 0.7978846
    %v1184 = vmul.f32 %v1176, 0.7978846
    %v1185 = vmul.f32 %v1177, 0.7978846
    %v1186 = vmul.f32 %v1178, 0.7978846
    %v1187 = vmul.f32 %v1179, 0.7978846
    %v1188 = vmul.f32 %v1180, 0.7978846
    %v1189 = vmul.f32 %v1181, 0.7978846
    %v1190 = vtanh.pop %v1182
    %v1191 = vtanh.pop %v1183
    %v1192 = vtanh.pop %v1184
    %v1193 = vtanh.pop %v1185
    %v1194 = vtanh.pop %v1186
    %v1195 = vtanh.pop %v1187
    %v1196 = vtanh.pop %v1188
    %v1197 = vtanh.pop %v1189
    %v1198 = vadd.f32 %v1190, 1.0
    %v1199 = vadd.f32 %v1191, 1.0
    %v1200 = vadd.f32 %v1192, 1.0
    %v1201 = vadd.f32 %v1193, 1.0
    %v1202 = vadd.f32 %v1194, 1.0
    %v1203 = vadd.f32 %v1195, 1.0
    %v1204 = vadd.f32 %v1196, 1.0
    %v1205 = vadd.f32 %v1197, 1.0
    %v1206 = vmul.f32 %v1198, 0.5
    %v1207 = vmul.f32 %v1199, 0.5
    %v1208 = vmul.f32 %v1200, 0.5
    %v1209 = vmul.f32 %v1201, 0.5
    %v1210 = vmul.f32 %v1202, 0.5
    %v1211 = vmul.f32 %v1203, 0.5
    %v1212 = vmul.f32 %v1204, 0.5
    %v1213 = vmul.f32 %v1205, 0.5
    %v1214 = vmul.f32 %v1132, %v1206
    %v1215 = vmul.f32 %v1134, %v1207
    %v1216 = vmul.f32 %v1136, %v1208
    %v1217 = vmul.f32 %v1138, %v1209
    %v1218 = vmul.f32 %v1142, %v1210
    %v1219 = vmul.f32 %v1144, %v1211
    %v1220 = vmul.f32 %v1146, %v1212
    %v1221 = vmul.f32 %v1148, %v1213
    %v1222 = vpack.c.bf16 %v1216, %v1214
    %v1223 = vpack.c.bf16 %v1217, %v1215
    %v1224 = vpack.c.bf16 %v1220, %v1218
    %v1225 = vpack.c.bf16 %v1221, %v1219
    %v1226 = vld [vmem:[#allocation5] sm:$0xf]
    %v1227 = vld [vmem:[#allocation5 + $0x4] sm:$0xf]
    %v1228 = vld [vmem:[#allocation5 + $0x8] sm:$0xf]
    %v1229 = vld [vmem:[#allocation5 + $0xc] sm:$0xf]
    %v1230 = vld [vmem:[#allocation5 + $0x10] sm:$0xf]
    %v1231 = vld [vmem:[#allocation5 + $0x14] sm:$0xf]
    %v1232 = vld [vmem:[#allocation5 + $0x18] sm:$0xf]
    %v1233 = vld [vmem:[#allocation5 + $0x1c] sm:$0xf]
    %v1234 = vld [vmem:[#allocation5 + $0x20] sm:$0xf]
    %v1235 = vld [vmem:[#allocation5 + $0x24] sm:$0xf]
    %v1236 = vld [vmem:[#allocation5 + $0x28] sm:$0xf]
    %v1237 = vld [vmem:[#allocation5 + $0x2c] sm:$0xf]
    %v1238 = vld [vmem:[#allocation5 + $0x30] sm:$0xf]
    %v1239 = vld [vmem:[#allocation5 + $0x34] sm:$0xf]
    %v1240 = vld [vmem:[#allocation5 + $0x38] sm:$0xf]
    %v1241 = vld [vmem:[#allocation5 + $0x3c] sm:$0xf]
    %v1242 = vld [vmem:[#allocation5 + $0x40] sm:$0xf]
    %v1243 = vld [vmem:[#allocation5 + $0x44] sm:$0xf]
    %v1244 = vld [vmem:[#allocation5 + $0x48] sm:$0xf]
    %v1245 = vld [vmem:[#allocation5 + $0x4c] sm:$0xf]
    %v1246 = vld [vmem:[#allocation5 + $0x50] sm:$0xf]
    %v1247 = vld [vmem:[#allocation5 + $0x54] sm:$0xf]
    %v1248 = vld [vmem:[#allocation5 + $0x58] sm:$0xf]
    %v1249 = vld [vmem:[#allocation5 + $0x5c] sm:$0xf]
    %v1250 = vld [vmem:[#allocation5 + $0x60] sm:$0xf]
    %v1251 = vld [vmem:[#allocation5 + $0x64] sm:$0xf]
    %v1252 = vld [vmem:[#allocation5 + $0x68] sm:$0xf]
    %v1253 = vld [vmem:[#allocation5 + $0x6c] sm:$0xf]
    %v1254 = vld [vmem:[#allocation5 + $0x70] sm:$0xf]
    %v1255 = vld [vmem:[#allocation5 + $0x74] sm:$0xf]
    %v1256 = vld [vmem:[#allocation5 + $0x78] sm:$0xf]
    %v1257 = vld [vmem:[#allocation5 + $0x7c] sm:$0xf]
    %v1258 = vld [vmem:[%s12] sm:$0x1]
    %v1260 = vlaneseq
    %v1261 = vshrl.u32 %v1260, 7
    %v1262 = vsub.s32 0, %v1261
    %v1263 = vrot.slane %v1258, %v1262
    %v1297 = vunpack.c.l.b16 %v1226
    %v1298 = vunpack.c.l.b16 %v1227
    %v1299 = vunpack.c.l.b16 %v1228
    %v1300 = vunpack.c.l.b16 %v1229
    %v1301 = vunpack.c.l.b16 %v1230
    %v1302 = vunpack.c.l.b16 %v1231
    %v1303 = vunpack.c.l.b16 %v1232
    %v1304 = vunpack.c.l.b16 %v1233
    %v1305 = vunpack.c.l.b16 %v1234
    %v1306 = vunpack.c.l.b16 %v1235
    %v1307 = vunpack.c.l.b16 %v1236
    %v1308 = vunpack.c.l.b16 %v1237
    %v1309 = vunpack.c.l.b16 %v1238
    %v1310 = vunpack.c.l.b16 %v1239
    %v1311 = vunpack.c.l.b16 %v1240
    %v1312 = vunpack.c.l.b16 %v1241
    %v1313 = vunpack.c.l.b16 %v1242
    %v1314 = vunpack.c.l.b16 %v1243
    %v1315 = vunpack.c.l.b16 %v1244
    %v1316 = vunpack.c.l.b16 %v1245
    %v1317 = vunpack.c.l.b16 %v1246
    %v1318 = vunpack.c.l.b16 %v1247
    %v1319 = vunpack.c.l.b16 %v1248
    %v1320 = vunpack.c.l.b16 %v1249
    %v1321 = vunpack.c.l.b16 %v1250
    %v1322 = vunpack.c.l.b16 %v1251
    %v1323 = vunpack.c.l.b16 %v1252
    %v1324 = vunpack.c.l.b16 %v1253
    %v1325 = vunpack.c.l.b16 %v1254
    %v1326 = vunpack.c.l.b16 %v1255
    %v1327 = vunpack.c.l.b16 %v1256
    %v1328 = vunpack.c.l.b16 %v1257
    %v1329 = vpack.c.b16 %v1298, %v1297
    %v1330 = vpack.c.b16 %v1300, %v1299
    %v1331 = vpack.c.b16 %v1302, %v1301
    %v1332 = vpack.c.b16 %v1304, %v1303
    %v1333 = vpack.c.b16 %v1306, %v1305
    %v1334 = vpack.c.b16 %v1308, %v1307
    %v1335 = vpack.c.b16 %v1310, %v1309
    %v1336 = vpack.c.b16 %v1312, %v1311
    %v1337 = vpack.c.b16 %v1314, %v1313
    %v1338 = vpack.c.b16 %v1316, %v1315
    %v1339 = vpack.c.b16 %v1318, %v1317
    %v1340 = vpack.c.b16 %v1320, %v1319
    %v1341 = vpack.c.b16 %v1322, %v1321
    %v1342 = vpack.c.b16 %v1324, %v1323
    %v1343 = vpack.c.b16 %v1326, %v1325
    %v1344 = vpack.c.b16 %v1328, %v1327
    %1361 = vmatprep.subr.bf16.mxu0 0
    %1362 = vmatpush1.bf16.msra.mxu0 %v1336
    %1363 = vmatprep.subr.bf16.mxu0 0
    %1364 = vmatpush1.bf16.msra.mxu0 %v1335
    %1365 = vmatprep.subr.bf16.mxu0 0
    %1366 = vmatpush1.bf16.msra.mxu0 %v1334
    %1367 = vmatprep.subr.bf16.mxu0 0
    %1368 = vmatpush1.bf16.msra.mxu0 %v1333
    %1369 = vmatprep.subr.bf16.mxu0 0
    %1370 = vmatpush1.bf16.msra.mxu0 %v1332
    %1371 = vmatprep.subr.bf16.mxu0 0
    %1372 = vmatpush1.bf16.msra.mxu0 %v1331
    %1373 = vmatprep.subr.bf16.mxu0 0
    %1374 = vmatpush1.bf16.msra.mxu0 %v1330
    %1375 = vmatprep.subr.bf16.mxu0 0
    %1376 = vmatpush1.bf16.msra.mxu0 %v1329
    %1377 = vmatprep.subr.bf16.mxu0 0
    %1378 = vmatpush2.bf16.msra.mxu0 %v1344
    %1379 = vmatprep.subr.bf16.mxu0 0
    %1380 = vmatpush2.bf16.msra.mxu0 %v1343
    %1381 = vmatprep.subr.bf16.mxu0 0
    %1382 = vmatpush2.bf16.msra.mxu0 %v1342
    %1383 = vmatprep.subr.bf16.mxu0 0
    %1384 = vmatpush2.bf16.msra.mxu0 %v1341
    %1385 = vmatprep.subr.bf16.mxu0 0
    %1386 = vmatpush2.bf16.msra.mxu0 %v1340
    %1387 = vmatprep.subr.bf16.mxu0 0
    %1388 = vmatpush2.bf16.msra.mxu0 %v1339
    %1389 = vmatprep.subr.bf16.mxu0 0
    %1390 = vmatpush2.bf16.msra.mxu0 %v1338
    %1391 = vmatprep.subr.bf16.mxu0 0
    %1392 = vmatpush2.bf16.msra.mxu0 %v1337
    %1393 = vmatprep.mubr.bf16.mxu0 %v1223
    %1394 = vmatmul.mubr.bf16.gmra.mxu0 %v1222
    %v1395 = vpop.f32.mrf.mxu0
    %v1396 = vadd.f32 %v1263, %v1395
    %v1397 = vpop.f32.mrf.mxu0
    %v1398 = vpop.f32.mrf.mxu0
    %v1399 = vadd.f32 %v1263, %v1398
    %v1400 = vpop.f32.mrf.mxu0
    %1401 = vmatprep.mubr.bf16.mxu0 %v1225
    %1402 = vmatmul.mubr.bf16.gmra.mxu0 %v1224
    %v1403 = vpop.f32.mrf.mxu0
    %v1404 = vadd.f32 %v1263, %v1403
    %v1405 = vpop.f32.mrf.mxu0
    %v1406 = vpop.f32.mrf.mxu0
    %v1407 = vadd.f32 %v1263, %v1406
    %v1408 = vpop.f32.mrf.mxu0
    %1409 = vdwg.mxu0
    %v1410 = vld [vmem:[%s13] sm:$0x3]
    %v1411 = vadd.f32 %v983, %v1396
    %v1412 = vadd.f32 %v984, %v1399
    %v1413 = vadd.f32 %v985, %v1404
    %v1414 = vadd.f32 %v986, %v1407
    %1415 = vadd.xlane.f32.xlu0 %v1411
    %v1416 = vpop.xlane.xlu0 %1415
    %1417 = vadd.xlane.f32.xlu0 %v1412
    %v1418 = vpop.xlane.xlu0 %1417
    %1419 = vadd.xlane.f32.xlu0 %v1413
    %v1420 = vpop.xlane.xlu0 %1419
    %1421 = vadd.xlane.f32.xlu0 %v1414
    %v1422 = vpop.xlane.xlu0 %1421
    %v1423 = vmul.f32 %v1416, %v90
    %v1424 = vmul.f32 %v1418, %v90
    %v1425 = vmul.f32 %v1420, %v90
    %v1426 = vmul.f32 %v1422, %v90
    %v1427 = vsub.f32 %v1411, %v1423
    %v1428 = vsub.f32 %v1412, %v1424
    %v1429 = vsub.f32 %v1413, %v1425
    %v1430 = vsub.f32 %v1414, %v1426
    %v1431 = vmul.f32 %v1427, %v1427
    %v1432 = vmul.f32 %v1428, %v1428
    %v1433 = vmul.f32 %v1429, %v1429
    %v1434 = vmul.f32 %v1430, %v1430
    %1435 = vadd.xlane.f32.xlu0 %v1431
    %v1436 = vpop.xlane.xlu0 %1435
    %1437 = vadd.xlane.f32.xlu0 %v1432
    %v1438 = vpop.xlane.xlu0 %1437
    %1439 = vadd.xlane.f32.xlu0 %v1433
    %v1440 = vpop.xlane.xlu0 %1439
    %1441 = vadd.xlane.f32.xlu0 %v1434
    %v1442 = vpop.xlane.xlu0 %1441
    %v1443 = vmul.f32 %v1436, %v90
    %v1444 = vmul.f32 %v1438, %v90
    %v1445 = vmul.f32 %v1440, %v90
    %v1446 = vmul.f32 %v1442, %v90
    %v1447 = vadd.f32 %v1443, 1e-12
    %v1448 = vadd.f32 %v1444, 1e-12
    %v1449 = vadd.f32 %v1445, 1e-12
    %v1450 = vadd.f32 %v1446, 1e-12
    %v1451 = vrsqrt.pop %v1447
    %v1452 = vrsqrt.pop %v1448
    %v1453 = vrsqrt.pop %v1449
    %v1454 = vrsqrt.pop %v1450
    %v1455 = vmul.f32 %v1427, %v1451
    %v1456 = vmul.f32 %v1428, %v1452
    %v1457 = vmul.f32 %v1429, %v1453
    %v1458 = vmul.f32 %v1430, %v1454
    %v1459 = vlaneseq
    %v1460 = vshrl.u32 %v1459, 7
    %v1461 = vsub.s32 0, %v1460
    %v1462 = vrot.slane %v1410, %v1461
    %v1463 = vmul.f32 %v1455, %v1462
    %v1464 = vmul.f32 %v1456, %v1462
    %v1465 = vmul.f32 %v1457, %v1462
    %v1466 = vmul.f32 %v1458, %v1462
    %v1467 = vlaneseq
    %v1468 = vshrl.u32 %v1467, 7
    %v1469 = vsub.s32 1, %v1468
    %v1470 = vrot.slane %v1410, %v1469
    %v1471 = vadd.f32 %v1463, %v1470
    %v1472 = vadd.f32 %v1464, %v1470
    %v1473 = vadd.f32 %v1465, %v1470
    %v1474 = vadd.f32 %v1466, %v1470
    %v1475 = vpack.c.bf16 %v1472, %v1471
    %v1476 = vpack.c.bf16 %v1474, %v1473
    %s1477 = scalar_lea.vmem %s4, 192
    %v1478 = vld [vmem:[%s1477] sm:$0xff]
    %v1479 = vld [vmem:[%s1477 + $0x8] sm:$0xf]
    %v1480 = vld [vmem:[%s1477 + $0xc] sm:$0xff]
    %v1481 = vld [vmem:[%s1477 + $0x14] sm:$0xf]
    %v1482 = vld [vmem:[%s1477 + $0x18] sm:$0xff]
    %v1483 = vld [vmem:[%s1477 + $0x20] sm:$0xf]
    %v1484 = vld [vmem:[%s1477 + $0x24] sm:$0xff]
    %v1485 = vld [vmem:[%s1477 + $0x2c] sm:$0xf]
    %v1486 = vld [vmem:[%s1477 + $0x30] sm:$0xff]
    %v1487 = vld [vmem:[%s1477 + $0x38] sm:$0xf]
    %v1488 = vld [vmem:[%s1477 + $0x3c] sm:$0xff]
    %v1489 = vld [vmem:[%s1477 + $0x44] sm:$0xf]
    %v1490 = vld [vmem:[%s1477 + $0x48] sm:$0xff]
    %v1491 = vld [vmem:[%s1477 + $0x50] sm:$0xf]
    %v1492 = vld [vmem:[%s1477 + $0x54] sm:$0xff]
    %v1493 = vld [vmem:[%s1477 + $0x5c] sm:$0xf]
    %v1494 = vld [vmem:[%s1477 + $0x60] sm:$0xff]
    %v1495 = vld [vmem:[%s1477 + $0x68] sm:$0xf]
    %v1496 = vld [vmem:[%s1477 + $0x6c] sm:$0xff]
    %v1497 = vld [vmem:[%s1477 + $0x74] sm:$0xf]
    %v1498 = vld [vmem:[%s1477 + $0x78] sm:$0xff]
    %v1499 = vld [vmem:[%s1477 + $0x80] sm:$0xf]
    %v1500 = vld [vmem:[%s1477 + $0x84] sm:$0xff]
    %v1501 = vld [vmem:[%s1477 + $0x8c] sm:$0xf]
    %v1502 = vld [vmem:[%s1477 + $0x90] sm:$0xff]
    %v1503 = vld [vmem:[%s1477 + $0x98] sm:$0xf]
    %v1504 = vld [vmem:[%s1477 + $0x9c] sm:$0xff]
    %v1505 = vld [vmem:[%s1477 + $0xa4] sm:$0xf]
    %v1506 = vld [vmem:[%s1477 + $0xa8] sm:$0xff]
    %v1507 = vld [vmem:[%s1477 + $0xb0] sm:$0xf]
    %v1508 = vld [vmem:[%s1477 + $0xb4] sm:$0xff]
    %v1509 = vld [vmem:[%s1477 + $0xbc] sm:$0xf]
    %s1510 = scalar_lea.vmem %s5, 3
    %v1511 = vld [vmem:[%s1510] sm:$0x7]
    %v1513 = vlaneseq
    %v1514 = vshrl.u32 %v1513, 7
    %v1515 = vsub.s32 0, %v1514
    %v1516 = vrot.slane %v1511, %v1515
    %v1517 = vlaneseq
    %v1518 = vshrl.u32 %v1517, 7
    %v1519 = vsub.s32 1, %v1518
    %v1520 = vrot.slane %v1511, %v1519
    %v1521 = vlaneseq
    %v1522 = vshrl.u32 %v1521, 7
    %v1523 = vsub.s32 2, %v1522
    %v1524 = vrot.slane %v1511, %v1523
    %v1560 = vunpack.c.l.b16 %v1478
    %v1561 = vunpack.c.h.b16 %v1478
    %v1562 = vunpack.c.l.b16 %v1479
    %v1563 = vunpack.c.l.b16 %v1480
    %v1564 = vunpack.c.h.b16 %v1480
    %v1565 = vunpack.c.l.b16 %v1481
    %v1566 = vunpack.c.l.b16 %v1482
    %v1567 = vunpack.c.h.b16 %v1482
    %v1568 = vunpack.c.l.b16 %v1483
    %v1569 = vunpack.c.l.b16 %v1484
    %v1570 = vunpack.c.h.b16 %v1484
    %v1571 = vunpack.c.l.b16 %v1485
    %v1572 = vunpack.c.l.b16 %v1486
    %v1573 = vunpack.c.h.b16 %v1486
    %v1574 = vunpack.c.l.b16 %v1487
    %v1575 = vunpack.c.l.b16 %v1488
    %v1576 = vunpack.c.h.b16 %v1488
    %v1577 = vunpack.c.l.b16 %v1489
    %v1578 = vunpack.c.l.b16 %v1490
    %v1579 = vunpack.c.h.b16 %v1490
    %v1580 = vunpack.c.l.b16 %v1491
    %v1581 = vunpack.c.l.b16 %v1492
    %v1582 = vunpack.c.h.b16 %v1492
    %v1583 = vunpack.c.l.b16 %v1493
    %v1584 = vunpack.c.l.b16 %v1494
    %v1585 = vunpack.c.h.b16 %v1494
    %v1586 = vunpack.c.l.b16 %v1495
    %v1587 = vunpack.c.l.b16 %v1496
    %v1588 = vunpack.c.h.b16 %v1496
    %v1589 = vunpack.c.l.b16 %v1497
    %v1590 = vunpack.c.l.b16 %v1498
    %v1591 = vunpack.c.h.b16 %v1498
    %v1592 = vunpack.c.l.b16 %v1499
    %v1593 = vunpack.c.l.b16 %v1500
    %v1594 = vunpack.c.h.b16 %v1500
    %v1595 = vunpack.c.l.b16 %v1501
    %v1596 = vunpack.c.l.b16 %v1502
    %v1597 = vunpack.c.h.b16 %v1502
    %v1598 = vunpack.c.l.b16 %v1503
    %v1599 = vunpack.c.l.b16 %v1504
    %v1600 = vunpack.c.h.b16 %v1504
    %v1601 = vunpack.c.l.b16 %v1505
    %v1602 = vunpack.c.l.b16 %v1506
    %v1603 = vunpack.c.h.b16 %v1506
    %v1604 = vunpack.c.l.b16 %v1507
    %v1605 = vunpack.c.l.b16 %v1508
    %v1606 = vunpack.c.h.b16 %v1508
    %v1607 = vunpack.c.l.b16 %v1509
    %v1608 = vpack.c.b16 %v1563, %v1560
    %v1609 = vpack.c.b16 %v1564, %v1561
    %v1610 = vpack.c.b16 %v1565, %v1562
    %v1611 = vpack.c.b16 %v1569, %v1566
    %v1612 = vpack.c.b16 %v1570, %v1567
    %v1613 = vpack.c.b16 %v1571, %v1568
    %v1614 = vpack.c.b16 %v1575, %v1572
    %v1615 = vpack.c.b16 %v1576, %v1573
    %v1616 = vpack.c.b16 %v1577, %v1574
    %v1617 = vpack.c.b16 %v1581, %v1578
    %v1618 = vpack.c.b16 %v1582, %v1579
    %v1619 = vpack.c.b16 %v1583, %v1580
    %v1620 = vpack.c.b16 %v1587, %v1584
    %v1621 = vpack.c.b16 %v1588, %v1585
    %v1622 = vpack.c.b16 %v1589, %v1586
    %v1623 = vpack.c.b16 %v1593, %v1590
    %v1624 = vpack.c.b16 %v1594, %v1591
    %v1625 = vpack.c.b16 %v1595, %v1592
    %v1626 = vpack.c.b16 %v1599, %v1596
    %v1627 = vpack.c.b16 %v1600, %v1597
    %v1628 = vpack.c.b16 %v1601, %v1598
    %v1629 = vpack.c.b16 %v1605, %v1602
    %v1630 = vpack.c.b16 %v1606, %v1603
    %v1631 = vpack.c.b16 %v1607, %v1604
    %1656 = vmatprep.subr.bf16.mxu0 %v1630
    %1657 = vmatpush1.bf16.msra.mxu0 %v1629
    %1658 = vmatprep.subr.bf16.mxu0 %v1627
    %1659 = vmatpush1.bf16.msra.mxu0 %v1626
    %1660 = vmatprep.subr.bf16.mxu0 %v1624
    %1661 = vmatpush1.bf16.msra.mxu0 %v1623
    %1662 = vmatprep.subr.bf16.mxu0 %v1621
    %1663 = vmatpush1.bf16.msra.mxu0 %v1620
    %1664 = vmatprep.subr.bf16.mxu0 %v1618
    %1665 = vmatpush1.bf16.msra.mxu0 %v1617
    %1666 = vmatprep.subr.bf16.mxu0 %v1615
    %1667 = vmatpush1.bf16.msra.mxu0 %v1614
    %1668 = vmatprep.subr.bf16.mxu0 %v1612
    %1669 = vmatpush1.bf16.msra.mxu0 %v1611
    %1670 = vmatprep.subr.bf16.mxu0 %v1609
    %1671 = vmatpush1.bf16.msra.mxu0 %v1608
    %1672 = vmatprep.subr.bf16.mxu0 0
    %1673 = vmatpush2.bf16.msra.mxu0 0
    %1674 = vmatprep.subr.bf16.mxu0 0
    %1675 = vmatpush2.bf16.msra.mxu0 0
    %1676 = vmatprep.subr.bf16.mxu0 0
    %1677 = vmatpush2.bf16.msra.mxu0 0
    %1678 = vmatprep.subr.bf16.mxu0 0
    %1679 = vmatpush2.bf16.msra.mxu0 0
    %1680 = vmatprep.subr.bf16.mxu0 0
    %1681 = vmatpush2.bf16.msra.mxu0 0
    %1682 = vmatprep.subr.bf16.mxu0 0
    %1683 = vmatpush2.bf16.msra.mxu0 0
    %1684 = vmatprep.subr.bf16.mxu0 0
    %1685 = vmatpush2.bf16.msra.mxu0 0
    %1686 = vmatprep.subr.bf16.mxu0 0
    %1687 = vmatpush2.bf16.msra.mxu0 0
    %1688 = vmatprep.mubr.bf16.mxu0 0
    %1689 = vmatmul.mubr.bf16.gmra.mxu0 %v1475
    %v1690 = vpop.f32.mrf.mxu0
    %v1691 = vadd.f32 %v1516, %v1690
    %v1692 = vpop.f32.mrf.mxu0
    %v1693 = vadd.f32 %v1520, %v1692
    %v1694 = vpop.f32.mrf.mxu0
    %v1695 = vadd.f32 %v1516, %v1694
    %v1696 = vpop.f32.mrf.mxu0
    %v1697 = vadd.f32 %v1520, %v1696
    %1698 = vmatprep.mubr.bf16.mxu0 0
    %1699 = vmatmul.mubr.bf16.gmra.mxu0 %v1476
    %v1700 = vpop.f32.mrf.mxu0
    %v1701 = vadd.f32 %v1516, %v1700
    %v1702 = vpop.f32.mrf.mxu0
    %v1703 = vadd.f32 %v1520, %v1702
    %v1704 = vpop.f32.mrf.mxu0
    %v1705 = vadd.f32 %v1516, %v1704
    %v1706 = vpop.f32.mrf.mxu0
    %v1707 = vadd.f32 %v1520, %v1706
    %1708 = vdwg.mxu0
    %1709 = vmatprep.subr.bf16.mxu0 0
    %1710 = vmatpush1.bf16.msra.mxu0 %v1631
    %1711 = vmatprep.subr.bf16.mxu0 0
    %1712 = vmatpush1.bf16.msra.mxu0 %v1628
    %1713 = vmatprep.subr.bf16.mxu0 0
    %1714 = vmatpush1.bf16.msra.mxu0 %v1625
    %1715 = vmatprep.subr.bf16.mxu0 0
    %1716 = vmatpush1.bf16.msra.mxu0 %v1622
    %1717 = vmatprep.subr.bf16.mxu0 0
    %1718 = vmatpush1.bf16.msra.mxu0 %v1619
    %1719 = vmatprep.subr.bf16.mxu0 0
    %1720 = vmatpush1.bf16.msra.mxu0 %v1616
    %1721 = vmatprep.subr.bf16.mxu0 0
    %1722 = vmatpush1.bf16.msra.mxu0 %v1613
    %1723 = vmatprep.subr.bf16.mxu0 0
    %1724 = vmatpush1.bf16.msra.mxu0 %v1610
    %1725 = vmatprep.subr.bf16.mxu0 0
    %1726 = vmatpush2.bf16.msra.mxu0 0
    %1727 = vmatprep.subr.bf16.mxu0 0
    %1728 = vmatpush2.bf16.msra.mxu0 0
    %1729 = vmatprep.subr.bf16.mxu0 0
    %1730 = vmatpush2.bf16.msra.mxu0 0
    %1731 = vmatprep.subr.bf16.mxu0 0
    %1732 = vmatpush2.bf16.msra.mxu0 0
    %1733 = vmatprep.subr.bf16.mxu0 0
    %1734 = vmatpush2.bf16.msra.mxu0 0
    %1735 = vmatprep.subr.bf16.mxu0 0
    %1736 = vmatpush2.bf16.msra.mxu0 0
    %1737 = vmatprep.subr.bf16.mxu0 0
    %1738 = vmatpush2.bf16.msra.mxu0 0
    %1739 = vmatprep.subr.bf16.mxu0 0
    %1740 = vmatpush2.bf16.msra.mxu0 0
    %1741 = vmatprep.mubr.bf16.mxu0 0
    %1742 = vmatmul.mubr.bf16.gmra.mxu0 %v1475
    %v1743 = vpop.f32.mrf.mxu0
    %v1744 = vadd.f32 %v1524, %v1743
    %v1745 = vpop.f32.mrf.mxu0
    %v1746 = vpop.f32.mrf.mxu0
    %v1747 = vadd.f32 %v1524, %v1746
    %v1748 = vpop.f32.mrf.mxu0
    %1749 = vmatprep.mubr.bf16.mxu0 0
    %1750 = vmatmul.mubr.bf16.gmra.mxu0 %v1476
    %v1751 = vpop.f32.mrf.mxu0
    %v1752 = vadd.f32 %v1524, %v1751
    %v1753 = vpop.f32.mrf.mxu0
    %v1754 = vpop.f32.mrf.mxu0
    %v1755 = vadd.f32 %v1524, %v1754
    %v1756 = vpop.f32.mrf.mxu0
    %1757 = vdwg.mxu0
    %v1758 = vpack.c.bf16 %v1695, %v1691
    %v1759 = vpack.c.bf16 %v1697, %v1693
    %v1760 = vpack.c.bf16 %v1747, %v1744
    %v1761 = vpack.c.bf16 %v1705, %v1701
    %v1762 = vpack.c.bf16 %v1707, %v1703
    %v1763 = vpack.c.bf16 %v1755, %v1752
    %v1765 = vsel %vm434, %v1758, 0
    %v1768 = vsel %vm434, %v1761, 0
    %v1771 = vsel %vm434, %v1759, 0
    %v1774 = vsel %vm434, %v1762, 0
    %1776 = vmatprep.subr.bf16.mxu0 0
    %1777 = vmatpush1.bf16.xpose.msra.mxu0 0
    %1778 = vmatprep.subr.bf16.mxu0 0
    %1779 = vmatpush1.bf16.xpose.msra.mxu0 0
    %1780 = vmatprep.subr.bf16.mxu0 0
    %1781 = vmatpush1.bf16.xpose.msra.mxu0 0
    %1782 = vmatprep.subr.bf16.mxu0 0
    %1783 = vmatpush1.bf16.xpose.msra.mxu0 0
    %1784 = vmatprep.subr.bf16.mxu0 0
    %1785 = vmatpush1.bf16.xpose.msra.mxu0 0
    %1786 = vmatprep.subr.bf16.mxu0 0
    %1787 = vmatpush1.bf16.xpose.msra.mxu0 0
    %1788 = vmatprep.subr.bf16.mxu0 0
    %1789 = vmatpush1.bf16.xpose.msra.mxu0 %v1774
    %1790 = vmatprep.subr.bf16.mxu0 0
    %1791 = vmatpush1.bf16.xpose.msra.mxu0 %v1771
    %1792 = vmatprep.subr.bf16.mxu0 0
    %1793 = vmatpush2.bf16.xpose.msra.mxu0 0
    %1794 = vmatprep.subr.bf16.mxu0 0
    %1795 = vmatpush2.bf16.xpose.msra.mxu0 0
    %1796 = vmatprep.subr.bf16.mxu0 0
    %1797 = vmatpush2.bf16.xpose.msra.mxu0 0
    %1798 = vmatprep.subr.bf16.mxu0 0
    %1799 = vmatpush2.bf16.xpose.msra.mxu0 0
    %1800 = vmatprep.subr.bf16.mxu0 0
    %1801 = vmatpush2.bf16.xpose.msra.mxu0 0
    %1802 = vmatprep.subr.bf16.mxu0 0
    %1803 = vmatpush2.bf16.xpose.msra.mxu0 0
    %1804 = vmatprep.subr.bf16.mxu0 0
    %1805 = vmatpush2.bf16.xpose.msra.mxu0 0
    %1806 = vmatprep.subr.bf16.mxu0 0
    %1807 = vmatpush2.bf16.xpose.msra.mxu0 0
    %1808 = vmatprep.mubr.bf16.mxu0 0
    %1809 = vmatmul.mubr.bf16.gmra.mxu0 %v1765
    %v1810 = vpop.f32.mrf.mxu0
    %v1811 = vadd.f32 %v143, %v1810
    %v1812 = vpop.f32.mrf.mxu0
    %v1813 = vpop.f32.mrf.mxu0
    %v1814 = vadd.f32 %v144, %v1813
    %v1815 = vpop.f32.mrf.mxu0
    %1816 = vmatprep.mubr.bf16.mxu0 0
    %1817 = vmatmul.mubr.bf16.gmra.mxu0 %v1768
    %v1818 = vpop.f32.mrf.mxu0
    %v1819 = vadd.f32 %v145, %v1818
    %v1820 = vpop.f32.mrf.mxu0
    %v1821 = vpop.f32.mrf.mxu0
    %v1822 = vadd.f32 %v146, %v1821
    %v1823 = vpop.f32.mrf.mxu0
    %1824 = vdwg.mxu0
    %v1825 = vsel %vm496, %v1811, -inf
    %1826 = vmax.xlane.f32.xlu0 %v1825
    %v1827 = vpop.xlane.xlu0 %1826
    %v1828 = vsel %vm496, %v1814, -inf
    %1829 = vmax.xlane.f32.xlu0 %v1828
    %v1830 = vpop.xlane.xlu0 %1829
    %v1831 = vsel %vm496, %v1819, -inf
    %1832 = vmax.xlane.f32.xlu0 %v1831
    %v1833 = vpop.xlane.xlu0 %1832
    %v1834 = vsel %vm496, %v1822, -inf
    %1835 = vmax.xlane.f32.xlu0 %v1834
    %v1836 = vpop.xlane.xlu0 %1835
    %v1837 = vsub.f32 %v1811, %v1827
    %v1838 = vsub.f32 %v1814, %v1830
    %v1839 = vsub.f32 %v1819, %v1833
    %v1840 = vsub.f32 %v1822, %v1836
    %v1841 = vmul.f32 %v1837, 1.442695
    %v1842 = vpow.pop %v1841
    %v1843 = vmul.f32 %v1838, 1.442695
    %v1844 = vpow.pop %v1843
    %v1845 = vmul.f32 %v1839, 1.442695
    %v1846 = vpow.pop %v1845
    %v1847 = vmul.f32 %v1840, 1.442695
    %v1848 = vpow.pop %v1847
    %v1849 = vsel %vm496, %v1842, 0.0
    %1850 = vadd.xlane.f32.xlu0 %v1849
    %v1851 = vpop.xlane.xlu0 %1850
    %v1852 = vsel %vm496, %v1844, 0.0
    %1853 = vadd.xlane.f32.xlu0 %v1852
    %v1854 = vpop.xlane.xlu0 %1853
    %v1855 = vsel %vm496, %v1846, 0.0
    %1856 = vadd.xlane.f32.xlu0 %v1855
    %v1857 = vpop.xlane.xlu0 %1856
    %v1858 = vsel %vm496, %v1848, 0.0
    %1859 = vadd.xlane.f32.xlu0 %v1858
    %v1860 = vpop.xlane.xlu0 %1859
    %v1861 = vrcp.pop %v1851
    %v1862 = vrcp.pop %v1854
    %v1863 = vrcp.pop %v1857
    %v1864 = vrcp.pop %v1860
    %v1865 = vmul.f32 %v1842, %v1861
    %v1866 = vmul.f32 %v1844, %v1862
    %v1867 = vmul.f32 %v1846, %v1863
    %v1868 = vmul.f32 %v1848, %v1864
    %v1869 = vpack.c.bf16 %v1866, %v1865
    %v1870 = vpack.c.bf16 %v1868, %v1867
    %v1872 = vsel %vm496, %v1869, 0
    %v1875 = vsel %vm496, %v1870, 0
    %1877 = vmatprep.subr.bf16.mxu0 0
    %1878 = vmatpush1.bf16.msra.mxu0 0
    %1879 = vmatprep.subr.bf16.mxu0 0
    %1880 = vmatpush1.bf16.msra.mxu0 0
    %1881 = vmatprep.subr.bf16.mxu0 0
    %1882 = vmatpush1.bf16.msra.mxu0 0
    %1883 = vmatprep.subr.bf16.mxu0 0
    %1884 = vmatpush1.bf16.msra.mxu0 0
    %1885 = vmatprep.subr.bf16.mxu0 0
    %1886 = vmatpush1.bf16.msra.mxu0 0
    %1887 = vmatprep.subr.bf16.mxu0 0
    %1888 = vmatpush1.bf16.msra.mxu0 0
    %1889 = vmatprep.subr.bf16.mxu0 0
    %1890 = vmatpush1.bf16.msra.mxu0 %v1763
    %1891 = vmatprep.subr.bf16.mxu0 0
    %1892 = vmatpush1.bf16.msra.mxu0 %v1760
    %1893 = vmatprep.subr.bf16.mxu0 0
    %1894 = vmatpush2.bf16.msra.mxu0 0
    %1895 = vmatprep.subr.bf16.mxu0 0
    %1896 = vmatpush2.bf16.msra.mxu0 0
    %1897 = vmatprep.subr.bf16.mxu0 0
    %1898 = vmatpush2.bf16.msra.mxu0 0
    %1899 = vmatprep.subr.bf16.mxu0 0
    %1900 = vmatpush2.bf16.msra.mxu0 0
    %1901 = vmatprep.subr.bf16.mxu0 0
    %1902 = vmatpush2.bf16.msra.mxu0 0
    %1903 = vmatprep.subr.bf16.mxu0 0
    %1904 = vmatpush2.bf16.msra.mxu0 0
    %1905 = vmatprep.subr.bf16.mxu0 0
    %1906 = vmatpush2.bf16.msra.mxu0 0
    %1907 = vmatprep.subr.bf16.mxu0 0
    %1908 = vmatpush2.bf16.msra.mxu0 0
    %1909 = vmatprep.mubr.bf16.mxu0 0
    %1910 = vmatmul.mubr.bf16.gmra.mxu0 %v1872
    %v1911 = vpop.f32.mrf.mxu0
    %v1912 = vadd.f32 0.0, %v1911
    %v1913 = vpop.f32.mrf.mxu0
    %v1914 = vpop.f32.mrf.mxu0
    %v1915 = vadd.f32 0.0, %v1914
    %v1916 = vpop.f32.mrf.mxu0
    %1917 = vmatprep.mubr.bf16.mxu0 0
    %1918 = vmatmul.mubr.bf16.gmra.mxu0 %v1875
    %v1919 = vpop.f32.mrf.mxu0
    %v1920 = vadd.f32 0.0, %v1919
    %v1921 = vpop.f32.mrf.mxu0
    %v1922 = vpop.f32.mrf.mxu0
    %v1923 = vadd.f32 0.0, %v1922
    %v1924 = vpop.f32.mrf.mxu0
    %1925 = vdwg.mxu0
    %1928 = vrot.lane.b32.xlu0 %v1758, 64
    %v1929 = vpop.permute.xlu0 %1928
    %1930 = vrot.lane.b32.xlu0 %v1761, 64
    %v1931 = vpop.permute.xlu0 %1930
    %1934 = vrot.lane.b32.xlu0 %v1759, 64
    %v1935 = vpop.permute.xlu0 %1934
    %1936 = vrot.lane.b32.xlu0 %v1762, 64
    %v1937 = vpop.permute.xlu0 %1936
    %v1939 = vsel %vm434, %v1929, 0
    %v1942 = vsel %vm434, %v1931, 0
    %v1945 = vsel %vm434, %v1935, 0
    %v1948 = vsel %vm434, %v1937, 0
    %1950 = vmatprep.subr.bf16.mxu0 0
    %1951 = vmatpush1.bf16.xpose.msra.mxu0 0
    %1952 = vmatprep.subr.bf16.mxu0 0
    %1953 = vmatpush1.bf16.xpose.msra.mxu0 0
    %1954 = vmatprep.subr.bf16.mxu0 0
    %1955 = vmatpush1.bf16.xpose.msra.mxu0 0
    %1956 = vmatprep.subr.bf16.mxu0 0
    %1957 = vmatpush1.bf16.xpose.msra.mxu0 0
    %1958 = vmatprep.subr.bf16.mxu0 0
    %1959 = vmatpush1.bf16.xpose.msra.mxu0 0
    %1960 = vmatprep.subr.bf16.mxu0 0
    %1961 = vmatpush1.bf16.xpose.msra.mxu0 0
    %1962 = vmatprep.subr.bf16.mxu0 0
    %1963 = vmatpush1.bf16.xpose.msra.mxu0 %v1948
    %1964 = vmatprep.subr.bf16.mxu0 0
    %1965 = vmatpush1.bf16.xpose.msra.mxu0 %v1945
    %1966 = vmatprep.subr.bf16.mxu0 0
    %1967 = vmatpush2.bf16.xpose.msra.mxu0 0
    %1968 = vmatprep.subr.bf16.mxu0 0
    %1969 = vmatpush2.bf16.xpose.msra.mxu0 0
    %1970 = vmatprep.subr.bf16.mxu0 0
    %1971 = vmatpush2.bf16.xpose.msra.mxu0 0
    %1972 = vmatprep.subr.bf16.mxu0 0
    %1973 = vmatpush2.bf16.xpose.msra.mxu0 0
    %1974 = vmatprep.subr.bf16.mxu0 0
    %1975 = vmatpush2.bf16.xpose.msra.mxu0 0
    %1976 = vmatprep.subr.bf16.mxu0 0
    %1977 = vmatpush2.bf16.xpose.msra.mxu0 0
    %1978 = vmatprep.subr.bf16.mxu0 0
    %1979 = vmatpush2.bf16.xpose.msra.mxu0 0
    %1980 = vmatprep.subr.bf16.mxu0 0
    %1981 = vmatpush2.bf16.xpose.msra.mxu0 0
    %1982 = vmatprep.mubr.bf16.mxu0 0
    %1983 = vmatmul.mubr.bf16.gmra.mxu0 %v1939
    %v1984 = vpop.f32.mrf.mxu0
    %v1985 = vadd.f32 %v143, %v1984
    %v1986 = vpop.f32.mrf.mxu0
    %v1987 = vpop.f32.mrf.mxu0
    %v1988 = vadd.f32 %v144, %v1987
    %v1989 = vpop.f32.mrf.mxu0
    %1990 = vmatprep.mubr.bf16.mxu0 0
    %1991 = vmatmul.mubr.bf16.gmra.mxu0 %v1942
    %v1992 = vpop.f32.mrf.mxu0
    %v1993 = vadd.f32 %v145, %v1992
    %v1994 = vpop.f32.mrf.mxu0
    %v1995 = vpop.f32.mrf.mxu0
    %v1996 = vadd.f32 %v146, %v1995
    %v1997 = vpop.f32.mrf.mxu0
    %1998 = vdwg.mxu0
    %v1999 = vsel %vm496, %v1985, -inf
    %2000 = vmax.xlane.f32.xlu0 %v1999
    %v2001 = vpop.xlane.xlu0 %2000
    %v2002 = vsel %vm496, %v1988, -inf
    %2003 = vmax.xlane.f32.xlu0 %v2002
    %v2004 = vpop.xlane.xlu0 %2003
    %v2005 = vsel %vm496, %v1993, -inf
    %2006 = vmax.xlane.f32.xlu0 %v2005
    %v2007 = vpop.xlane.xlu0 %2006
    %v2008 = vsel %vm496, %v1996, -inf
    %2009 = vmax.xlane.f32.xlu0 %v2008
    %v2010 = vpop.xlane.xlu0 %2009
    %v2011 = vsub.f32 %v1985, %v2001
    %v2012 = vsub.f32 %v1988, %v2004
    %v2013 = vsub.f32 %v1993, %v2007
    %v2014 = vsub.f32 %v1996, %v2010
    %v2015 = vmul.f32 %v2011, 1.442695
    %v2016 = vpow.pop %v2015
    %v2017 = vmul.f32 %v2012, 1.442695
    %v2018 = vpow.pop %v2017
    %v2019 = vmul.f32 %v2013, 1.442695
    %v2020 = vpow.pop %v2019
    %v2021 = vmul.f32 %v2014, 1.442695
    %v2022 = vpow.pop %v2021
    %v2023 = vsel %vm496, %v2016, 0.0
    %2024 = vadd.xlane.f32.xlu0 %v2023
    %v2025 = vpop.xlane.xlu0 %2024
    %v2026 = vsel %vm496, %v2018, 0.0
    %2027 = vadd.xlane.f32.xlu0 %v2026
    %v2028 = vpop.xlane.xlu0 %2027
    %v2029 = vsel %vm496, %v2020, 0.0
    %2030 = vadd.xlane.f32.xlu0 %v2029
    %v2031 = vpop.xlane.xlu0 %2030
    %v2032 = vsel %vm496, %v2022, 0.0
    %2033 = vadd.xlane.f32.xlu0 %v2032
    %v2034 = vpop.xlane.xlu0 %2033
    %v2035 = vrcp.pop %v2025
    %v2036 = vrcp.pop %v2028
    %v2037 = vrcp.pop %v2031
    %v2038 = vrcp.pop %v2034
    %v2039 = vmul.f32 %v2016, %v2035
    %v2040 = vmul.f32 %v2018, %v2036
    %v2041 = vmul.f32 %v2020, %v2037
    %v2042 = vmul.f32 %v2022, %v2038
    %v2043 = vpack.c.bf16 %v2040, %v2039
    %v2044 = vpack.c.bf16 %v2042, %v2041
    %2047 = vrot.lane.b32.xlu0 %v1760, 64
    %v2048 = vpop.permute.xlu0 %2047
    %2049 = vrot.lane.b32.xlu0 %v1763, 64
    %v2050 = vpop.permute.xlu0 %2049
    %v2054 = vsel %vm496, %v2043, 0
    %v2057 = vsel %vm496, %v2044, 0
    %2059 = vmatprep.subr.bf16.mxu0 0
    %2060 = vmatpush1.bf16.msra.mxu0 0
    %2061 = vmatprep.subr.bf16.mxu0 0
    %2062 = vmatpush1.bf16.msra.mxu0 0
    %2063 = vmatprep.subr.bf16.mxu0 0
    %2064 = vmatpush1.bf16.msra.mxu0 0
    %2065 = vmatprep.subr.bf16.mxu0 0
    %2066 = vmatpush1.bf16.msra.mxu0 0
    %2067 = vmatprep.subr.bf16.mxu0 0
    %2068 = vmatpush1.bf16.msra.mxu0 0
    %2069 = vmatprep.subr.bf16.mxu0 0
    %2070 = vmatpush1.bf16.msra.mxu0 0
    %2071 = vmatprep.subr.bf16.mxu0 0
    %2072 = vmatpush1.bf16.msra.mxu0 %v2050
    %2073 = vmatprep.subr.bf16.mxu0 0
    %2074 = vmatpush1.bf16.msra.mxu0 %v2048
    %2075 = vmatprep.subr.bf16.mxu0 0
    %2076 = vmatpush2.bf16.msra.mxu0 0
    %2077 = vmatprep.subr.bf16.mxu0 0
    %2078 = vmatpush2.bf16.msra.mxu0 0
    %2079 = vmatprep.subr.bf16.mxu0 0
    %2080 = vmatpush2.bf16.msra.mxu0 0
    %2081 = vmatprep.subr.bf16.mxu0 0
    %2082 = vmatpush2.bf16.msra.mxu0 0
    %2083 = vmatprep.subr.bf16.mxu0 0
    %2084 = vmatpush2.bf16.msra.mxu0 0
    %2085 = vmatprep.subr.bf16.mxu0 0
    %2086 = vmatpush2.bf16.msra.mxu0 0
    %2087 = vmatprep.subr.bf16.mxu0 0
    %2088 = vmatpush2.bf16.msra.mxu0 0
    %2089 = vmatprep.subr.bf16.mxu0 0
    %2090 = vmatpush2.bf16.msra.mxu0 0
    %2091 = vmatprep.mubr.bf16.mxu0 0
    %2092 = vmatmul.mubr.bf16.gmra.mxu0 %v2054
    %v2093 = vpop.f32.mrf.mxu0
    %v2094 = vadd.f32 0.0, %v2093
    %v2095 = vpop.f32.mrf.mxu0
    %v2096 = vpop.f32.mrf.mxu0
    %v2097 = vadd.f32 0.0, %v2096
    %v2098 = vpop.f32.mrf.mxu0
    %2099 = vmatprep.mubr.bf16.mxu0 0
    %2100 = vmatmul.mubr.bf16.gmra.mxu0 %v2057
    %v2101 = vpop.f32.mrf.mxu0
    %v2102 = vadd.f32 0.0, %v2101
    %v2103 = vpop.f32.mrf.mxu0
    %v2104 = vpop.f32.mrf.mxu0
    %v2105 = vadd.f32 0.0, %v2104
    %v2106 = vpop.f32.mrf.mxu0
    %2107 = vdwg.mxu0
    %2112 = vrot.lane.b32.xlu0 %v2094, 64
    %v2113 = vpop.permute.xlu0 %2112
    %2114 = vrot.lane.b32.xlu0 %v2097, 64
    %v2115 = vpop.permute.xlu0 %2114
    %2116 = vrot.lane.b32.xlu0 %v2102, 64
    %v2117 = vpop.permute.xlu0 %2116
    %2118 = vrot.lane.b32.xlu0 %v2105, 64
    %v2119 = vpop.permute.xlu0 %2118
    %v2124 = vsel %vm434, %v1912, %v2113
    %v2125 = vsel %vm434, %v1915, %v2115
    %v2126 = vsel %vm434, %v1920, %v2117
    %v2127 = vsel %vm434, %v1923, %v2119
    %v2128 = vpack.c.bf16 %v2125, %v2124
    %v2129 = vpack.c.bf16 %v2127, %v2126
    %s2130 = scalar_lea.vmem %s6, 64
    %v2131 = vld [vmem:[%s2130] sm:$0xf]
    %v2132 = vld [vmem:[%s2130 + $0x4] sm:$0xf]
    %v2133 = vld [vmem:[%s2130 + $0x8] sm:$0xf]
    %v2134 = vld [vmem:[%s2130 + $0xc] sm:$0xf]
    %v2135 = vld [vmem:[%s2130 + $0x10] sm:$0xf]
    %v2136 = vld [vmem:[%s2130 + $0x14] sm:$0xf]
    %v2137 = vld [vmem:[%s2130 + $0x18] sm:$0xf]
    %v2138 = vld [vmem:[%s2130 + $0x1c] sm:$0xf]
    %v2139 = vld [vmem:[%s2130 + $0x20] sm:$0xf]
    %v2140 = vld [vmem:[%s2130 + $0x24] sm:$0xf]
    %v2141 = vld [vmem:[%s2130 + $0x28] sm:$0xf]
    %v2142 = vld [vmem:[%s2130 + $0x2c] sm:$0xf]
    %v2143 = vld [vmem:[%s2130 + $0x30] sm:$0xf]
    %v2144 = vld [vmem:[%s2130 + $0x34] sm:$0xf]
    %v2145 = vld [vmem:[%s2130 + $0x38] sm:$0xf]
    %v2146 = vld [vmem:[%s2130 + $0x3c] sm:$0xf]
    %s2147 = scalar_lea.vmem %s7, 1
    %v2148 = vld [vmem:[%s2147] sm:$0x1]
    %v2150 = vlaneseq
    %v2151 = vshrl.u32 %v2150, 7
    %v2152 = vsub.s32 0, %v2151
    %v2153 = vrot.slane %v2148, %v2152
    %v2171 = vunpack.c.l.b16 %v2131
    %v2172 = vunpack.c.l.b16 %v2132
    %v2173 = vunpack.c.l.b16 %v2133
    %v2174 = vunpack.c.l.b16 %v2134
    %v2175 = vunpack.c.l.b16 %v2135
    %v2176 = vunpack.c.l.b16 %v2136
    %v2177 = vunpack.c.l.b16 %v2137
    %v2178 = vunpack.c.l.b16 %v2138
    %v2179 = vunpack.c.l.b16 %v2139
    %v2180 = vunpack.c.l.b16 %v2140
    %v2181 = vunpack.c.l.b16 %v2141
    %v2182 = vunpack.c.l.b16 %v2142
    %v2183 = vunpack.c.l.b16 %v2143
    %v2184 = vunpack.c.l.b16 %v2144
    %v2185 = vunpack.c.l.b16 %v2145
    %v2186 = vunpack.c.l.b16 %v2146
    %v2187 = vpack.c.b16 %v2172, %v2171
    %v2188 = vpack.c.b16 %v2174, %v2173
    %v2189 = vpack.c.b16 %v2176, %v2175
    %v2190 = vpack.c.b16 %v2178, %v2177
    %v2191 = vpack.c.b16 %v2180, %v2179
    %v2192 = vpack.c.b16 %v2182, %v2181
    %v2193 = vpack.c.b16 %v2184, %v2183
    %v2194 = vpack.c.b16 %v2186, %v2185
    %2203 = vmatprep.subr.bf16.mxu0 0
    %2204 = vmatpush1.bf16.msra.mxu0 %v2194
    %2205 = vmatprep.subr.bf16.mxu0 0
    %2206 = vmatpush1.bf16.msra.mxu0 %v2193
    %2207 = vmatprep.subr.bf16.mxu0 0
    %2208 = vmatpush1.bf16.msra.mxu0 %v2192
    %2209 = vmatprep.subr.bf16.mxu0 0
    %2210 = vmatpush1.bf16.msra.mxu0 %v2191
    %2211 = vmatprep.subr.bf16.mxu0 0
    %2212 = vmatpush1.bf16.msra.mxu0 %v2190
    %2213 = vmatprep.subr.bf16.mxu0 0
    %2214 = vmatpush1.bf16.msra.mxu0 %v2189
    %2215 = vmatprep.subr.bf16.mxu0 0
    %2216 = vmatpush1.bf16.msra.mxu0 %v2188
    %2217 = vmatprep.subr.bf16.mxu0 0
    %2218 = vmatpush1.bf16.msra.mxu0 %v2187
    %2219 = vmatprep.subr.bf16.mxu0 0
    %2220 = vmatpush2.bf16.msra.mxu0 0
    %2221 = vmatprep.subr.bf16.mxu0 0
    %2222 = vmatpush2.bf16.msra.mxu0 0
    %2223 = vmatprep.subr.bf16.mxu0 0
    %2224 = vmatpush2.bf16.msra.mxu0 0
    %2225 = vmatprep.subr.bf16.mxu0 0
    %2226 = vmatpush2.bf16.msra.mxu0 0
    %2227 = vmatprep.subr.bf16.mxu0 0
    %2228 = vmatpush2.bf16.msra.mxu0 0
    %2229 = vmatprep.subr.bf16.mxu0 0
    %2230 = vmatpush2.bf16.msra.mxu0 0
    %2231 = vmatprep.subr.bf16.mxu0 0
    %2232 = vmatpush2.bf16.msra.mxu0 0
    %2233 = vmatprep.subr.bf16.mxu0 0
    %2234 = vmatpush2.bf16.msra.mxu0 0
    %2235 = vmatprep.mubr.bf16.mxu0 0
    %2236 = vmatmul.mubr.bf16.gmra.mxu0 %v2128
    %v2237 = vpop.f32.mrf.mxu0
    %v2238 = vadd.f32 %v2153, %v2237
    %v2239 = vpop.f32.mrf.mxu0
    %v2240 = vpop.f32.mrf.mxu0
    %v2241 = vadd.f32 %v2153, %v2240
    %v2242 = vpop.f32.mrf.mxu0
    %2243 = vmatprep.mubr.bf16.mxu0 0
    %2244 = vmatmul.mubr.bf16.gmra.mxu0 %v2129
    %v2245 = vpop.f32.mrf.mxu0
    %v2246 = vadd.f32 %v2153, %v2245
    %v2247 = vpop.f32.mrf.mxu0
    %v2248 = vpop.f32.mrf.mxu0
    %v2249 = vadd.f32 %v2153, %v2248
    %v2250 = vpop.f32.mrf.mxu0
    %2251 = vdwg.mxu0
    %s2252 = scalar_lea.vmem %s8, 2
    %v2253 = vld [vmem:[%s2252] sm:$0x3]
    %v2254 = vadd.f32 %v1471, %v2238
    %v2255 = vadd.f32 %v1472, %v2241
    %v2256 = vadd.f32 %v1473, %v2246
    %v2257 = vadd.f32 %v1474, %v2249
    %2258 = vadd.xlane.f32.xlu0 %v2254
    %v2259 = vpop.xlane.xlu0 %2258
    %2260 = vadd.xlane.f32.xlu0 %v2255
    %v2261 = vpop.xlane.xlu0 %2260
    %2262 = vadd.xlane.f32.xlu0 %v2256
    %v2263 = vpop.xlane.xlu0 %2262
    %2264 = vadd.xlane.f32.xlu0 %v2257
    %v2265 = vpop.xlane.xlu0 %2264
    %v2266 = vmul.f32 %v2259, %v90
    %v2267 = vmul.f32 %v2261, %v90
    %v2268 = vmul.f32 %v2263, %v90
    %v2269 = vmul.f32 %v2265, %v90
    %v2270 = vsub.f32 %v2254, %v2266
    %v2271 = vsub.f32 %v2255, %v2267
    %v2272 = vsub.f32 %v2256, %v2268
    %v2273 = vsub.f32 %v2257, %v2269
    %v2274 = vmul.f32 %v2270, %v2270
    %v2275 = vmul.f32 %v2271, %v2271
    %v2276 = vmul.f32 %v2272, %v2272
    %v2277 = vmul.f32 %v2273, %v2273
    %2278 = vadd.xlane.f32.xlu0 %v2274
    %v2279 = vpop.xlane.xlu0 %2278
    %2280 = vadd.xlane.f32.xlu0 %v2275
    %v2281 = vpop.xlane.xlu0 %2280
    %2282 = vadd.xlane.f32.xlu0 %v2276
    %v2283 = vpop.xlane.xlu0 %2282
    %2284 = vadd.xlane.f32.xlu0 %v2277
    %v2285 = vpop.xlane.xlu0 %2284
    %v2286 = vmul.f32 %v2279, %v90
    %v2287 = vmul.f32 %v2281, %v90
    %v2288 = vmul.f32 %v2283, %v90
    %v2289 = vmul.f32 %v2285, %v90
    %v2290 = vadd.f32 %v2286, 1e-12
    %v2291 = vadd.f32 %v2287, 1e-12
    %v2292 = vadd.f32 %v2288, 1e-12
    %v2293 = vadd.f32 %v2289, 1e-12
    %v2294 = vrsqrt.pop %v2290
    %v2295 = vrsqrt.pop %v2291
    %v2296 = vrsqrt.pop %v2292
    %v2297 = vrsqrt.pop %v2293
    %v2298 = vmul.f32 %v2270, %v2294
    %v2299 = vmul.f32 %v2271, %v2295
    %v2300 = vmul.f32 %v2272, %v2296
    %v2301 = vmul.f32 %v2273, %v2297
    %v2302 = vlaneseq
    %v2303 = vshrl.u32 %v2302, 7
    %v2304 = vsub.s32 0, %v2303
    %v2305 = vrot.slane %v2253, %v2304
    %v2306 = vmul.f32 %v2298, %v2305
    %v2307 = vmul.f32 %v2299, %v2305
    %v2308 = vmul.f32 %v2300, %v2305
    %v2309 = vmul.f32 %v2301, %v2305
    %v2310 = vlaneseq
    %v2311 = vshrl.u32 %v2310, 7
    %v2312 = vsub.s32 1, %v2311
    %v2313 = vrot.slane %v2253, %v2312
    %v2314 = vadd.f32 %v2306, %v2313
    %v2315 = vadd.f32 %v2307, %v2313
    %v2316 = vadd.f32 %v2308, %v2313
    %v2317 = vadd.f32 %v2309, %v2313
    %v2318 = vpack.c.bf16 %v2315, %v2314
    %v2319 = vpack.c.bf16 %v2317, %v2316
    %s2320 = scalar_lea.vmem [#allocation2], 128
    %v2321 = vld [vmem:[%s2320] sm:$0xff]
    %v2322 = vld [vmem:[%s2320 + $0x8] sm:$0xff]
    %v2323 = vld [vmem:[%s2320 + $0x10] sm:$0xff]
    %v2324 = vld [vmem:[%s2320 + $0x18] sm:$0xff]
    %v2325 = vld [vmem:[%s2320 + $0x20] sm:$0xff]
    %v2326 = vld [vmem:[%s2320 + $0x28] sm:$0xff]
    %v2327 = vld [vmem:[%s2320 + $0x30] sm:$0xff]
    %v2328 = vld [vmem:[%s2320 + $0x38] sm:$0xff]
    %v2329 = vld [vmem:[%s2320 + $0x40] sm:$0xff]
    %v2330 = vld [vmem:[%s2320 + $0x48] sm:$0xff]
    %v2331 = vld [vmem:[%s2320 + $0x50] sm:$0xff]
    %v2332 = vld [vmem:[%s2320 + $0x58] sm:$0xff]
    %v2333 = vld [vmem:[%s2320 + $0x60] sm:$0xff]
    %v2334 = vld [vmem:[%s2320 + $0x68] sm:$0xff]
    %v2335 = vld [vmem:[%s2320 + $0x70] sm:$0xff]
    %v2336 = vld [vmem:[%s2320 + $0x78] sm:$0xff]
    %s2337 = scalar_lea.vmem %s10, 2
    %v2338 = vld [vmem:[%s2337] sm:$0x3]
    %v2340 = vlaneseq
    %v2341 = vshrl.u32 %v2340, 7
    %v2342 = vsub.s32 0, %v2341
    %v2343 = vrot.slane %v2338, %v2342
    %v2344 = vlaneseq
    %v2345 = vshrl.u32 %v2344, 7
    %v2346 = vsub.s32 1, %v2345
    %v2347 = vrot.slane %v2338, %v2346
    %v2366 = vunpack.c.l.b16 %v2321
    %v2367 = vunpack.c.h.b16 %v2321
    %v2368 = vunpack.c.l.b16 %v2322
    %v2369 = vunpack.c.h.b16 %v2322
    %v2370 = vunpack.c.l.b16 %v2323
    %v2371 = vunpack.c.h.b16 %v2323
    %v2372 = vunpack.c.l.b16 %v2324
    %v2373 = vunpack.c.h.b16 %v2324
    %v2374 = vunpack.c.l.b16 %v2325
    %v2375 = vunpack.c.h.b16 %v2325
    %v2376 = vunpack.c.l.b16 %v2326
    %v2377 = vunpack.c.h.b16 %v2326
    %v2378 = vunpack.c.l.b16 %v2327
    %v2379 = vunpack.c.h.b16 %v2327
    %v2380 = vunpack.c.l.b16 %v2328
    %v2381 = vunpack.c.h.b16 %v2328
    %v2382 = vunpack.c.l.b16 %v2329
    %v2383 = vunpack.c.h.b16 %v2329
    %v2384 = vunpack.c.l.b16 %v2330
    %v2385 = vunpack.c.h.b16 %v2330
    %v2386 = vunpack.c.l.b16 %v2331
    %v2387 = vunpack.c.h.b16 %v2331
    %v2388 = vunpack.c.l.b16 %v2332
    %v2389 = vunpack.c.h.b16 %v2332
    %v2390 = vunpack.c.l.b16 %v2333
    %v2391 = vunpack.c.h.b16 %v2333
    %v2392 = vunpack.c.l.b16 %v2334
    %v2393 = vunpack.c.h.b16 %v2334
    %v2394 = vunpack.c.l.b16 %v2335
    %v2395 = vunpack.c.h.b16 %v2335
    %v2396 = vunpack.c.l.b16 %v2336
    %v2397 = vunpack.c.h.b16 %v2336
    %v2398 = vpack.c.b16 %v2368, %v2366
    %v2399 = vpack.c.b16 %v2369, %v2367
    %v2400 = vpack.c.b16 %v2372, %v2370
    %v2401 = vpack.c.b16 %v2373, %v2371
    %v2402 = vpack.c.b16 %v2376, %v2374
    %v2403 = vpack.c.b16 %v2377, %v2375
    %v2404 = vpack.c.b16 %v2380, %v2378
    %v2405 = vpack.c.b16 %v2381, %v2379
    %v2406 = vpack.c.b16 %v2384, %v2382
    %v2407 = vpack.c.b16 %v2385, %v2383
    %v2408 = vpack.c.b16 %v2388, %v2386
    %v2409 = vpack.c.b16 %v2389, %v2387
    %v2410 = vpack.c.b16 %v2392, %v2390
    %v2411 = vpack.c.b16 %v2393, %v2391
    %v2412 = vpack.c.b16 %v2396, %v2394
    %v2413 = vpack.c.b16 %v2397, %v2395
    %2430 = vmatprep.subr.bf16.mxu0 %v2413
    %2431 = vmatpush1.bf16.msra.mxu0 %v2412
    %2432 = vmatprep.subr.bf16.mxu0 %v2411
    %2433 = vmatpush1.bf16.msra.mxu0 %v2410
    %2434 = vmatprep.subr.bf16.mxu0 %v2409
    %2435 = vmatpush1.bf16.msra.mxu0 %v2408
    %2436 = vmatprep.subr.bf16.mxu0 %v2407
    %2437 = vmatpush1.bf16.msra.mxu0 %v2406
    %2438 = vmatprep.subr.bf16.mxu0 %v2405
    %2439 = vmatpush1.bf16.msra.mxu0 %v2404
    %2440 = vmatprep.subr.bf16.mxu0 %v2403
    %2441 = vmatpush1.bf16.msra.mxu0 %v2402
    %2442 = vmatprep.subr.bf16.mxu0 %v2401
    %2443 = vmatpush1.bf16.msra.mxu0 %v2400
    %2444 = vmatprep.subr.bf16.mxu0 %v2399
    %2445 = vmatpush1.bf16.msra.mxu0 %v2398
    %2446 = vmatprep.subr.bf16.mxu0 0
    %2447 = vmatpush2.bf16.msra.mxu0 0
    %2448 = vmatprep.subr.bf16.mxu0 0
    %2449 = vmatpush2.bf16.msra.mxu0 0
    %2450 = vmatprep.subr.bf16.mxu0 0
    %2451 = vmatpush2.bf16.msra.mxu0 0
    %2452 = vmatprep.subr.bf16.mxu0 0
    %2453 = vmatpush2.bf16.msra.mxu0 0
    %2454 = vmatprep.subr.bf16.mxu0 0
    %2455 = vmatpush2.bf16.msra.mxu0 0
    %2456 = vmatprep.subr.bf16.mxu0 0
    %2457 = vmatpush2.bf16.msra.mxu0 0
    %2458 = vmatprep.subr.bf16.mxu0 0
    %2459 = vmatpush2.bf16.msra.mxu0 0
    %2460 = vmatprep.subr.bf16.mxu0 0
    %2461 = vmatpush2.bf16.msra.mxu0 0
    %2462 = vmatprep.mubr.bf16.mxu0 0
    %2463 = vmatmul.mubr.bf16.gmra.mxu0 %v2318
    %v2464 = vpop.f32.mrf.mxu0
    %v2465 = vadd.f32 %v2343, %v2464
    %v2466 = vpop.f32.mrf.mxu0
    %v2467 = vadd.f32 %v2347, %v2466
    %v2468 = vpop.f32.mrf.mxu0
    %v2469 = vadd.f32 %v2343, %v2468
    %v2470 = vpop.f32.mrf.mxu0
    %v2471 = vadd.f32 %v2347, %v2470
    %2472 = vmatprep.mubr.bf16.mxu0 0
    %2473 = vmatmul.mubr.bf16.gmra.mxu0 %v2319
    %v2474 = vpop.f32.mrf.mxu0
    %v2475 = vadd.f32 %v2343, %v2474
    %v2476 = vpop.f32.mrf.mxu0
    %v2477 = vadd.f32 %v2347, %v2476
    %v2478 = vpop.f32.mrf.mxu0
    %v2479 = vadd.f32 %v2343, %v2478
    %v2480 = vpop.f32.mrf.mxu0
    %v2481 = vadd.f32 %v2347, %v2480
    %2482 = vdwg.mxu0
    %v2483 = vmul.f32 %v2465, %v2465
    %v2484 = vmul.f32 %v2467, %v2467
    %v2485 = vmul.f32 %v2469, %v2469
    %v2486 = vmul.f32 %v2471, %v2471
    %v2487 = vmul.f32 %v2475, %v2475
    %v2488 = vmul.f32 %v2477, %v2477
    %v2489 = vmul.f32 %v2479, %v2479
    %v2490 = vmul.f32 %v2481, %v2481
    %v2491 = vmul.f32 %v2465, %v2483
    %v2492 = vmul.f32 %v2467, %v2484
    %v2493 = vmul.f32 %v2469, %v2485
    %v2494 = vmul.f32 %v2471, %v2486
    %v2495 = vmul.f32 %v2475, %v2487
    %v2496 = vmul.f32 %v2477, %v2488
    %v2497 = vmul.f32 %v2479, %v2489
    %v2498 = vmul.f32 %v2481, %v2490
    %v2499 = vmul.f32 %v2491, 0.044715
    %v2500 = vmul.f32 %v2492, 0.044715
    %v2501 = vmul.f32 %v2493, 0.044715
    %v2502 = vmul.f32 %v2494, 0.044715
    %v2503 = vmul.f32 %v2495, 0.044715
    %v2504 = vmul.f32 %v2496, 0.044715
    %v2505 = vmul.f32 %v2497, 0.044715
    %v2506 = vmul.f32 %v2498, 0.044715
    %v2507 = vadd.f32 %v2465, %v2499
    %v2508 = vadd.f32 %v2467, %v2500
    %v2509 = vadd.f32 %v2469, %v2501
    %v2510 = vadd.f32 %v2471, %v2502
    %v2511 = vadd.f32 %v2475, %v2503
    %v2512 = vadd.f32 %v2477, %v2504
    %v2513 = vadd.f32 %v2479, %v2505
    %v2514 = vadd.f32 %v2481, %v2506
    %v2515 = vmul.f32 %v2507, 0.7978846
    %v2516 = vmul.f32 %v2508, 0.7978846
    %v2517 = vmul.f32 %v2509, 0.7978846
    %v2518 = vmul.f32 %v2510, 0.7978846
    %v2519 = vmul.f32 %v2511, 0.7978846
    %v2520 = vmul.f32 %v2512, 0.7978846
    %v2521 = vmul.f32 %v2513, 0.7978846
    %v2522 = vmul.f32 %v2514, 0.7978846
    %v2523 = vtanh.pop %v2515
    %v2524 = vtanh.pop %v2516
    %v2525 = vtanh.pop %v2517
    %v2526 = vtanh.pop %v2518
    %v2527 = vtanh.pop %v2519
    %v2528 = vtanh.pop %v2520
    %v2529 = vtanh.pop %v2521
    %v2530 = vtanh.pop %v2522
    %v2531 = vadd.f32 %v2523, 1.0
    %v2532 = vadd.f32 %v2524, 1.0
    %v2533 = vadd.f32 %v2525, 1.0
    %v2534 = vadd.f32 %v2526, 1.0
    %v2535 = vadd.f32 %v2527, 1.0
    %v2536 = vadd.f32 %v2528, 1.0
    %v2537 = vadd.f32 %v2529, 1.0
    %v2538 = vadd.f32 %v2530, 1.0
    %v2539 = vmul.f32 %v2531, 0.5
    %v2540 = vmul.f32 %v2532, 0.5
    %v2541 = vmul.f32 %v2533, 0.5
    %v2542 = vmul.f32 %v2534, 0.5
    %v2543 = vmul.f32 %v2535, 0.5
    %v2544 = vmul.f32 %v2536, 0.5
    %v2545 = vmul.f32 %v2537, 0.5
    %v2546 = vmul.f32 %v2538, 0.5
    %v2547 = vmul.f32 %v2465, %v2539
    %v2548 = vmul.f32 %v2467, %v2540
    %v2549 = vmul.f32 %v2469, %v2541
    %v2550 = vmul.f32 %v2471, %v2542
    %v2551 = vmul.f32 %v2475, %v2543
    %v2552 = vmul.f32 %v2477, %v2544
    %v2553 = vmul.f32 %v2479, %v2545
    %v2554 = vmul.f32 %v2481, %v2546
    %v2555 = vpack.c.bf16 %v2549, %v2547
    %v2556 = vpack.c.bf16 %v2550, %v2548
    %v2557 = vpack.c.bf16 %v2553, %v2551
    %v2558 = vpack.c.bf16 %v2554, %v2552
    %s2559 = scalar_lea.vmem [#allocation5], 128
    %v2560 = vld [vmem:[%s2559] sm:$0xf]
    %v2561 = vld [vmem:[%s2559 + $0x4] sm:$0xf]
    %v2562 = vld [vmem:[%s2559 + $0x8] sm:$0xf]
    %v2563 = vld [vmem:[%s2559 + $0xc] sm:$0xf]
    %v2564 = vld [vmem:[%s2559 + $0x10] sm:$0xf]
    %v2565 = vld [vmem:[%s2559 + $0x14] sm:$0xf]
    %v2566 = vld [vmem:[%s2559 + $0x18] sm:$0xf]
    %v2567 = vld [vmem:[%s2559 + $0x1c] sm:$0xf]
    %v2568 = vld [vmem:[%s2559 + $0x20] sm:$0xf]
    %v2569 = vld [vmem:[%s2559 + $0x24] sm:$0xf]
    %v2570 = vld [vmem:[%s2559 + $0x28] sm:$0xf]
    %v2571 = vld [vmem:[%s2559 + $0x2c] sm:$0xf]
    %v2572 = vld [vmem:[%s2559 + $0x30] sm:$0xf]
    %v2573 = vld [vmem:[%s2559 + $0x34] sm:$0xf]
    %v2574 = vld [vmem:[%s2559 + $0x38] sm:$0xf]
    %v2575 = vld [vmem:[%s2559 + $0x3c] sm:$0xf]
    %v2576 = vld [vmem:[%s2559 + $0x40] sm:$0xf]
    %v2577 = vld [vmem:[%s2559 + $0x44] sm:$0xf]
    %v2578 = vld [vmem:[%s2559 + $0x48] sm:$0xf]
    %v2579 = vld [vmem:[%s2559 + $0x4c] sm:$0xf]
    %v2580 = vld [vmem:[%s2559 + $0x50] sm:$0xf]
    %v2581 = vld [vmem:[%s2559 + $0x54] sm:$0xf]
    %v2582 = vld [vmem:[%s2559 + $0x58] sm:$0xf]
    %v2583 = vld [vmem:[%s2559 + $0x5c] sm:$0xf]
    %v2584 = vld [vmem:[%s2559 + $0x60] sm:$0xf]
    %v2585 = vld [vmem:[%s2559 + $0x64] sm:$0xf]
    %v2586 = vld [vmem:[%s2559 + $0x68] sm:$0xf]
    %v2587 = vld [vmem:[%s2559 + $0x6c] sm:$0xf]
    %v2588 = vld [vmem:[%s2559 + $0x70] sm:$0xf]
    %v2589 = vld [vmem:[%s2559 + $0x74] sm:$0xf]
    %v2590 = vld [vmem:[%s2559 + $0x78] sm:$0xf]
    %v2591 = vld [vmem:[%s2559 + $0x7c] sm:$0xf]
    %s2592 = scalar_lea.vmem %s12, 1
    %v2593 = vld [vmem:[%s2592] sm:$0x1]
    %v2595 = vlaneseq
    %v2596 = vshrl.u32 %v2595, 7
    %v2597 = vsub.s32 0, %v2596
    %v2598 = vrot.slane %v2593, %v2597
    %v2632 = vunpack.c.l.b16 %v2560
    %v2633 = vunpack.c.l.b16 %v2561
    %v2634 = vunpack.c.l.b16 %v2562
    %v2635 = vunpack.c.l.b16 %v2563
    %v2636 = vunpack.c.l.b16 %v2564
    %v2637 = vunpack.c.l.b16 %v2565
    %v2638 = vunpack.c.l.b16 %v2566
    %v2639 = vunpack.c.l.b16 %v2567
    %v2640 = vunpack.c.l.b16 %v2568
    %v2641 = vunpack.c.l.b16 %v2569
    %v2642 = vunpack.c.l.b16 %v2570
    %v2643 = vunpack.c.l.b16 %v2571
    %v2644 = vunpack.c.l.b16 %v2572
    %v2645 = vunpack.c.l.b16 %v2573
    %v2646 = vunpack.c.l.b16 %v2574
    %v2647 = vunpack.c.l.b16 %v2575
    %v2648 = vunpack.c.l.b16 %v2576
    %v2649 = vunpack.c.l.b16 %v2577
    %v2650 = vunpack.c.l.b16 %v2578
    %v2651 = vunpack.c.l.b16 %v2579
    %v2652 = vunpack.c.l.b16 %v2580
    %v2653 = vunpack.c.l.b16 %v2581
    %v2654 = vunpack.c.l.b16 %v2582
    %v2655 = vunpack.c.l.b16 %v2583
    %v2656 = vunpack.c.l.b16 %v2584
    %v2657 = vunpack.c.l.b16 %v2585
    %v2658 = vunpack.c.l.b16 %v2586
    %v2659 = vunpack.c.l.b16 %v2587
    %v2660 = vunpack.c.l.b16 %v2588
    %v2661 = vunpack.c.l.b16 %v2589
    %v2662 = vunpack.c.l.b16 %v2590
    %v2663 = vunpack.c.l.b16 %v2591
    %v2664 = vpack.c.b16 %v2633, %v2632
    %v2665 = vpack.c.b16 %v2635, %v2634
    %v2666 = vpack.c.b16 %v2637, %v2636
    %v2667 = vpack.c.b16 %v2639, %v2638
    %v2668 = vpack.c.b16 %v2641, %v2640
    %v2669 = vpack.c.b16 %v2643, %v2642
    %v2670 = vpack.c.b16 %v2645, %v2644
    %v2671 = vpack.c.b16 %v2647, %v2646
    %v2672 = vpack.c.b16 %v2649, %v2648
    %v2673 = vpack.c.b16 %v2651, %v2650
    %v2674 = vpack.c.b16 %v2653, %v2652
    %v2675 = vpack.c.b16 %v2655, %v2654
    %v2676 = vpack.c.b16 %v2657, %v2656
    %v2677 = vpack.c.b16 %v2659, %v2658
    %v2678 = vpack.c.b16 %v2661, %v2660
    %v2679 = vpack.c.b16 %v2663, %v2662
    %2696 = vmatprep.subr.bf16.mxu0 0
    %2697 = vmatpush1.bf16.msra.mxu0 %v2671
    %2698 = vmatprep.subr.bf16.mxu0 0
    %2699 = vmatpush1.bf16.msra.mxu0 %v2670
    %2700 = vmatprep.subr.bf16.mxu0 0
    %2701 = vmatpush1.bf16.msra.mxu0 %v2669
    %2702 = vmatprep.subr.bf16.mxu0 0
    %2703 = vmatpush1.bf16.msra.mxu0 %v2668
    %2704 = vmatprep.subr.bf16.mxu0 0
    %2705 = vmatpush1.bf16.msra.mxu0 %v2667
    %2706 = vmatprep.subr.bf16.mxu0 0
    %2707 = vmatpush1.bf16.msra.mxu0 %v2666
    %2708 = vmatprep.subr.bf16.mxu0 0
    %2709 = vmatpush1.bf16.msra.mxu0 %v2665
    %2710 = vmatprep.subr.bf16.mxu0 0
    %2711 = vmatpush1.bf16.msra.mxu0 %v2664
    %2712 = vmatprep.subr.bf16.mxu0 0
    %2713 = vmatpush2.bf16.msra.mxu0 %v2679
    %2714 = vmatprep.subr.bf16.mxu0 0
    %2715 = vmatpush2.bf16.msra.mxu0 %v2678
    %2716 = vmatprep.subr.bf16.mxu0 0
    %2717 = vmatpush2.bf16.msra.mxu0 %v2677
    %2718 = vmatprep.subr.bf16.mxu0 0
    %2719 = vmatpush2.bf16.msra.mxu0 %v2676
    %2720 = vmatprep.subr.bf16.mxu0 0
    %2721 = vmatpush2.bf16.msra.mxu0 %v2675
    %2722 = vmatprep.subr.bf16.mxu0 0
    %2723 = vmatpush2.bf16.msra.mxu0 %v2674
    %2724 = vmatprep.subr.bf16.mxu0 0
    %2725 = vmatpush2.bf16.msra.mxu0 %v2673
    %2726 = vmatprep.subr.bf16.mxu0 0
    %2727 = vmatpush2.bf16.msra.mxu0 %v2672
    %2728 = vmatprep.mubr.bf16.mxu0 %v2556
    %2729 = vmatmul.mubr.bf16.gmra.mxu0 %v2555
    %v2730 = vpop.f32.mrf.mxu0
    %v2731 = vadd.f32 %v2598, %v2730
    %v2732 = vpop.f32.mrf.mxu0
    %v2733 = vpop.f32.mrf.mxu0
    %v2734 = vadd.f32 %v2598, %v2733
    %v2735 = vpop.f32.mrf.mxu0
    %2736 = vmatprep.mubr.bf16.mxu0 %v2558
    %2737 = vmatmul.mubr.bf16.gmra.mxu0 %v2557
    %v2738 = vpop.f32.mrf.mxu0
    %v2739 = vadd.f32 %v2598, %v2738
    %v2740 = vpop.f32.mrf.mxu0
    %v2741 = vpop.f32.mrf.mxu0
    %v2742 = vadd.f32 %v2598, %v2741
    %v2743 = vpop.f32.mrf.mxu0
    %2744 = vdwg.mxu0
    %s2745 = scalar_lea.vmem %s13, 2
    %v2746 = vld [vmem:[%s2745] sm:$0x3]
    %v2747 = vadd.f32 %v2314, %v2731
    %v2748 = vadd.f32 %v2315, %v2734
    %v2749 = vadd.f32 %v2316, %v2739
    %v2750 = vadd.f32 %v2317, %v2742
    %2751 = vadd.xlane.f32.xlu0 %v2747
    %v2752 = vpop.xlane.xlu0 %2751
    %2753 = vadd.xlane.f32.xlu0 %v2748
    %v2754 = vpop.xlane.xlu0 %2753
    %2755 = vadd.xlane.f32.xlu0 %v2749
    %v2756 = vpop.xlane.xlu0 %2755
    %2757 = vadd.xlane.f32.xlu0 %v2750
    %v2758 = vpop.xlane.xlu0 %2757
    %v2759 = vmul.f32 %v2752, %v90
    %v2760 = vmul.f32 %v2754, %v90
    %v2761 = vmul.f32 %v2756, %v90
    %v2762 = vmul.f32 %v2758, %v90
    %v2763 = vsub.f32 %v2747, %v2759
    %v2764 = vsub.f32 %v2748, %v2760
    %v2765 = vsub.f32 %v2749, %v2761
    %v2766 = vsub.f32 %v2750, %v2762
    %v2767 = vmul.f32 %v2763, %v2763
    %v2768 = vmul.f32 %v2764, %v2764
    %v2769 = vmul.f32 %v2765, %v2765
    %v2770 = vmul.f32 %v2766, %v2766
    %2771 = vadd.xlane.f32.xlu0 %v2767
    %v2772 = vpop.xlane.xlu0 %2771
    %2773 = vadd.xlane.f32.xlu0 %v2768
    %v2774 = vpop.xlane.xlu0 %2773
    %2775 = vadd.xlane.f32.xlu0 %v2769
    %v2776 = vpop.xlane.xlu0 %2775
    %2777 = vadd.xlane.f32.xlu0 %v2770
    %v2778 = vpop.xlane.xlu0 %2777
    %v2779 = vmul.f32 %v2772, %v90
    %v2780 = vmul.f32 %v2774, %v90
    %v2781 = vmul.f32 %v2776, %v90
    %v2782 = vmul.f32 %v2778, %v90
    %v2783 = vadd.f32 %v2779, 1e-12
    %v2784 = vadd.f32 %v2780, 1e-12
    %v2785 = vadd.f32 %v2781, 1e-12
    %v2786 = vadd.f32 %v2782, 1e-12
    %v2787 = vrsqrt.pop %v2783
    %v2788 = vrsqrt.pop %v2784
    %v2789 = vrsqrt.pop %v2785
    %v2790 = vrsqrt.pop %v2786
    %v2791 = vmul.f32 %v2763, %v2787
    %v2792 = vmul.f32 %v2764, %v2788
    %v2793 = vmul.f32 %v2765, %v2789
    %v2794 = vmul.f32 %v2766, %v2790
    %v2795 = vlaneseq
    %v2796 = vshrl.u32 %v2795, 7
    %v2797 = vsub.s32 0, %v2796
    %v2798 = vrot.slane %v2746, %v2797
    %v2799 = vmul.f32 %v2791, %v2798
    %v2800 = vmul.f32 %v2792, %v2798
    %v2801 = vmul.f32 %v2793, %v2798
    %v2802 = vmul.f32 %v2794, %v2798
    %v2803 = vlaneseq
    %v2804 = vshrl.u32 %v2803, 7
    %v2805 = vsub.s32 1, %v2804
    %v2806 = vrot.slane %v2746, %v2805
    %v2807 = vadd.f32 %v2799, %v2806
    %v2808 = vadd.f32 %v2800, %v2806
    %v2809 = vadd.f32 %v2801, %v2806
    %v2810 = vadd.f32 %v2802, %v2806
    %v2811 = vld [vmem:[%s2] sm:$0x3]
    %v2813 = vsel %vm496, %v2811, 0
    %2815 = vmatprep.subr.mxu0 0.0
    %2816 = vmatpush1.msra.mxu0 0.0
    %2817 = vmatprep.subr.mxu0 0.0
    %2818 = vmatpush1.msra.mxu0 0.0
    %2819 = vmatprep.subr.mxu0 0.0
    %2820 = vmatpush1.msra.mxu0 0.0
    %2821 = vmatprep.subr.mxu0 0.0
    %2822 = vmatpush1.msra.mxu0 0.0
    %2823 = vmatprep.subr.mxu0 0.0
    %2824 = vmatpush1.msra.mxu0 0.0
    %2825 = vmatprep.subr.mxu0 0.0
    %2826 = vmatpush1.msra.mxu0 0.0
    %2827 = vmatprep.subr.mxu0 0.0
    %2828 = vmatpush1.msra.mxu0 0.0
    %2829 = vmatprep.subr.mxu0 0.0
    %2830 = vmatpush1.msra.mxu0 0.0
    %2831 = vmatprep.subr.mxu0 0.0
    %2832 = vmatpush1.msra.mxu0 0.0
    %2833 = vmatprep.subr.mxu0 0.0
    %2834 = vmatpush1.msra.mxu0 0.0
    %2835 = vmatprep.subr.mxu0 0.0
    %2836 = vmatpush1.msra.mxu0 0.0
    %2837 = vmatprep.subr.mxu0 0.0
    %2838 = vmatpush1.msra.mxu0 0.0
    %2839 = vmatprep.subr.mxu0 0.0
    %2840 = vmatpush1.msra.mxu0 %v2810
    %2841 = vmatprep.subr.mxu0 0.0
    %2842 = vmatpush1.msra.mxu0 %v2809
    %2843 = vmatprep.subr.mxu0 0.0
    %2844 = vmatpush1.msra.mxu0 %v2808
    %2845 = vmatprep.subr.mxu0 0.0
    %2846 = vmatpush1.msra.mxu0 %v2807
    %2847 = vmatprep.subr.mxu0 0.0
    %2848 = vmatpush2.msra.mxu0 0.0
    %2849 = vmatprep.subr.mxu0 0.0
    %2850 = vmatpush2.msra.mxu0 0.0
    %2851 = vmatprep.subr.mxu0 0.0
    %2852 = vmatpush2.msra.mxu0 0.0
    %2853 = vmatprep.subr.mxu0 0.0
    %2854 = vmatpush2.msra.mxu0 0.0
    %2855 = vmatprep.subr.mxu0 0.0
    %2856 = vmatpush2.msra.mxu0 0.0
    %2857 = vmatprep.subr.mxu0 0.0
    %2858 = vmatpush2.msra.mxu0 0.0
    %2859 = vmatprep.subr.mxu0 0.0
    %2860 = vmatpush2.msra.mxu0 0.0
    %2861 = vmatprep.subr.mxu0 0.0
    %2862 = vmatpush2.msra.mxu0 0.0
    %2863 = vmatprep.subr.mxu0 0.0
    %2864 = vmatpush2.msra.mxu0 0.0
    %2865 = vmatprep.subr.mxu0 0.0
    %2866 = vmatpush2.msra.mxu0 0.0
    %2867 = vmatprep.subr.mxu0 0.0
    %2868 = vmatpush2.msra.mxu0 0.0
    %2869 = vmatprep.subr.mxu0 0.0
    %2870 = vmatpush2.msra.mxu0 0.0
    %2871 = vmatprep.subr.mxu0 0.0
    %2872 = vmatpush2.msra.mxu0 0.0
    %2873 = vmatprep.subr.mxu0 0.0
    %2874 = vmatpush2.msra.mxu0 0.0
    %2875 = vmatprep.subr.mxu0 0.0
    %2876 = vmatpush2.msra.mxu0 0.0
    %2877 = vmatprep.subr.mxu0 0.0
    %2878 = vmatpush2.msra.mxu0 0.0
    %2879 = vmatprep.mubr.f32.mxu0 0.0
    %2880 = vmatmul.mubr.f32.gmra.mxu0 %v2813
    %v2881 = vpop.f32.mrf.mxu0
    %v2882 = vadd.f32 0.0, %v2881
    %v2883 = vpop.f32.mrf.mxu0
    %2884 = vdwg.mxu0
    %2885 = vst [vmem:[#allocation7] sm:$0x3] %v2882
    // Predicated region
    $region66: #{word_features_forward.1} parent=1 // pred_check
      _
    $region67: #{word_features_forward.1} parent=1 // pred_check_branch
      %2887 = sbr.rel (0) target = $region69
    $region68: #{word_features_forward.1} parent=1 // pred_region
      %s2889 = ssub.s32 32, 32
      %2890 = vsyncadd [#allocation4], %s2889
      %s2892 = sshll.u32 [#allocation7], 4
      %s2893 = int_to_ptr.vmem [resolvable:$true] %s2892
      %2895 = dma.vmem_to_hbm [thread:$0]  %s2893, 32, %s14, [#allocation4]
    $region69: #{word_features_forward.1} parent=1 // pred_fallthru
      _
    // Predicated region
    $region70: #{word_features_forward.1} parent=1 // pred_check
      _
    $region71: #{word_features_forward.1} parent=1 // pred_check_branch
      %2897 = sbr.rel (0) target = $region73
    $region72: #{word_features_forward.1} parent=1 // pred_region
      %2898 = dma.done [#allocation4], 32
    $region73: #{word_features_forward.1} parent=1 // pred_fallthru
      _
    %2899 = vsyncpa [#allocation3], 1
    %2900 = vsyncpa [#allocation6], 1
    %2901 = vsyncpa [#allocation4], 1

</llo_original>
